<compile_context>
chip_gen: v7x
topology: tpu7x:2x2x1
jax: 0.10.0
libtpu: 0.0.40
codegen_flags: <defaults>
</compile_context>

<pallas_src>
import functools

import jax
import jax.numpy as jnp
import numpy as np
from jax.experimental import pallas as pl
from jax.experimental.pallas import tpu as pltpu

EPS = 1e-10
WET_COST = 1e10

# Separable HILL taps.  KB = outer((-1,2,-1), (1,-2,1)); the horizontal taps are
# sign-flipped to (-1,2,-1) so vertical/horizontal matrices dedupe (abs erases
# the global sign).  Box scales are folded per 1-D pass (1/3 * 1/3 = 1/9, etc.).
_KB_TAPS = (-1.0, 2.0, -1.0)
_B3_TAPS = (1.0 / 3.0,) * 3
_B15_TAPS = (1.0 / 15.0,) * 15
_ROLES = ("kb_v", "kb_h", "b3_v", "b3_h", "b15_v", "b15_h")

# Full 3x3 KB filter (reference only).
_KB = ((-1.0, 2.0, -1.0),
       (2.0, -4.0, 2.0),
       (-1.0, 2.0, -1.0))


# -----------------------------------------------------------------------------
# Host-side banded matrices: zero-padded 'same' 1-D conv as a matmul.
# -----------------------------------------------------------------------------
@functools.lru_cache(maxsize=None)
def _banded_np(length, groups, taps):
    """Block-diagonal banded matrix for a zero-padded 'same' 1-D convolution.

    M[i, j] = taps[j - i + r]  if |i - j| <= r and i, j are in the same
    length-sized block, else 0.  Built once on the host (numpy, cached) so the
    jitted wrapper embeds a constant instead of tracing O(band) jnp.where ops.
    All taps used here are symmetric, so Mv @ X applies them along axis 0 and
    X @ Mh along axis -1 with zero padding at every block (image) boundary.
    """
    n = groups * length
    r = len(taps) // 2
    m = np.zeros((n, n), np.float32)
    i = np.arange(n)
    for off in range(-r, r + 1):
        j = i + off
        ok = (j >= 0) & (j < n)
        jj = np.clip(j, 0, n - 1)
        ok &= (i // length) == (jj // length)
        m[i[ok], jj[ok]] = taps[off + r]
    return m


def _vmem_capacity_bytes():
    try:
        return int(pltpu.get_tpu_info().vmem_capacity_bytes)
    except Exception:  # conservative fallback: v7x per-TC VMEM
        return 64 * 1024 * 1024


def _plan_pack(n_imgs, w, lane_target=256):
    """Pick (g, n_blocks): g images packed along lanes per slab, n_blocks slabs.

    Targets lane-dense slabs up to `lane_target` lanes, pads the batch with
    dummy images when divisibility would otherwise block packing (<=2x waste,
    since the horizontal band matmul cost grows with (g*w)^2), and pads the
    slab count to an even number (when >1) so the "parallel" grid axis splits
    evenly across v7x's two TensorCores (no-op on 1-TC v5e/v6e).
    """
    if w >= lane_target or n_imgs <= 1:
        g = 1
    else:
        g = max(1, lane_target // w)
        while g > 1 and g > 2 * n_imgs:
            g //= 2
    n_blocks = -(-n_imgs // g)
    if n_blocks > 1 and n_blocks % 2 == 1:
        n_blocks += 1
    return g, n_blocks


# -----------------------------------------------------------------------------
# Kernel: one packed (H, g*W) slab per grid step; three conv stages = 6 matmuls.
# -----------------------------------------------------------------------------
def _make_hill_kernel(role_idx):
    """role_idx maps the 6 conv roles onto the deduped band-matrix inputs."""
    kbv, kbh, b3v, b3h, b15v, b15h = role_idx

    def kernel(x_ref, *rest):
        mats = [m[...] for m in rest[:-1]]
        o_ref = rest[-1]

        def dot(a, b):
            # Only DEFAULT (bf16) / HIGHEST (fp32) contract precisions are
            # available in the Pallas TPU dot lowering; bf16 fails the 1e-4
            # budget (rho = 1/(xi+eps) amplifies rounding of |R|), so use fp32.
            return jnp.dot(a, b, preferred_element_type=jnp.float32,
                           precision=jax.lax.Precision.HIGHEST)

        x = x_ref[0].astype(jnp.float32)                        # (H, g*W)

        # 1) KB high-pass (separable), zero 'same' padding; abs() erases the
        #    global sign of the unified (-1, 2, -1) taps.
        r = jnp.abs(dot(mats[kbv], dot(x, mats[kbh])))

        # 2) 3x3 box filter of |R|  (1/9 folded into the taps: 1/3 per pass).
        xi = dot(mats[b3v], dot(r, mats[b3h]))

        # 3) rho = 1/(xi + eps) with wet-cost clamp (exact divide).
        rho = jnp.minimum(1.0 / (xi + EPS), WET_COST)

        # 4) 15x15 box filter (1/225 folded into the taps: 1/15 per pass).
        o_ref[0] = dot(mats[b15v], dot(rho, mats[b15h])).astype(o_ref.dtype)

    return kernel


@jax.jit
def hill_cost(cover):
    """cover: (B, C, H, W) grayscale covers. Returns the HILL cost map, float32."""
    B, C, H, W = cover.shape
    N = B * C
    x = cover.reshape(N, H, W)

    # Lane-packing plan (dummy padding + even slab count where useful).
    g, n_blocks = _plan_pack(N, W)
    gw = g * W
    n_total = n_blocks * g

    if n_total > N:
        x = jnp.pad(x, ((0, n_total - N), (0, 0), (0, 0)))
    if g == 1:
        xp = x                                   # no pack transpose when g == 1
    else:
        xp = (x.reshape(n_blocks, g, H, W)
               .transpose(0, 2, 1, 3)
               .reshape(n_blocks, H, gw))

    # Deduped band matrices (square unpacked covers need only 3 unique ones).
    role_keys = {
        "kb_v": (H, 1, _KB_TAPS), "kb_h": (W, g, _KB_TAPS),
        "b3_v": (H, 1, _B3_TAPS), "b3_h": (W, g, _B3_TAPS),
        "b15_v": (H, 1, _B15_TAPS), "b15_h": (W, g, _B15_TAPS),
    }
    uniq, order = {}, []
    for name in _ROLES:
        key = role_keys[name]
        if key not in uniq:
            uniq[key] = len(order)
            order.append(key)
    role_idx = tuple(uniq[role_keys[name]] for name in _ROLES)
    mats_np = [_banded_np(*key) for key in order]
    mats = [jnp.asarray(m) for m in mats_np]

    # VMEM budget: double-buffered in/out slabs + band matrices + live f32
    # intermediates, capped at 75% of the physical per-core capacity.
    in_bytes = H * gw * jnp.dtype(cover.dtype).itemsize
    mat_bytes = sum(int(m.size) * 4 for m in mats_np)
    est = 2 * (in_bytes + H * gw * 4) + 2 * mat_bytes + 6 * H * gw * 4
    vmem_cap = _vmem_capacity_bytes()
    vmem_limit = int(min(max(2 * est, 32 * 1024 * 1024), (3 * vmem_cap) // 4))

    out = pl.pallas_call(
        _make_hill_kernel(role_idx),
        out_shape=jax.ShapeDtypeStruct((n_blocks, H, gw), jnp.float32),
        grid=(n_blocks,),
        in_specs=[pl.BlockSpec((1, H, gw), lambda n: (n, 0, 0))]      # cover slab
        + [pl.BlockSpec(m.shape, lambda n: (0, 0)) for m in mats_np],  # bands
        out_specs=pl.BlockSpec((1, H, gw), lambda n: (n, 0, 0)),
        compiler_params=pltpu.CompilerParams(
            dimension_semantics=("parallel",),
            vmem_limit_bytes=vmem_limit,
        ),
    )(xp, *mats)

    # Unpack lane-packed slabs, drop dummy images, restore (B, C, H, W).
    if g == 1:
        out_imgs = out
    else:
        out_imgs = (out.reshape(n_blocks, H, g, W)
                       .transpose(0, 2, 1, 3)
                       .reshape(n_total, H, W))
    return out_imgs[:N].reshape(B, C, H, W)


# -----------------------------------------------------------------------------
# Exact pure-JAX reference (explicit zero-pad shift-add).
# -----------------------------------------------------------------------------
def hill_ref(cover):
    x = cover.astype(jnp.float32)

    def conv_same(img, kern):
        kh, kw = kern.shape
        ph, pw = kh // 2, kw // 2
        h, w = img.shape[-2:]
        p = jnp.pad(img, ((0, 0), (0, 0), (ph, ph), (pw, pw)))
        out = jnp.zeros_like(img)
        for dy in range(kh):
            for dx in range(kw):
                out = out + kern[dy, dx] * p[..., dy:dy + h, dx:dx + w]
        return out

    kb = jnp.array(_KB, jnp.float32)
    r = jnp.abs(conv_same(x, kb))
    xi = conv_same(r, jnp.ones((3, 3), jnp.float32)) * (1.0 / 9.0)
    rho = jnp.minimum(1.0 / (xi + EPS), WET_COST)
    return conv_same(rho, jnp.ones((15, 15), jnp.float32)) * (1.0 / 225.0)


if __name__ == "__main__":
    # Small shapes: batch=2, 1 channel (grayscale cover), img_size=16.
    B, C, H, W = 2, 1, 16, 16
    key = jax.random.PRNGKey(0)
    cover = jnp.round(jax.random.uniform(key, (B, C, H, W)) * 255.0).astype(jnp.float32)

    cost = hill_cost(cover)
    jax.block_until_ready(cost)

    ref = hill_ref(cover)
    jax.block_until_ready(ref)

    assert cost.shape == (B, C, H, W)
    max_err = float(jnp.max(jnp.abs(cost - ref)))
    assert jnp.allclose(cost, ref, rtol=1e-4, atol=1e-4), max_err

    print("KERNEL_OK")
</pallas_src>

<mosaic_0001>
module attributes {stable_mosaic.version = 11 : i64} {
  func.func @kernel(%arg0: i32, %arg1: memref<1x16x64xf32, #tpu.memory_space<vmem>>, %arg2: memref<16x16xf32, #tpu.memory_space<vmem>>, %arg3: memref<64x64xf32, #tpu.memory_space<vmem>>, %arg4: memref<16x16xf32, #tpu.memory_space<vmem>>, %arg5: memref<64x64xf32, #tpu.memory_space<vmem>>, %arg6: memref<16x16xf32, #tpu.memory_space<vmem>>, %arg7: memref<64x64xf32, #tpu.memory_space<vmem>>, %arg8: memref<1x16x64xf32, #tpu.memory_space<vmem>>) attributes {dimension_semantics = [#tpu.dimension_semantics<parallel>], iteration_bounds = array<i64: 1>, scalar_prefetch = 0 : i64, scratch_operands = 0 : i64, tpu.core_type = #tpu.core_type<tc>, window_params = [{transform_indices = @transform_0, window_bounds = array<i64: 1, 16, 64>}, {pipeline_mode = #tpu.pipeline_mode<synchronous>, transform_indices = @transform_1, window_bounds = array<i64: 16, 16>}, {pipeline_mode = #tpu.pipeline_mode<synchronous>, transform_indices = @transform_2, window_bounds = array<i64: 64, 64>}, {pipeline_mode = #tpu.pipeline_mode<synchronous>, transform_indices = @transform_3, window_bounds = array<i64: 16, 16>}, {pipeline_mode = #tpu.pipeline_mode<synchronous>, transform_indices = @transform_4, window_bounds = array<i64: 64, 64>}, {pipeline_mode = #tpu.pipeline_mode<synchronous>, transform_indices = @transform_5, window_bounds = array<i64: 16, 16>}, {pipeline_mode = #tpu.pipeline_mode<synchronous>, transform_indices = @transform_6, window_bounds = array<i64: 64, 64>}, {transform_indices = @transform_7, window_bounds = array<i64: 1, 16, 64>}]} {
    %c0 = arith.constant 0 : index
    %c0_0 = arith.constant 0 : index
    %0 = vector.load %arg2[%c0, %c0_0] : memref<16x16xf32, #tpu.memory_space<vmem>>, vector<16x16xf32>
    %c0_1 = arith.constant 0 : index
    %c0_2 = arith.constant 0 : index
    %1 = vector.load %arg3[%c0_1, %c0_2] : memref<64x64xf32, #tpu.memory_space<vmem>>, vector<64x64xf32>
    %c0_3 = arith.constant 0 : index
    %c0_4 = arith.constant 0 : index
    %2 = vector.load %arg4[%c0_3, %c0_4] : memref<16x16xf32, #tpu.memory_space<vmem>>, vector<16x16xf32>
    %c0_5 = arith.constant 0 : index
    %c0_6 = arith.constant 0 : index
    %3 = vector.load %arg5[%c0_5, %c0_6] : memref<64x64xf32, #tpu.memory_space<vmem>>, vector<64x64xf32>
    %c0_7 = arith.constant 0 : index
    %c0_8 = arith.constant 0 : index
    %4 = vector.load %arg6[%c0_7, %c0_8] : memref<16x16xf32, #tpu.memory_space<vmem>>, vector<16x16xf32>
    %c0_9 = arith.constant 0 : index
    %c0_10 = arith.constant 0 : index
    %5 = vector.load %arg7[%c0_9, %c0_10] : memref<64x64xf32, #tpu.memory_space<vmem>>, vector<64x64xf32>
    %c0_11 = arith.constant 0 : index
    %c0_12 = arith.constant 0 : index
    %c0_13 = arith.constant 0 : index
    %6 = vector.load %arg1[%c0_11, %c0_12, %c0_13] : memref<1x16x64xf32, #tpu.memory_space<vmem>>, vector<1x16x64xf32>
    %7 = vector.shape_cast %6 : vector<1x16x64xf32> to vector<16x64xf32>
    %cst = arith.constant dense<0.000000e+00> : vector<16x64xf32>
    %8 = tpu.matmul %7, %1, %cst {dimension_numbers = #tpu.dot_dimension_numbers<[1], [0], [0], [1], [0, 0, 1, 1], [], []>, precision = #tpu.contract_precision<fp32>} : vector<16x64xf32>, vector<64x64xf32>, vector<16x64xf32> -> vector<16x64xf32>
    %cst_14 = arith.constant dense<0.000000e+00> : vector<16x64xf32>
    %9 = tpu.matmul %0, %8, %cst_14 {dimension_numbers = #tpu.dot_dimension_numbers<[1], [0], [0], [1], [0, 0, 1, 1], [], []>, precision = #tpu.contract_precision<fp32>} : vector<16x16xf32>, vector<16x64xf32>, vector<16x64xf32> -> vector<16x64xf32>
    %10 = math.absf %9 : vector<16x64xf32>
    %cst_15 = arith.constant dense<0.000000e+00> : vector<16x64xf32>
    %11 = tpu.matmul %10, %3, %cst_15 {dimension_numbers = #tpu.dot_dimension_numbers<[1], [0], [0], [1], [0, 0, 1, 1], [], []>, precision = #tpu.contract_precision<fp32>} : vector<16x64xf32>, vector<64x64xf32>, vector<16x64xf32> -> vector<16x64xf32>
    %cst_16 = arith.constant dense<0.000000e+00> : vector<16x64xf32>
    %12 = tpu.matmul %2, %11, %cst_16 {dimension_numbers = #tpu.dot_dimension_numbers<[1], [0], [0], [1], [0, 0, 1, 1], [], []>, precision = #tpu.contract_precision<fp32>} : vector<16x16xf32>, vector<16x64xf32>, vector<16x64xf32> -> vector<16x64xf32>
    %cst_17 = arith.constant 1.000000e-10 : f32
    %13 = vector.broadcast %cst_17 : f32 to vector<16x64xf32>
    %14 = arith.addf %12, %13 : vector<16x64xf32>
    %cst_18 = arith.constant 1.000000e+00 : f32
    %15 = vector.broadcast %cst_18 : f32 to vector<16x64xf32>
    %16 = arith.divf %15, %14 : vector<16x64xf32>
    %cst_19 = arith.constant 1.000000e+10 : f32
    %17 = vector.broadcast %cst_19 : f32 to vector<16x64xf32>
    %18 = arith.minimumf %16, %17 : vector<16x64xf32>
    %cst_20 = arith.constant dense<0.000000e+00> : vector<16x64xf32>
    %19 = tpu.matmul %18, %5, %cst_20 {dimension_numbers = #tpu.dot_dimension_numbers<[1], [0], [0], [1], [0, 0, 1, 1], [], []>, precision = #tpu.contract_precision<fp32>} : vector<16x64xf32>, vector<64x64xf32>, vector<16x64xf32> -> vector<16x64xf32>
    %cst_21 = arith.constant dense<0.000000e+00> : vector<16x64xf32>
    %20 = tpu.matmul %4, %19, %cst_21 {dimension_numbers = #tpu.dot_dimension_numbers<[1], [0], [0], [1], [0, 0, 1, 1], [], []>, precision = #tpu.contract_precision<fp32>} : vector<16x16xf32>, vector<16x64xf32>, vector<16x64xf32> -> vector<16x64xf32>
    %c0_22 = arith.constant 0 : index
    %c0_23 = arith.constant 0 : index
    %c0_24 = arith.constant 0 : index
    %21 = vector.load %arg8[%c0_22, %c0_23, %c0_24] : memref<1x16x64xf32, #tpu.memory_space<vmem>>, vector<1x16x64xf32>
    %22 = vector.shape_cast %21 : vector<1x16x64xf32> to vector<16x64xf32>
    %23 = vector.shape_cast %20 : vector<16x64xf32> to vector<1x16x64xf32>
    tpu.vector_store %arg8[%c0_22, %c0_23, %c0_24], %23 {strides = array<i32>} : memref<1x16x64xf32, #tpu.memory_space<vmem>>, vector<1x16x64xf32>,
    return
  }
  func.func @transform_0(%arg0: i32) -> (i32, i32, i32) {
    %c0_i32 = arith.constant 0 : i32
    %c0_i32_0 = arith.constant 0 : i32
    %c0_i32_1 = arith.constant 0 : i32
    return %arg0, %c0_i32, %c0_i32_0 : i32, i32, i32
  }
  func.func @transform_1(%arg0: i32) -> (i32, i32) {
    %c0_i32 = arith.constant 0 : i32
    %c0_i32_0 = arith.constant 0 : i32
    %c0_i32_1 = arith.constant 0 : i32
    return %c0_i32, %c0_i32_0 : i32, i32
  }
  func.func @transform_2(%arg0: i32) -> (i32, i32) {
    %c0_i32 = arith.constant 0 : i32
    %c0_i32_0 = arith.constant 0 : i32
    %c0_i32_1 = arith.constant 0 : i32
    return %c0_i32, %c0_i32_0 : i32, i32
  }
  func.func @transform_3(%arg0: i32) -> (i32, i32) {
    %c0_i32 = arith.constant 0 : i32
    %c0_i32_0 = arith.constant 0 : i32
    %c0_i32_1 = arith.constant 0 : i32
    return %c0_i32, %c0_i32_0 : i32, i32
  }
  func.func @transform_4(%arg0: i32) -> (i32, i32) {
    %c0_i32 = arith.constant 0 : i32
    %c0_i32_0 = arith.constant 0 : i32
    %c0_i32_1 = arith.constant 0 : i32
    return %c0_i32, %c0_i32_0 : i32, i32
  }
  func.func @transform_5(%arg0: i32) -> (i32, i32) {
    %c0_i32 = arith.constant 0 : i32
    %c0_i32_0 = arith.constant 0 : i32
    %c0_i32_1 = arith.constant 0 : i32
    return %c0_i32, %c0_i32_0 : i32, i32
  }
  func.func @transform_6(%arg0: i32) -> (i32, i32) {
    %c0_i32 = arith.constant 0 : i32
    %c0_i32_0 = arith.constant 0 : i32
    %c0_i32_1 = arith.constant 0 : i32
    return %c0_i32, %c0_i32_0 : i32, i32
  }
  func.func @transform_7(%arg0: i32) -> (i32, i32, i32) {
    %c0_i32 = arith.constant 0 : i32
    %c0_i32_0 = arith.constant 0 : i32
    %c0_i32_1 = arith.constant 0 : i32
    return %arg0, %c0_i32, %c0_i32_0 : i32, i32, i32
  }
}

</mosaic_0001>

<llo_original>
// kernel: hill_cost.1
$region0: #{hill_cost.1}
  #allocation0 [shape = 'u32[]', space=smem, size = 0x4, offset = 0x4, fixed_abs, tag = 'smem constant byte address 0x4 - core index']
  #allocation1 [shape = 'u32[144,128]{1,0:T(1,128)}', space=vmem, size = 0x12000, scoped, tag = 'internal scratch']
  %s0 = inlined_call_operand.vmem [shape: f32[1,16,64], index: 0, kind: input, shape index: {}]
  %s1 = inlined_call_operand.vmem [shape: f32[16,16], index: 1, kind: input, shape index: {}]
  %s2 = inlined_call_operand.vmem [shape: f32[64,64], index: 2, kind: input, shape index: {}]
  %s3 = inlined_call_operand.vmem [shape: f32[16,16], index: 3, kind: input, shape index: {}]
  %s4 = inlined_call_operand.vmem [shape: f32[64,64], index: 4, kind: input, shape index: {}]
  %s5 = inlined_call_operand.vmem [shape: f32[16,16], index: 5, kind: input, shape index: {}]
  %s6 = inlined_call_operand.vmem [shape: f32[64,64], index: 6, kind: input, shape index: {}]
  %s7 = inlined_call_operand.vmem [shape: f32[1,16,64], index: 7, kind: output, shape index: {}]
  %s8 = sld [smem:[#allocation0]]
  $region38: #{hill_cost.1} parent=0
    _
  %s10 = ssub.s32 1, %s8
  %s11 = scalar_select 0, %s10, %s8
  // Predicated region
  $region2: #{hill_cost.1} parent=0 // pred_check
    _
  $region3: #{hill_cost.1} parent=0 // pred_check_branch
    %13 = sbr.rel (0) target = $region5
  $region4: #{hill_cost.1} parent=0 // pred_region
    _
  $region5: #{hill_cost.1} parent=0 // pred_fallthru
    _
  // Predicated region
  $region6: #{hill_cost.1} parent=0 // pred_check
    _
  $region7: #{hill_cost.1} parent=0 // pred_check_branch
    %15 = sbr.rel (0) target = $region9
  $region8: #{hill_cost.1} parent=0 // pred_region
    _
  $region9: #{hill_cost.1} parent=0 // pred_fallthru
    _
  // Predicated region
  $region10: #{hill_cost.1} parent=0 // pred_check
    _
  $region11: #{hill_cost.1} parent=0 // pred_check_branch
    %17 = sbr.rel (0) target = $region13
  $region12: #{hill_cost.1} parent=0 // pred_region
    _
  $region13: #{hill_cost.1} parent=0 // pred_fallthru
    _
  // Predicated region
  $region14: #{hill_cost.1} parent=0 // pred_check
    _
  $region15: #{hill_cost.1} parent=0 // pred_check_branch
    %19 = sbr.rel (0) target = $region17
  $region16: #{hill_cost.1} parent=0 // pred_region
    _
  $region17: #{hill_cost.1} parent=0 // pred_fallthru
    _
  // Predicated region
  $region18: #{hill_cost.1} parent=0 // pred_check
    _
  $region19: #{hill_cost.1} parent=0 // pred_check_branch
    %21 = sbr.rel (0) target = $region21
  $region20: #{hill_cost.1} parent=0 // pred_region
    _
  $region21: #{hill_cost.1} parent=0 // pred_fallthru
    _
  // Predicated region
  $region22: #{hill_cost.1} parent=0 // pred_check
    _
  $region23: #{hill_cost.1} parent=0 // pred_check_branch
    %23 = sbr.rel (0) target = $region25
  $region24: #{hill_cost.1} parent=0 // pred_region
    _
  $region25: #{hill_cost.1} parent=0 // pred_fallthru
    _
  // Predicated region
  $region26: #{hill_cost.1} parent=0 // pred_check
    _
  $region27: #{hill_cost.1} parent=0 // pred_check_branch
    %25 = sbr.rel (0) target = $region29
  $region28: #{hill_cost.1} parent=0 // pred_region
    _
  $region29: #{hill_cost.1} parent=0 // pred_fallthru
    _
  %v26 = vld [vmem:[%s1] sm:$0xff]
  %v27 = vld [vmem:[%s1 + $0x8] sm:$0xff]
  %v28 = vld [vmem:[%s2] sm:$0xff]
  %v29 = vld [vmem:[%s2 + $0x8] sm:$0xff]
  %v30 = vld [vmem:[%s2 + $0x10] sm:$0xff]
  %v31 = vld [vmem:[%s2 + $0x18] sm:$0xff]
  %v32 = vld [vmem:[%s2 + $0x20] sm:$0xff]
  %v33 = vld [vmem:[%s2 + $0x28] sm:$0xff]
  %v34 = vld [vmem:[%s2 + $0x30] sm:$0xff]
  %v35 = vld [vmem:[%s2 + $0x38] sm:$0xff]
  %v36 = vld [vmem:[%s3] sm:$0xff]
  %v37 = vld [vmem:[%s3 + $0x8] sm:$0xff]
  %v38 = vld [vmem:[%s4] sm:$0xff]
  %v39 = vld [vmem:[%s4 + $0x8] sm:$0xff]
  %v40 = vld [vmem:[%s4 + $0x10] sm:$0xff]
  %v41 = vld [vmem:[%s4 + $0x18] sm:$0xff]
  %v42 = vld [vmem:[%s4 + $0x20] sm:$0xff]
  %v43 = vld [vmem:[%s4 + $0x28] sm:$0xff]
  %v44 = vld [vmem:[%s4 + $0x30] sm:$0xff]
  %v45 = vld [vmem:[%s4 + $0x38] sm:$0xff]
  %v46 = vld [vmem:[%s5] sm:$0xff]
  %v47 = vld [vmem:[%s5 + $0x8] sm:$0xff]
  %v48 = vld [vmem:[%s6] sm:$0xff]
  %v49 = vld [vmem:[%s6 + $0x8] sm:$0xff]
  %v50 = vld [vmem:[%s6 + $0x10] sm:$0xff]
  %v51 = vld [vmem:[%s6 + $0x18] sm:$0xff]
  %v52 = vld [vmem:[%s6 + $0x20] sm:$0xff]
  %v53 = vld [vmem:[%s6 + $0x28] sm:$0xff]
  %v54 = vld [vmem:[%s6 + $0x30] sm:$0xff]
  %v55 = vld [vmem:[%s6 + $0x38] sm:$0xff]
  %v56 = vld [vmem:[%s0] sm:$0xff]
  %v57 = vld [vmem:[%s0 + $0x8] sm:$0xff]
  %vm58 = vcmask 523264
  %v60 = vsel %vm58, %v56, 0
  %v63 = vsel %vm58, %v57, 0
  %65 = vmatprep.subr.mxu0 0.0
  %v66 = vand.u32 %v28, 4294901760
  %67 = vmatpush1.msra.mxu0 %v66
  %68 = vmatprep.subr.mxu0 0.0
  %v69 = vand.u32 %v29, 4294901760
  %70 = vmatpush1.msra.mxu0 %v69
  %71 = vmatprep.subr.mxu0 0.0
  %v72 = vand.u32 %v30, 4294901760
  %73 = vmatpush1.msra.mxu0 %v72
  %74 = vmatprep.subr.mxu0 0.0
  %v75 = vand.u32 %v31, 4294901760
  %76 = vmatpush1.msra.mxu0 %v75
  %77 = vmatprep.subr.mxu0 0.0
  %v78 = vand.u32 %v32, 4294901760
  %79 = vmatpush1.msra.mxu0 %v78
  %80 = vmatprep.subr.mxu0 0.0
  %v81 = vand.u32 %v33, 4294901760
  %82 = vmatpush1.msra.mxu0 %v81
  %83 = vmatprep.subr.mxu0 0.0
  %v84 = vand.u32 %v34, 4294901760
  %85 = vmatpush1.msra.mxu0 %v84
  %86 = vmatprep.subr.mxu0 0.0
  %v87 = vand.u32 %v35, 4294901760
  %88 = vmatpush1.msra.mxu0 %v87
  %89 = vmatprep.subr.mxu0 0.0
  %90 = vmatpush1.msra.mxu0 0.0
  %91 = vmatprep.subr.mxu0 0.0
  %92 = vmatpush1.msra.mxu0 0.0
  %93 = vmatprep.subr.mxu0 0.0
  %94 = vmatpush1.msra.mxu0 0.0
  %95 = vmatprep.subr.mxu0 0.0
  %96 = vmatpush1.msra.mxu0 0.0
  %97 = vmatprep.subr.mxu0 0.0
  %98 = vmatpush1.msra.mxu0 0.0
  %99 = vmatprep.subr.mxu0 0.0
  %100 = vmatpush1.msra.mxu0 0.0
  %101 = vmatprep.subr.mxu0 0.0
  %102 = vmatpush1.msra.mxu0 0.0
  %103 = vmatprep.subr.mxu0 0.0
  %104 = vmatpush1.msra.mxu0 0.0
  %105 = vmatprep.subr.mxu0 0.0
  %106 = vmatpush1.msra.mxu0 0.0
  %107 = vmatprep.subr.mxu0 0.0
  %108 = vmatpush1.msra.mxu0 0.0
  %109 = vmatprep.subr.mxu0 0.0
  %110 = vmatpush1.msra.mxu0 0.0
  %111 = vmatprep.subr.mxu0 0.0
  %112 = vmatpush1.msra.mxu0 0.0
  %113 = vmatprep.subr.mxu0 0.0
  %114 = vmatpush1.msra.mxu0 0.0
  %115 = vmatprep.subr.mxu0 0.0
  %116 = vmatpush1.msra.mxu0 0.0
  %117 = vmatprep.subr.mxu0 0.0
  %118 = vmatpush1.msra.mxu0 0.0
  %119 = vmatprep.subr.mxu0 0.0
  %120 = vmatpush1.msra.mxu0 0.0
  %121 = vmatprep.subr.mxu0 0.0
  %122 = vmatpush1.msra.mxu0 0.0
  %123 = vmatprep.subr.mxu0 0.0
  %124 = vmatpush1.msra.mxu0 0.0
  %125 = vmatprep.subr.mxu0 0.0
  %126 = vmatpush1.msra.mxu0 0.0
  %127 = vmatprep.subr.mxu0 0.0
  %128 = vmatpush1.msra.mxu0 0.0
  %129 = vmatprep.subr.mxu0 0.0
  %130 = vmatpush1.msra.mxu0 0.0
  %131 = vmatprep.subr.mxu0 0.0
  %132 = vmatpush1.msra.mxu0 0.0
  %133 = vmatprep.subr.mxu0 0.0
  %134 = vmatpush1.msra.mxu0 0.0
  %135 = vmatprep.subr.mxu0 0.0
  %136 = vmatpush1.msra.mxu0 0.0
  %137 = vmatprep.mubr.f32.mxu0 0.0
  %v138 = vand.u32 %v60, 4294901760
  %v139 = vsub.f32 %v60, %v138
  %v140 = vand.u32 %v139, 4294901760
  %v141 = vsub.f32 %v139, %v140
  %v142 = vand.u32 %v141, 4294901760
  %143 = vmatmul.mubr.f32.gmra.mrb[0].mxu0 %v142
  %v144 = vpop.f32.mrb[0].mxu0
  %v145 = vadd.f32 0.0, %v144
  %v146 = vpop.f32.mrb[0].mxu0
  %147 = vmatprep.mubr.f32.mxu0 0.0
  %v148 = vand.u32 %v63, 4294901760
  %v149 = vsub.f32 %v63, %v148
  %v150 = vand.u32 %v149, 4294901760
  %v151 = vsub.f32 %v149, %v150
  %v152 = vand.u32 %v151, 4294901760
  %153 = vmatmul.mubr.f32.gmra.mrb[0].mxu0 %v152
  %v154 = vpop.f32.mrb[0].mxu0
  %v155 = vadd.f32 0.0, %v154
  %v156 = vpop.f32.mrb[0].mxu0
  %157 = vdwg.mxu0
  %158 = vmatprep.subr.mxu0 0.0
  %v159 = vand.u32 %v28, 4294901760
  %v160 = vsub.f32 %v28, %v159
  %v161 = vand.u32 %v160, 4294901760
  %v162 = vsub.f32 %v160, %v161
  %v163 = vand.u32 %v162, 4294901760
  %164 = vmatpush1.msra.mxu0 %v163
  %165 = vmatprep.subr.mxu0 0.0
  %v166 = vand.u32 %v29, 4294901760
  %v167 = vsub.f32 %v29, %v166
  %v168 = vand.u32 %v167, 4294901760
  %v169 = vsub.f32 %v167, %v168
  %v170 = vand.u32 %v169, 4294901760
  %171 = vmatpush1.msra.mxu0 %v170
  %172 = vmatprep.subr.mxu0 0.0
  %v173 = vand.u32 %v30, 4294901760
  %v174 = vsub.f32 %v30, %v173
  %v175 = vand.u32 %v174, 4294901760
  %v176 = vsub.f32 %v174, %v175
  %v177 = vand.u32 %v176, 4294901760
  %178 = vmatpush1.msra.mxu0 %v177
  %179 = vmatprep.subr.mxu0 0.0
  %v180 = vand.u32 %v31, 4294901760
  %v181 = vsub.f32 %v31, %v180
  %v182 = vand.u32 %v181, 4294901760
  %v183 = vsub.f32 %v181, %v182
  %v184 = vand.u32 %v183, 4294901760
  %185 = vmatpush1.msra.mxu0 %v184
  %186 = vmatprep.subr.mxu0 0.0
  %v187 = vand.u32 %v32, 4294901760
  %v188 = vsub.f32 %v32, %v187
  %v189 = vand.u32 %v188, 4294901760
  %v190 = vsub.f32 %v188, %v189
  %v191 = vand.u32 %v190, 4294901760
  %192 = vmatpush1.msra.mxu0 %v191
  %193 = vmatprep.subr.mxu0 0.0
  %v194 = vand.u32 %v33, 4294901760
  %v195 = vsub.f32 %v33, %v194
  %v196 = vand.u32 %v195, 4294901760
  %v197 = vsub.f32 %v195, %v196
  %v198 = vand.u32 %v197, 4294901760
  %199 = vmatpush1.msra.mxu0 %v198
  %200 = vmatprep.subr.mxu0 0.0
  %v201 = vand.u32 %v34, 4294901760
  %v202 = vsub.f32 %v34, %v201
  %v203 = vand.u32 %v202, 4294901760
  %v204 = vsub.f32 %v202, %v203
  %v205 = vand.u32 %v204, 4294901760
  %206 = vmatpush1.msra.mxu0 %v205
  %207 = vmatprep.subr.mxu0 0.0
  %v208 = vand.u32 %v35, 4294901760
  %v209 = vsub.f32 %v35, %v208
  %v210 = vand.u32 %v209, 4294901760
  %v211 = vsub.f32 %v209, %v210
  %v212 = vand.u32 %v211, 4294901760
  %213 = vmatpush1.msra.mxu0 %v212
  %214 = vmatprep.subr.mxu0 0.0
  %215 = vmatpush1.msra.mxu0 0.0
  %216 = vmatprep.subr.mxu0 0.0
  %217 = vmatpush1.msra.mxu0 0.0
  %218 = vmatprep.subr.mxu0 0.0
  %219 = vmatpush1.msra.mxu0 0.0
  %220 = vmatprep.subr.mxu0 0.0
  %221 = vmatpush1.msra.mxu0 0.0
  %222 = vmatprep.subr.mxu0 0.0
  %223 = vmatpush1.msra.mxu0 0.0
  %224 = vmatprep.subr.mxu0 0.0
  %225 = vmatpush1.msra.mxu0 0.0
  %226 = vmatprep.subr.mxu0 0.0
  %227 = vmatpush1.msra.mxu0 0.0
  %228 = vmatprep.subr.mxu0 0.0
  %229 = vmatpush1.msra.mxu0 0.0
  %230 = vmatprep.subr.mxu0 0.0
  %231 = vmatpush1.msra.mxu0 0.0
  %232 = vmatprep.subr.mxu0 0.0
  %233 = vmatpush1.msra.mxu0 0.0
  %234 = vmatprep.subr.mxu0 0.0
  %235 = vmatpush1.msra.mxu0 0.0
  %236 = vmatprep.subr.mxu0 0.0
  %237 = vmatpush1.msra.mxu0 0.0
  %238 = vmatprep.subr.mxu0 0.0
  %239 = vmatpush1.msra.mxu0 0.0
  %240 = vmatprep.subr.mxu0 0.0
  %241 = vmatpush1.msra.mxu0 0.0
  %242 = vmatprep.subr.mxu0 0.0
  %243 = vmatpush1.msra.mxu0 0.0
  %244 = vmatprep.subr.mxu0 0.0
  %245 = vmatpush1.msra.mxu0 0.0
  %246 = vmatprep.subr.mxu0 0.0
  %247 = vmatpush1.msra.mxu0 0.0
  %248 = vmatprep.subr.mxu0 0.0
  %249 = vmatpush1.msra.mxu0 0.0
  %250 = vmatprep.subr.mxu0 0.0
  %251 = vmatpush1.msra.mxu0 0.0
  %252 = vmatprep.subr.mxu0 0.0
  %253 = vmatpush1.msra.mxu0 0.0
  %254 = vmatprep.subr.mxu0 0.0
  %255 = vmatpush1.msra.mxu0 0.0
  %256 = vmatprep.subr.mxu0 0.0
  %257 = vmatpush1.msra.mxu0 0.0
  %258 = vmatprep.subr.mxu0 0.0
  %259 = vmatpush1.msra.mxu0 0.0
  %260 = vmatprep.subr.mxu0 0.0
  %261 = vmatpush1.msra.mxu0 0.0
  %262 = vmatprep.mubr.f32.mxu0 0.0
  %v263 = vand.u32 %v60, 4294901760
  %264 = vmatmul.mubr.f32.gmra.mrb[0].mxu0 %v263
  %v265 = vpop.f32.mrb[0].mxu0
  %v266 = vadd.f32 %v145, %v265
  %v267 = vpop.f32.mrb[0].mxu0
  %268 = vmatprep.mubr.f32.mxu0 0.0
  %v269 = vand.u32 %v63, 4294901760
  %270 = vmatmul.mubr.f32.gmra.mrb[0].mxu0 %v269
  %v271 = vpop.f32.mrb[0].mxu0
  %v272 = vadd.f32 %v155, %v271
  %v273 = vpop.f32.mrb[0].mxu0
  %274 = vdwg.mxu0
  %275 = vmatprep.subr.mxu0 0.0
  %v276 = vand.u32 %v28, 4294901760
  %v277 = vsub.f32 %v28, %v276
  %278 = vmatpush1.msra.mxu0 %v277
  %279 = vmatprep.subr.mxu0 0.0
  %v280 = vand.u32 %v29, 4294901760
  %v281 = vsub.f32 %v29, %v280
  %282 = vmatpush1.msra.mxu0 %v281
  %283 = vmatprep.subr.mxu0 0.0
  %v284 = vand.u32 %v30, 4294901760
  %v285 = vsub.f32 %v30, %v284
  %286 = vmatpush1.msra.mxu0 %v285
  %287 = vmatprep.subr.mxu0 0.0
  %v288 = vand.u32 %v31, 4294901760
  %v289 = vsub.f32 %v31, %v288
  %290 = vmatpush1.msra.mxu0 %v289
  %291 = vmatprep.subr.mxu0 0.0
  %v292 = vand.u32 %v32, 4294901760
  %v293 = vsub.f32 %v32, %v292
  %294 = vmatpush1.msra.mxu0 %v293
  %295 = vmatprep.subr.mxu0 0.0
  %v296 = vand.u32 %v33, 4294901760
  %v297 = vsub.f32 %v33, %v296
  %298 = vmatpush1.msra.mxu0 %v297
  %299 = vmatprep.subr.mxu0 0.0
  %v300 = vand.u32 %v34, 4294901760
  %v301 = vsub.f32 %v34, %v300
  %302 = vmatpush1.msra.mxu0 %v301
  %303 = vmatprep.subr.mxu0 0.0
  %v304 = vand.u32 %v35, 4294901760
  %v305 = vsub.f32 %v35, %v304
  %306 = vmatpush1.msra.mxu0 %v305
  %307 = vmatprep.subr.mxu0 0.0
  %308 = vmatpush1.msra.mxu0 0.0
  %309 = vmatprep.subr.mxu0 0.0
  %310 = vmatpush1.msra.mxu0 0.0
  %311 = vmatprep.subr.mxu0 0.0
  %312 = vmatpush1.msra.mxu0 0.0
  %313 = vmatprep.subr.mxu0 0.0
  %314 = vmatpush1.msra.mxu0 0.0
  %315 = vmatprep.subr.mxu0 0.0
  %316 = vmatpush1.msra.mxu0 0.0
  %317 = vmatprep.subr.mxu0 0.0
  %318 = vmatpush1.msra.mxu0 0.0
  %319 = vmatprep.subr.mxu0 0.0
  %320 = vmatpush1.msra.mxu0 0.0
  %321 = vmatprep.subr.mxu0 0.0
  %322 = vmatpush1.msra.mxu0 0.0
  %323 = vmatprep.subr.mxu0 0.0
  %324 = vmatpush1.msra.mxu0 0.0
  %325 = vmatprep.subr.mxu0 0.0
  %326 = vmatpush1.msra.mxu0 0.0
  %327 = vmatprep.subr.mxu0 0.0
  %328 = vmatpush1.msra.mxu0 0.0
  %329 = vmatprep.subr.mxu0 0.0
  %330 = vmatpush1.msra.mxu0 0.0
  %331 = vmatprep.subr.mxu0 0.0
  %332 = vmatpush1.msra.mxu0 0.0
  %333 = vmatprep.subr.mxu0 0.0
  %334 = vmatpush1.msra.mxu0 0.0
  %335 = vmatprep.subr.mxu0 0.0
  %336 = vmatpush1.msra.mxu0 0.0
  %337 = vmatprep.subr.mxu0 0.0
  %338 = vmatpush1.msra.mxu0 0.0
  %339 = vmatprep.subr.mxu0 0.0
  %340 = vmatpush1.msra.mxu0 0.0
  %341 = vmatprep.subr.mxu0 0.0
  %342 = vmatpush1.msra.mxu0 0.0
  %343 = vmatprep.subr.mxu0 0.0
  %344 = vmatpush1.msra.mxu0 0.0
  %345 = vmatprep.subr.mxu0 0.0
  %346 = vmatpush1.msra.mxu0 0.0
  %347 = vmatprep.subr.mxu0 0.0
  %348 = vmatpush1.msra.mxu0 0.0
  %349 = vmatprep.subr.mxu0 0.0
  %350 = vmatpush1.msra.mxu0 0.0
  %351 = vmatprep.subr.mxu0 0.0
  %352 = vmatpush1.msra.mxu0 0.0
  %353 = vmatprep.subr.mxu0 0.0
  %354 = vmatpush1.msra.mxu0 0.0
  %355 = vmatprep.mubr.f32.mxu0 0.0
  %v356 = vand.u32 %v60, 4294901760
  %v357 = vsub.f32 %v60, %v356
  %358 = vmatmul.mubr.f32.gmra.mrb[0].mxu0 %v357
  %v359 = vpop.f32.mrb[0].mxu0
  %v360 = vadd.f32 %v266, %v359
  %v361 = vpop.f32.mrb[0].mxu0
  %362 = vmatprep.mubr.f32.mxu0 0.0
  %v363 = vand.u32 %v63, 4294901760
  %v364 = vsub.f32 %v63, %v363
  %365 = vmatmul.mubr.f32.gmra.mrb[0].mxu0 %v364
  %v366 = vpop.f32.mrb[0].mxu0
  %v367 = vadd.f32 %v272, %v366
  %v368 = vpop.f32.mrb[0].mxu0
  %369 = vdwg.mxu0
  %370 = vmatprep.subr.mxu0 0.0
  %v371 = vand.u32 %v28, 4294901760
  %372 = vmatpush1.msra.mxu0 %v371
  %373 = vmatprep.subr.mxu0 0.0
  %v374 = vand.u32 %v29, 4294901760
  %375 = vmatpush1.msra.mxu0 %v374
  %376 = vmatprep.subr.mxu0 0.0
  %v377 = vand.u32 %v30, 4294901760
  %378 = vmatpush1.msra.mxu0 %v377
  %379 = vmatprep.subr.mxu0 0.0
  %v380 = vand.u32 %v31, 4294901760
  %381 = vmatpush1.msra.mxu0 %v380
  %382 = vmatprep.subr.mxu0 0.0
  %v383 = vand.u32 %v32, 4294901760
  %384 = vmatpush1.msra.mxu0 %v383
  %385 = vmatprep.subr.mxu0 0.0
  %v386 = vand.u32 %v33, 4294901760
  %387 = vmatpush1.msra.mxu0 %v386
  %388 = vmatprep.subr.mxu0 0.0
  %v389 = vand.u32 %v34, 4294901760
  %390 = vmatpush1.msra.mxu0 %v389
  %391 = vmatprep.subr.mxu0 0.0
  %v392 = vand.u32 %v35, 4294901760
  %393 = vmatpush1.msra.mxu0 %v392
  %394 = vmatprep.subr.mxu0 0.0
  %395 = vmatpush1.msra.mxu0 0.0
  %396 = vmatprep.subr.mxu0 0.0
  %397 = vmatpush1.msra.mxu0 0.0
  %398 = vmatprep.subr.mxu0 0.0
  %399 = vmatpush1.msra.mxu0 0.0
  %400 = vmatprep.subr.mxu0 0.0
  %401 = vmatpush1.msra.mxu0 0.0
  %402 = vmatprep.subr.mxu0 0.0
  %403 = vmatpush1.msra.mxu0 0.0
  %404 = vmatprep.subr.mxu0 0.0
  %405 = vmatpush1.msra.mxu0 0.0
  %406 = vmatprep.subr.mxu0 0.0
  %407 = vmatpush1.msra.mxu0 0.0
  %408 = vmatprep.subr.mxu0 0.0
  %409 = vmatpush1.msra.mxu0 0.0
  %410 = vmatprep.subr.mxu0 0.0
  %411 = vmatpush1.msra.mxu0 0.0
  %412 = vmatprep.subr.mxu0 0.0
  %413 = vmatpush1.msra.mxu0 0.0
  %414 = vmatprep.subr.mxu0 0.0
  %415 = vmatpush1.msra.mxu0 0.0
  %416 = vmatprep.subr.mxu0 0.0
  %417 = vmatpush1.msra.mxu0 0.0
  %418 = vmatprep.subr.mxu0 0.0
  %419 = vmatpush1.msra.mxu0 0.0
  %420 = vmatprep.subr.mxu0 0.0
  %421 = vmatpush1.msra.mxu0 0.0
  %422 = vmatprep.subr.mxu0 0.0
  %423 = vmatpush1.msra.mxu0 0.0
  %424 = vmatprep.subr.mxu0 0.0
  %425 = vmatpush1.msra.mxu0 0.0
  %426 = vmatprep.subr.mxu0 0.0
  %427 = vmatpush1.msra.mxu0 0.0
  %428 = vmatprep.subr.mxu0 0.0
  %429 = vmatpush1.msra.mxu0 0.0
  %430 = vmatprep.subr.mxu0 0.0
  %431 = vmatpush1.msra.mxu0 0.0
  %432 = vmatprep.subr.mxu0 0.0
  %433 = vmatpush1.msra.mxu0 0.0
  %434 = vmatprep.subr.mxu0 0.0
  %435 = vmatpush1.msra.mxu0 0.0
  %436 = vmatprep.subr.mxu0 0.0
  %437 = vmatpush1.msra.mxu0 0.0
  %438 = vmatprep.subr.mxu0 0.0
  %439 = vmatpush1.msra.mxu0 0.0
  %440 = vmatprep.subr.mxu0 0.0
  %441 = vmatpush1.msra.mxu0 0.0
  %442 = vmatprep.mubr.f32.mxu0 0.0
  %v443 = vand.u32 %v60, 4294901760
  %v444 = vsub.f32 %v60, %v443
  %v445 = vand.u32 %v444, 4294901760
  %446 = vmatmul.mubr.f32.gmra.mrb[0].mxu0 %v445
  %v447 = vpop.f32.mrb[0].mxu0
  %v448 = vadd.f32 %v360, %v447
  %v449 = vpop.f32.mrb[0].mxu0
  %450 = vmatprep.mubr.f32.mxu0 0.0
  %v451 = vand.u32 %v63, 4294901760
  %v452 = vsub.f32 %v63, %v451
  %v453 = vand.u32 %v452, 4294901760
  %454 = vmatmul.mubr.f32.gmra.mrb[0].mxu0 %v453
  %v455 = vpop.f32.mrb[0].mxu0
  %v456 = vadd.f32 %v367, %v455
  %v457 = vpop.f32.mrb[0].mxu0
  %458 = vdwg.mxu0
  %459 = vmatprep.subr.mxu0 0.0
  %v460 = vand.u32 %v28, 4294901760
  %v461 = vsub.f32 %v28, %v460
  %v462 = vand.u32 %v461, 4294901760
  %463 = vmatpush1.msra.mxu0 %v462
  %464 = vmatprep.subr.mxu0 0.0
  %v465 = vand.u32 %v29, 4294901760
  %v466 = vsub.f32 %v29, %v465
  %v467 = vand.u32 %v466, 4294901760
  %468 = vmatpush1.msra.mxu0 %v467
  %469 = vmatprep.subr.mxu0 0.0
  %v470 = vand.u32 %v30, 4294901760
  %v471 = vsub.f32 %v30, %v470
  %v472 = vand.u32 %v471, 4294901760
  %473 = vmatpush1.msra.mxu0 %v472
  %474 = vmatprep.subr.mxu0 0.0
  %v475 = vand.u32 %v31, 4294901760
  %v476 = vsub.f32 %v31, %v475
  %v477 = vand.u32 %v476, 4294901760
  %478 = vmatpush1.msra.mxu0 %v477
  %479 = vmatprep.subr.mxu0 0.0
  %v480 = vand.u32 %v32, 4294901760
  %v481 = vsub.f32 %v32, %v480
  %v482 = vand.u32 %v481, 4294901760
  %483 = vmatpush1.msra.mxu0 %v482
  %484 = vmatprep.subr.mxu0 0.0
  %v485 = vand.u32 %v33, 4294901760
  %v486 = vsub.f32 %v33, %v485
  %v487 = vand.u32 %v486, 4294901760
  %488 = vmatpush1.msra.mxu0 %v487
  %489 = vmatprep.subr.mxu0 0.0
  %v490 = vand.u32 %v34, 4294901760
  %v491 = vsub.f32 %v34, %v490
  %v492 = vand.u32 %v491, 4294901760
  %493 = vmatpush1.msra.mxu0 %v492
  %494 = vmatprep.subr.mxu0 0.0
  %v495 = vand.u32 %v35, 4294901760
  %v496 = vsub.f32 %v35, %v495
  %v497 = vand.u32 %v496, 4294901760
  %498 = vmatpush1.msra.mxu0 %v497
  %499 = vmatprep.subr.mxu0 0.0
  %500 = vmatpush1.msra.mxu0 0.0
  %501 = vmatprep.subr.mxu0 0.0
  %502 = vmatpush1.msra.mxu0 0.0
  %503 = vmatprep.subr.mxu0 0.0
  %504 = vmatpush1.msra.mxu0 0.0
  %505 = vmatprep.subr.mxu0 0.0
  %506 = vmatpush1.msra.mxu0 0.0
  %507 = vmatprep.subr.mxu0 0.0
  %508 = vmatpush1.msra.mxu0 0.0
  %509 = vmatprep.subr.mxu0 0.0
  %510 = vmatpush1.msra.mxu0 0.0
  %511 = vmatprep.subr.mxu0 0.0
  %512 = vmatpush1.msra.mxu0 0.0
  %513 = vmatprep.subr.mxu0 0.0
  %514 = vmatpush1.msra.mxu0 0.0
  %515 = vmatprep.subr.mxu0 0.0
  %516 = vmatpush1.msra.mxu0 0.0
  %517 = vmatprep.subr.mxu0 0.0
  %518 = vmatpush1.msra.mxu0 0.0
  %519 = vmatprep.subr.mxu0 0.0
  %520 = vmatpush1.msra.mxu0 0.0
  %521 = vmatprep.subr.mxu0 0.0
  %522 = vmatpush1.msra.mxu0 0.0
  %523 = vmatprep.subr.mxu0 0.0
  %524 = vmatpush1.msra.mxu0 0.0
  %525 = vmatprep.subr.mxu0 0.0
  %526 = vmatpush1.msra.mxu0 0.0
  %527 = vmatprep.subr.mxu0 0.0
  %528 = vmatpush1.msra.mxu0 0.0
  %529 = vmatprep.subr.mxu0 0.0
  %530 = vmatpush1.msra.mxu0 0.0
  %531 = vmatprep.subr.mxu0 0.0
  %532 = vmatpush1.msra.mxu0 0.0
  %533 = vmatprep.subr.mxu0 0.0
  %534 = vmatpush1.msra.mxu0 0.0
  %535 = vmatprep.subr.mxu0 0.0
  %536 = vmatpush1.msra.mxu0 0.0
  %537 = vmatprep.subr.mxu0 0.0
  %538 = vmatpush1.msra.mxu0 0.0
  %539 = vmatprep.subr.mxu0 0.0
  %540 = vmatpush1.msra.mxu0 0.0
  %541 = vmatprep.subr.mxu0 0.0
  %542 = vmatpush1.msra.mxu0 0.0
  %543 = vmatprep.subr.mxu0 0.0
  %544 = vmatpush1.msra.mxu0 0.0
  %545 = vmatprep.subr.mxu0 0.0
  %546 = vmatpush1.msra.mxu0 0.0
  %547 = vmatprep.mubr.f32.mxu0 0.0
  %v548 = vand.u32 %v60, 4294901760
  %549 = vmatmul.mubr.f32.gmra.mrb[0].mxu0 %v548
  %v550 = vpop.f32.mrb[0].mxu0
  %v551 = vadd.f32 %v448, %v550
  %v552 = vpop.f32.mrb[0].mxu0
  %553 = vmatprep.mubr.f32.mxu0 0.0
  %v554 = vand.u32 %v63, 4294901760
  %555 = vmatmul.mubr.f32.gmra.mrb[0].mxu0 %v554
  %v556 = vpop.f32.mrb[0].mxu0
  %v557 = vadd.f32 %v456, %v556
  %v558 = vpop.f32.mrb[0].mxu0
  %559 = vdwg.mxu0
  %560 = vmatprep.subr.mxu0 0.0
  %v561 = vand.u32 %v28, 4294901760
  %562 = vmatpush1.msra.mxu0 %v561
  %563 = vmatprep.subr.mxu0 0.0
  %v564 = vand.u32 %v29, 4294901760
  %565 = vmatpush1.msra.mxu0 %v564
  %566 = vmatprep.subr.mxu0 0.0
  %v567 = vand.u32 %v30, 4294901760
  %568 = vmatpush1.msra.mxu0 %v567
  %569 = vmatprep.subr.mxu0 0.0
  %v570 = vand.u32 %v31, 4294901760
  %571 = vmatpush1.msra.mxu0 %v570
  %572 = vmatprep.subr.mxu0 0.0
  %v573 = vand.u32 %v32, 4294901760
  %574 = vmatpush1.msra.mxu0 %v573
  %575 = vmatprep.subr.mxu0 0.0
  %v576 = vand.u32 %v33, 4294901760
  %577 = vmatpush1.msra.mxu0 %v576
  %578 = vmatprep.subr.mxu0 0.0
  %v579 = vand.u32 %v34, 4294901760
  %580 = vmatpush1.msra.mxu0 %v579
  %581 = vmatprep.subr.mxu0 0.0
  %v582 = vand.u32 %v35, 4294901760
  %583 = vmatpush1.msra.mxu0 %v582
  %584 = vmatprep.subr.mxu0 0.0
  %585 = vmatpush1.msra.mxu0 0.0
  %586 = vmatprep.subr.mxu0 0.0
  %587 = vmatpush1.msra.mxu0 0.0
  %588 = vmatprep.subr.mxu0 0.0
  %589 = vmatpush1.msra.mxu0 0.0
  %590 = vmatprep.subr.mxu0 0.0
  %591 = vmatpush1.msra.mxu0 0.0
  %592 = vmatprep.subr.mxu0 0.0
  %593 = vmatpush1.msra.mxu0 0.0
  %594 = vmatprep.subr.mxu0 0.0
  %595 = vmatpush1.msra.mxu0 0.0
  %596 = vmatprep.subr.mxu0 0.0
  %597 = vmatpush1.msra.mxu0 0.0
  %598 = vmatprep.subr.mxu0 0.0
  %599 = vmatpush1.msra.mxu0 0.0
  %600 = vmatprep.subr.mxu0 0.0
  %601 = vmatpush1.msra.mxu0 0.0
  %602 = vmatprep.subr.mxu0 0.0
  %603 = vmatpush1.msra.mxu0 0.0
  %604 = vmatprep.subr.mxu0 0.0
  %605 = vmatpush1.msra.mxu0 0.0
  %606 = vmatprep.subr.mxu0 0.0
  %607 = vmatpush1.msra.mxu0 0.0
  %608 = vmatprep.subr.mxu0 0.0
  %609 = vmatpush1.msra.mxu0 0.0
  %610 = vmatprep.subr.mxu0 0.0
  %611 = vmatpush1.msra.mxu0 0.0
  %612 = vmatprep.subr.mxu0 0.0
  %613 = vmatpush1.msra.mxu0 0.0
  %614 = vmatprep.subr.mxu0 0.0
  %615 = vmatpush1.msra.mxu0 0.0
  %616 = vmatprep.subr.mxu0 0.0
  %617 = vmatpush1.msra.mxu0 0.0
  %618 = vmatprep.subr.mxu0 0.0
  %619 = vmatpush1.msra.mxu0 0.0
  %620 = vmatprep.subr.mxu0 0.0
  %621 = vmatpush1.msra.mxu0 0.0
  %622 = vmatprep.subr.mxu0 0.0
  %623 = vmatpush1.msra.mxu0 0.0
  %624 = vmatprep.subr.mxu0 0.0
  %625 = vmatpush1.msra.mxu0 0.0
  %626 = vmatprep.subr.mxu0 0.0
  %627 = vmatpush1.msra.mxu0 0.0
  %628 = vmatprep.subr.mxu0 0.0
  %629 = vmatpush1.msra.mxu0 0.0
  %630 = vmatprep.subr.mxu0 0.0
  %631 = vmatpush1.msra.mxu0 0.0
  %632 = vmatprep.mubr.f32.mxu0 0.0
  %v633 = vand.u32 %v60, 4294901760
  %634 = vmatmul.mubr.f32.gmra.mrb[0].mxu0 %v633
  %v635 = vpop.f32.mrb[0].mxu0
  %v636 = vadd.f32 %v551, %v635
  %v637 = vpop.f32.mrb[0].mxu0
  %638 = vmatprep.mubr.f32.mxu0 0.0
  %v639 = vand.u32 %v63, 4294901760
  %640 = vmatmul.mubr.f32.gmra.mrb[0].mxu0 %v639
  %v641 = vpop.f32.mrb[0].mxu0
  %v642 = vadd.f32 %v557, %v641
  %v643 = vpop.f32.mrb[0].mxu0
  %644 = vdwg.mxu0
  %vm645 = vcmask 130048
  %v647 = vsel %vm645, %v26, 0
  %v650 = vsel %vm645, %v27, 0
  %652 = vmatprep.subr.mxu0 0.0
  %v653 = vand.u32 %v636, 4294901760
  %654 = vmatpush1.msra.mxu0 %v653
  %655 = vmatprep.subr.mxu0 0.0
  %v656 = vand.u32 %v642, 4294901760
  %657 = vmatpush1.msra.mxu0 %v656
  %658 = vmatprep.subr.mxu0 0.0
  %659 = vmatpush1.msra.mxu0 0.0
  %660 = vmatprep.subr.mxu0 0.0
  %661 = vmatpush1.msra.mxu0 0.0
  %662 = vmatprep.subr.mxu0 0.0
  %663 = vmatpush1.msra.mxu0 0.0
  %664 = vmatprep.subr.mxu0 0.0
  %665 = vmatpush1.msra.mxu0 0.0
  %666 = vmatprep.subr.mxu0 0.0
  %667 = vmatpush1.msra.mxu0 0.0
  %668 = vmatprep.subr.mxu0 0.0
  %669 = vmatpush1.msra.mxu0 0.0
  %670 = vmatprep.subr.mxu0 0.0
  %671 = vmatpush1.msra.mxu0 0.0
  %672 = vmatprep.subr.mxu0 0.0
  %673 = vmatpush1.msra.mxu0 0.0
  %674 = vmatprep.subr.mxu0 0.0
  %675 = vmatpush1.msra.mxu0 0.0
  %676 = vmatprep.subr.mxu0 0.0
  %677 = vmatpush1.msra.mxu0 0.0
  %678 = vmatprep.subr.mxu0 0.0
  %679 = vmatpush1.msra.mxu0 0.0
  %680 = vmatprep.subr.mxu0 0.0
  %681 = vmatpush1.msra.mxu0 0.0
  %682 = vmatprep.subr.mxu0 0.0
  %683 = vmatpush1.msra.mxu0 0.0
  %684 = vmatprep.subr.mxu0 0.0
  %685 = vmatpush1.msra.mxu0 0.0
  %686 = vmatprep.subr.mxu0 0.0
  %687 = vmatpush1.msra.mxu0 0.0
  %688 = vmatprep.subr.mxu0 0.0
  %689 = vmatpush1.msra.mxu0 0.0
  %690 = vmatprep.subr.mxu0 0.0
  %691 = vmatpush1.msra.mxu0 0.0
  %692 = vmatprep.subr.mxu0 0.0
  %693 = vmatpush1.msra.mxu0 0.0
  %694 = vmatprep.subr.mxu0 0.0
  %695 = vmatpush1.msra.mxu0 0.0
  %696 = vmatprep.subr.mxu0 0.0
  %697 = vmatpush1.msra.mxu0 0.0
  %698 = vmatprep.subr.mxu0 0.0
  %699 = vmatpush1.msra.mxu0 0.0
  %700 = vmatprep.subr.mxu0 0.0
  %701 = vmatpush1.msra.mxu0 0.0
  %702 = vmatprep.subr.mxu0 0.0
  %703 = vmatpush1.msra.mxu0 0.0
  %704 = vmatprep.subr.mxu0 0.0
  %705 = vmatpush1.msra.mxu0 0.0
  %706 = vmatprep.subr.mxu0 0.0
  %707 = vmatpush1.msra.mxu0 0.0
  %708 = vmatprep.subr.mxu0 0.0
  %709 = vmatpush1.msra.mxu0 0.0
  %710 = vmatprep.subr.mxu0 0.0
  %711 = vmatpush1.msra.mxu0 0.0
  %712 = vmatprep.subr.mxu0 0.0
  %713 = vmatpush1.msra.mxu0 0.0
  %714 = vmatprep.subr.mxu0 0.0
  %715 = vmatpush1.msra.mxu0 0.0
  %716 = vmatprep.subr.mxu0 0.0
  %717 = vmatpush1.msra.mxu0 0.0
  %718 = vmatprep.mubr.f32.mxu0 0.0
  %v719 = vand.u32 %v647, 4294901760
  %v720 = vsub.f32 %v647, %v719
  %v721 = vand.u32 %v720, 4294901760
  %v722 = vsub.f32 %v720, %v721
  %v723 = vand.u32 %v722, 4294901760
  %724 = vmatmul.mubr.f32.gmra.mrb[0].mxu0 %v723
  %v725 = vpop.f32.mrb[0].mxu0
  %v726 = vadd.f32 0.0, %v725
  %v727 = vpop.f32.mrb[0].mxu0
  %728 = vmatprep.mubr.f32.mxu0 0.0
  %v729 = vand.u32 %v650, 4294901760
  %v730 = vsub.f32 %v650, %v729
  %v731 = vand.u32 %v730, 4294901760
  %v732 = vsub.f32 %v730, %v731
  %v733 = vand.u32 %v732, 4294901760
  %734 = vmatmul.mubr.f32.gmra.mrb[0].mxu0 %v733
  %v735 = vpop.f32.mrb[0].mxu0
  %v736 = vadd.f32 0.0, %v735
  %v737 = vpop.f32.mrb[0].mxu0
  %738 = vdwg.mxu0
  %739 = vmatprep.subr.mxu0 0.0
  %v740 = vand.u32 %v636, 4294901760
  %v741 = vsub.f32 %v636, %v740
  %v742 = vand.u32 %v741, 4294901760
  %v743 = vsub.f32 %v741, %v742
  %v744 = vand.u32 %v743, 4294901760
  %745 = vmatpush1.msra.mxu0 %v744
  %746 = vmatprep.subr.mxu0 0.0
  %v747 = vand.u32 %v642, 4294901760
  %v748 = vsub.f32 %v642, %v747
  %v749 = vand.u32 %v748, 4294901760
  %v750 = vsub.f32 %v748, %v749
  %v751 = vand.u32 %v750, 4294901760
  %752 = vmatpush1.msra.mxu0 %v751
  %753 = vmatprep.subr.mxu0 0.0
  %754 = vmatpush1.msra.mxu0 0.0
  %755 = vmatprep.subr.mxu0 0.0
  %756 = vmatpush1.msra.mxu0 0.0
  %757 = vmatprep.subr.mxu0 0.0
  %758 = vmatpush1.msra.mxu0 0.0
  %759 = vmatprep.subr.mxu0 0.0
  %760 = vmatpush1.msra.mxu0 0.0
  %761 = vmatprep.subr.mxu0 0.0
  %762 = vmatpush1.msra.mxu0 0.0
  %763 = vmatprep.subr.mxu0 0.0
  %764 = vmatpush1.msra.mxu0 0.0
  %765 = vmatprep.subr.mxu0 0.0
  %766 = vmatpush1.msra.mxu0 0.0
  %767 = vmatprep.subr.mxu0 0.0
  %768 = vmatpush1.msra.mxu0 0.0
  %769 = vmatprep.subr.mxu0 0.0
  %770 = vmatpush1.msra.mxu0 0.0
  %771 = vmatprep.subr.mxu0 0.0
  %772 = vmatpush1.msra.mxu0 0.0
  %773 = vmatprep.subr.mxu0 0.0
  %774 = vmatpush1.msra.mxu0 0.0
  %775 = vmatprep.subr.mxu0 0.0
  %776 = vmatpush1.msra.mxu0 0.0
  %777 = vmatprep.subr.mxu0 0.0
  %778 = vmatpush1.msra.mxu0 0.0
  %779 = vmatprep.subr.mxu0 0.0
  %780 = vmatpush1.msra.mxu0 0.0
  %781 = vmatprep.subr.mxu0 0.0
  %782 = vmatpush1.msra.mxu0 0.0
  %783 = vmatprep.subr.mxu0 0.0
  %784 = vmatpush1.msra.mxu0 0.0
  %785 = vmatprep.subr.mxu0 0.0
  %786 = vmatpush1.msra.mxu0 0.0
  %787 = vmatprep.subr.mxu0 0.0
  %788 = vmatpush1.msra.mxu0 0.0
  %789 = vmatprep.subr.mxu0 0.0
  %790 = vmatpush1.msra.mxu0 0.0
  %791 = vmatprep.subr.mxu0 0.0
  %792 = vmatpush1.msra.mxu0 0.0
  %793 = vmatprep.subr.mxu0 0.0
  %794 = vmatpush1.msra.mxu0 0.0
  %795 = vmatprep.subr.mxu0 0.0
  %796 = vmatpush1.msra.mxu0 0.0
  %797 = vmatprep.subr.mxu0 0.0
  %798 = vmatpush1.msra.mxu0 0.0
  %799 = vmatprep.subr.mxu0 0.0
  %800 = vmatpush1.msra.mxu0 0.0
  %801 = vmatprep.subr.mxu0 0.0
  %802 = vmatpush1.msra.mxu0 0.0
  %803 = vmatprep.subr.mxu0 0.0
  %804 = vmatpush1.msra.mxu0 0.0
  %805 = vmatprep.subr.mxu0 0.0
  %806 = vmatpush1.msra.mxu0 0.0
  %807 = vmatprep.subr.mxu0 0.0
  %808 = vmatpush1.msra.mxu0 0.0
  %809 = vmatprep.subr.mxu0 0.0
  %810 = vmatpush1.msra.mxu0 0.0
  %811 = vmatprep.subr.mxu0 0.0
  %812 = vmatpush1.msra.mxu0 0.0
  %813 = vmatprep.mubr.f32.mxu0 0.0
  %v814 = vand.u32 %v647, 4294901760
  %815 = vmatmul.mubr.f32.gmra.mrb[0].mxu0 %v814
  %v816 = vpop.f32.mrb[0].mxu0
  %v817 = vadd.f32 %v726, %v816
  %v818 = vpop.f32.mrb[0].mxu0
  %819 = vmatprep.mubr.f32.mxu0 0.0
  %v820 = vand.u32 %v650, 4294901760
  %821 = vmatmul.mubr.f32.gmra.mrb[0].mxu0 %v820
  %v822 = vpop.f32.mrb[0].mxu0
  %v823 = vadd.f32 %v736, %v822
  %v824 = vpop.f32.mrb[0].mxu0
  %825 = vdwg.mxu0
  %826 = vmatprep.subr.mxu0 0.0
  %v827 = vand.u32 %v636, 4294901760
  %v828 = vsub.f32 %v636, %v827
  %829 = vmatpush1.msra.mxu0 %v828
  %830 = vmatprep.subr.mxu0 0.0
  %v831 = vand.u32 %v642, 4294901760
  %v832 = vsub.f32 %v642, %v831
  %833 = vmatpush1.msra.mxu0 %v832
  %834 = vmatprep.subr.mxu0 0.0
  %835 = vmatpush1.msra.mxu0 0.0
  %836 = vmatprep.subr.mxu0 0.0
  %837 = vmatpush1.msra.mxu0 0.0
  %838 = vmatprep.subr.mxu0 0.0
  %839 = vmatpush1.msra.mxu0 0.0
  %840 = vmatprep.subr.mxu0 0.0
  %841 = vmatpush1.msra.mxu0 0.0
  %842 = vmatprep.subr.mxu0 0.0
  %843 = vmatpush1.msra.mxu0 0.0
  %844 = vmatprep.subr.mxu0 0.0
  %845 = vmatpush1.msra.mxu0 0.0
  %846 = vmatprep.subr.mxu0 0.0
  %847 = vmatpush1.msra.mxu0 0.0
  %848 = vmatprep.subr.mxu0 0.0
  %849 = vmatpush1.msra.mxu0 0.0
  %850 = vmatprep.subr.mxu0 0.0
  %851 = vmatpush1.msra.mxu0 0.0
  %852 = vmatprep.subr.mxu0 0.0
  %853 = vmatpush1.msra.mxu0 0.0
  %854 = vmatprep.subr.mxu0 0.0
  %855 = vmatpush1.msra.mxu0 0.0
  %856 = vmatprep.subr.mxu0 0.0
  %857 = vmatpush1.msra.mxu0 0.0
  %858 = vmatprep.subr.mxu0 0.0
  %859 = vmatpush1.msra.mxu0 0.0
  %860 = vmatprep.subr.mxu0 0.0
  %861 = vmatpush1.msra.mxu0 0.0
  %862 = vmatprep.subr.mxu0 0.0
  %863 = vmatpush1.msra.mxu0 0.0
  %864 = vmatprep.subr.mxu0 0.0
  %865 = vmatpush1.msra.mxu0 0.0
  %866 = vmatprep.subr.mxu0 0.0
  %867 = vmatpush1.msra.mxu0 0.0
  %868 = vmatprep.subr.mxu0 0.0
  %869 = vmatpush1.msra.mxu0 0.0
  %870 = vmatprep.subr.mxu0 0.0
  %871 = vmatpush1.msra.mxu0 0.0
  %872 = vmatprep.subr.mxu0 0.0
  %873 = vmatpush1.msra.mxu0 0.0
  %874 = vmatprep.subr.mxu0 0.0
  %875 = vmatpush1.msra.mxu0 0.0
  %876 = vmatprep.subr.mxu0 0.0
  %877 = vmatpush1.msra.mxu0 0.0
  %878 = vmatprep.subr.mxu0 0.0
  %879 = vmatpush1.msra.mxu0 0.0
  %880 = vmatprep.subr.mxu0 0.0
  %881 = vmatpush1.msra.mxu0 0.0
  %882 = vmatprep.subr.mxu0 0.0
  %883 = vmatpush1.msra.mxu0 0.0
  %884 = vmatprep.subr.mxu0 0.0
  %885 = vmatpush1.msra.mxu0 0.0
  %886 = vmatprep.subr.mxu0 0.0
  %887 = vmatpush1.msra.mxu0 0.0
  %888 = vmatprep.subr.mxu0 0.0
  %889 = vmatpush1.msra.mxu0 0.0
  %890 = vmatprep.subr.mxu0 0.0
  %891 = vmatpush1.msra.mxu0 0.0
  %892 = vmatprep.subr.mxu0 0.0
  %893 = vmatpush1.msra.mxu0 0.0
  %894 = vmatprep.mubr.f32.mxu0 0.0
  %v895 = vand.u32 %v647, 4294901760
  %v896 = vsub.f32 %v647, %v895
  %897 = vmatmul.mubr.f32.gmra.mrb[0].mxu0 %v896
  %v898 = vpop.f32.mrb[0].mxu0
  %v899 = vadd.f32 %v817, %v898
  %v900 = vpop.f32.mrb[0].mxu0
  %901 = vmatprep.mubr.f32.mxu0 0.0
  %v902 = vand.u32 %v650, 4294901760
  %v903 = vsub.f32 %v650, %v902
  %904 = vmatmul.mubr.f32.gmra.mrb[0].mxu0 %v903
  %v905 = vpop.f32.mrb[0].mxu0
  %v906 = vadd.f32 %v823, %v905
  %v907 = vpop.f32.mrb[0].mxu0
  %908 = vdwg.mxu0
  %909 = vmatprep.subr.mxu0 0.0
  %v910 = vand.u32 %v636, 4294901760
  %911 = vmatpush1.msra.mxu0 %v910
  %912 = vmatprep.subr.mxu0 0.0
  %v913 = vand.u32 %v642, 4294901760
  %914 = vmatpush1.msra.mxu0 %v913
  %915 = vmatprep.subr.mxu0 0.0
  %916 = vmatpush1.msra.mxu0 0.0
  %917 = vmatprep.subr.mxu0 0.0
  %918 = vmatpush1.msra.mxu0 0.0
  %919 = vmatprep.subr.mxu0 0.0
  %920 = vmatpush1.msra.mxu0 0.0
  %921 = vmatprep.subr.mxu0 0.0
  %922 = vmatpush1.msra.mxu0 0.0
  %923 = vmatprep.subr.mxu0 0.0
  %924 = vmatpush1.msra.mxu0 0.0
  %925 = vmatprep.subr.mxu0 0.0
  %926 = vmatpush1.msra.mxu0 0.0
  %927 = vmatprep.subr.mxu0 0.0
  %928 = vmatpush1.msra.mxu0 0.0
  %929 = vmatprep.subr.mxu0 0.0
  %930 = vmatpush1.msra.mxu0 0.0
  %931 = vmatprep.subr.mxu0 0.0
  %932 = vmatpush1.msra.mxu0 0.0
  %933 = vmatprep.subr.mxu0 0.0
  %934 = vmatpush1.msra.mxu0 0.0
  %935 = vmatprep.subr.mxu0 0.0
  %936 = vmatpush1.msra.mxu0 0.0
  %937 = vmatprep.subr.mxu0 0.0
  %938 = vmatpush1.msra.mxu0 0.0
  %939 = vmatprep.subr.mxu0 0.0
  %940 = vmatpush1.msra.mxu0 0.0
  %941 = vmatprep.subr.mxu0 0.0
  %942 = vmatpush1.msra.mxu0 0.0
  %943 = vmatprep.subr.mxu0 0.0
  %944 = vmatpush1.msra.mxu0 0.0
  %945 = vmatprep.subr.mxu0 0.0
  %946 = vmatpush1.msra.mxu0 0.0
  %947 = vmatprep.subr.mxu0 0.0
  %948 = vmatpush1.msra.mxu0 0.0
  %949 = vmatprep.subr.mxu0 0.0
  %950 = vmatpush1.msra.mxu0 0.0
  %951 = vmatprep.subr.mxu0 0.0
  %952 = vmatpush1.msra.mxu0 0.0
  %953 = vmatprep.subr.mxu0 0.0
  %954 = vmatpush1.msra.mxu0 0.0
  %955 = vmatprep.subr.mxu0 0.0
  %956 = vmatpush1.msra.mxu0 0.0
  %957 = vmatprep.subr.mxu0 0.0
  %958 = vmatpush1.msra.mxu0 0.0
  %959 = vmatprep.subr.mxu0 0.0
  %960 = vmatpush1.msra.mxu0 0.0
  %961 = vmatprep.subr.mxu0 0.0
  %962 = vmatpush1.msra.mxu0 0.0
  %963 = vmatprep.subr.mxu0 0.0
  %964 = vmatpush1.msra.mxu0 0.0
  %965 = vmatprep.subr.mxu0 0.0
  %966 = vmatpush1.msra.mxu0 0.0
  %967 = vmatprep.subr.mxu0 0.0
  %968 = vmatpush1.msra.mxu0 0.0
  %969 = vmatprep.subr.mxu0 0.0
  %970 = vmatpush1.msra.mxu0 0.0
  %971 = vmatprep.subr.mxu0 0.0
  %972 = vmatpush1.msra.mxu0 0.0
  %973 = vmatprep.subr.mxu0 0.0
  %974 = vmatpush1.msra.mxu0 0.0
  %975 = vmatprep.mubr.f32.mxu0 0.0
  %v976 = vand.u32 %v647, 4294901760
  %v977 = vsub.f32 %v647, %v976
  %v978 = vand.u32 %v977, 4294901760
  %979 = vmatmul.mubr.f32.gmra.mrb[0].mxu0 %v978
  %v980 = vpop.f32.mrb[0].mxu0
  %v981 = vadd.f32 %v899, %v980
  %v982 = vpop.f32.mrb[0].mxu0
  %983 = vmatprep.mubr.f32.mxu0 0.0
  %v984 = vand.u32 %v650, 4294901760
  %v985 = vsub.f32 %v650, %v984
  %v986 = vand.u32 %v985, 4294901760
  %987 = vmatmul.mubr.f32.gmra.mrb[0].mxu0 %v986
  %v988 = vpop.f32.mrb[0].mxu0
  %v989 = vadd.f32 %v906, %v988
  %v990 = vpop.f32.mrb[0].mxu0
  %991 = vdwg.mxu0
  %992 = vmatprep.subr.mxu0 0.0
  %v993 = vand.u32 %v636, 4294901760
  %v994 = vsub.f32 %v636, %v993
  %v995 = vand.u32 %v994, 4294901760
  %996 = vmatpush1.msra.mxu0 %v995
  %997 = vmatprep.subr.mxu0 0.0
  %v998 = vand.u32 %v642, 4294901760
  %v999 = vsub.f32 %v642, %v998
  %v1000 = vand.u32 %v999, 4294901760
  %1001 = vmatpush1.msra.mxu0 %v1000
  %1002 = vmatprep.subr.mxu0 0.0
  %1003 = vmatpush1.msra.mxu0 0.0
  %1004 = vmatprep.subr.mxu0 0.0
  %1005 = vmatpush1.msra.mxu0 0.0
  %1006 = vmatprep.subr.mxu0 0.0
  %1007 = vmatpush1.msra.mxu0 0.0
  %1008 = vmatprep.subr.mxu0 0.0
  %1009 = vmatpush1.msra.mxu0 0.0
  %1010 = vmatprep.subr.mxu0 0.0
  %1011 = vmatpush1.msra.mxu0 0.0
  %1012 = vmatprep.subr.mxu0 0.0
  %1013 = vmatpush1.msra.mxu0 0.0
  %1014 = vmatprep.subr.mxu0 0.0
  %1015 = vmatpush1.msra.mxu0 0.0
  %1016 = vmatprep.subr.mxu0 0.0
  %1017 = vmatpush1.msra.mxu0 0.0
  %1018 = vmatprep.subr.mxu0 0.0
  %1019 = vmatpush1.msra.mxu0 0.0
  %1020 = vmatprep.subr.mxu0 0.0
  %1021 = vmatpush1.msra.mxu0 0.0
  %1022 = vmatprep.subr.mxu0 0.0
  %1023 = vmatpush1.msra.mxu0 0.0
  %1024 = vmatprep.subr.mxu0 0.0
  %1025 = vmatpush1.msra.mxu0 0.0
  %1026 = vmatprep.subr.mxu0 0.0
  %1027 = vmatpush1.msra.mxu0 0.0
  %1028 = vmatprep.subr.mxu0 0.0
  %1029 = vmatpush1.msra.mxu0 0.0
  %1030 = vmatprep.subr.mxu0 0.0
  %1031 = vmatpush1.msra.mxu0 0.0
  %1032 = vmatprep.subr.mxu0 0.0
  %1033 = vmatpush1.msra.mxu0 0.0
  %1034 = vmatprep.subr.mxu0 0.0
  %1035 = vmatpush1.msra.mxu0 0.0
  %1036 = vmatprep.subr.mxu0 0.0
  %1037 = vmatpush1.msra.mxu0 0.0
  %1038 = vmatprep.subr.mxu0 0.0
  %1039 = vmatpush1.msra.mxu0 0.0
  %1040 = vmatprep.subr.mxu0 0.0
  %1041 = vmatpush1.msra.mxu0 0.0
  %1042 = vmatprep.subr.mxu0 0.0
  %1043 = vmatpush1.msra.mxu0 0.0
  %1044 = vmatprep.subr.mxu0 0.0
  %1045 = vmatpush1.msra.mxu0 0.0
  %1046 = vmatprep.subr.mxu0 0.0
  %1047 = vmatpush1.msra.mxu0 0.0
  %1048 = vmatprep.subr.mxu0 0.0
  %1049 = vmatpush1.msra.mxu0 0.0
  %1050 = vmatprep.subr.mxu0 0.0
  %1051 = vmatpush1.msra.mxu0 0.0
  %1052 = vmatprep.subr.mxu0 0.0
  %1053 = vmatpush1.msra.mxu0 0.0
  %1054 = vmatprep.subr.mxu0 0.0
  %1055 = vmatpush1.msra.mxu0 0.0
  %1056 = vmatprep.subr.mxu0 0.0
  %1057 = vmatpush1.msra.mxu0 0.0
  %1058 = vmatprep.subr.mxu0 0.0
  %1059 = vmatpush1.msra.mxu0 0.0
  %1060 = vmatprep.subr.mxu0 0.0
  %1061 = vmatpush1.msra.mxu0 0.0
  %1062 = vmatprep.mubr.f32.mxu0 0.0
  %v1063 = vand.u32 %v647, 4294901760
  %1064 = vmatmul.mubr.f32.gmra.mrb[0].mxu0 %v1063
  %v1065 = vpop.f32.mrb[0].mxu0
  %v1066 = vadd.f32 %v981, %v1065
  %v1067 = vpop.f32.mrb[0].mxu0
  %1068 = vmatprep.mubr.f32.mxu0 0.0
  %v1069 = vand.u32 %v650, 4294901760
  %1070 = vmatmul.mubr.f32.gmra.mrb[0].mxu0 %v1069
  %v1071 = vpop.f32.mrb[0].mxu0
  %v1072 = vadd.f32 %v989, %v1071
  %v1073 = vpop.f32.mrb[0].mxu0
  %1074 = vdwg.mxu0
  %1075 = vmatprep.subr.mxu0 0.0
  %v1076 = vand.u32 %v636, 4294901760
  %1077 = vmatpush1.msra.mxu0 %v1076
  %1078 = vmatprep.subr.mxu0 0.0
  %v1079 = vand.u32 %v642, 4294901760
  %1080 = vmatpush1.msra.mxu0 %v1079
  %1081 = vmatprep.subr.mxu0 0.0
  %1082 = vmatpush1.msra.mxu0 0.0
  %1083 = vmatprep.subr.mxu0 0.0
  %1084 = vmatpush1.msra.mxu0 0.0
  %1085 = vmatprep.subr.mxu0 0.0
  %1086 = vmatpush1.msra.mxu0 0.0
  %1087 = vmatprep.subr.mxu0 0.0
  %1088 = vmatpush1.msra.mxu0 0.0
  %1089 = vmatprep.subr.mxu0 0.0
  %1090 = vmatpush1.msra.mxu0 0.0
  %1091 = vmatprep.subr.mxu0 0.0
  %1092 = vmatpush1.msra.mxu0 0.0
  %1093 = vmatprep.subr.mxu0 0.0
  %1094 = vmatpush1.msra.mxu0 0.0
  %1095 = vmatprep.subr.mxu0 0.0
  %1096 = vmatpush1.msra.mxu0 0.0
  %1097 = vmatprep.subr.mxu0 0.0
  %1098 = vmatpush1.msra.mxu0 0.0
  %1099 = vmatprep.subr.mxu0 0.0
  %1100 = vmatpush1.msra.mxu0 0.0
  %1101 = vmatprep.subr.mxu0 0.0
  %1102 = vmatpush1.msra.mxu0 0.0
  %1103 = vmatprep.subr.mxu0 0.0
  %1104 = vmatpush1.msra.mxu0 0.0
  %1105 = vmatprep.subr.mxu0 0.0
  %1106 = vmatpush1.msra.mxu0 0.0
  %1107 = vmatprep.subr.mxu0 0.0
  %1108 = vmatpush1.msra.mxu0 0.0
  %1109 = vmatprep.subr.mxu0 0.0
  %1110 = vmatpush1.msra.mxu0 0.0
  %1111 = vmatprep.subr.mxu0 0.0
  %1112 = vmatpush1.msra.mxu0 0.0
  %1113 = vmatprep.subr.mxu0 0.0
  %1114 = vmatpush1.msra.mxu0 0.0
  %1115 = vmatprep.subr.mxu0 0.0
  %1116 = vmatpush1.msra.mxu0 0.0
  %1117 = vmatprep.subr.mxu0 0.0
  %1118 = vmatpush1.msra.mxu0 0.0
  %1119 = vmatprep.subr.mxu0 0.0
  %1120 = vmatpush1.msra.mxu0 0.0
  %1121 = vmatprep.subr.mxu0 0.0
  %1122 = vmatpush1.msra.mxu0 0.0
  %1123 = vmatprep.subr.mxu0 0.0
  %1124 = vmatpush1.msra.mxu0 0.0
  %1125 = vmatprep.subr.mxu0 0.0
  %1126 = vmatpush1.msra.mxu0 0.0
  %1127 = vmatprep.subr.mxu0 0.0
  %1128 = vmatpush1.msra.mxu0 0.0
  %1129 = vmatprep.subr.mxu0 0.0
  %1130 = vmatpush1.msra.mxu0 0.0
  %1131 = vmatprep.subr.mxu0 0.0
  %1132 = vmatpush1.msra.mxu0 0.0
  %1133 = vmatprep.subr.mxu0 0.0
  %1134 = vmatpush1.msra.mxu0 0.0
  %1135 = vmatprep.subr.mxu0 0.0
  %1136 = vmatpush1.msra.mxu0 0.0
  %1137 = vmatprep.subr.mxu0 0.0
  %1138 = vmatpush1.msra.mxu0 0.0
  %1139 = vmatprep.subr.mxu0 0.0
  %1140 = vmatpush1.msra.mxu0 0.0
  %1141 = vmatprep.mubr.f32.mxu0 0.0
  %v1142 = vand.u32 %v647, 4294901760
  %1143 = vmatmul.mubr.f32.gmra.mrb[0].mxu0 %v1142
  %v1144 = vpop.f32.mrb[0].mxu0
  %v1145 = vadd.f32 %v1066, %v1144
  %v1146 = vpop.f32.mrb[0].mxu0
  %1147 = vmatprep.mubr.f32.mxu0 0.0
  %v1148 = vand.u32 %v650, 4294901760
  %1149 = vmatmul.mubr.f32.gmra.mrb[0].mxu0 %v1148
  %v1150 = vpop.f32.mrb[0].mxu0
  %v1151 = vadd.f32 %v1072, %v1150
  %v1152 = vpop.f32.mrb[0].mxu0
  %1153 = vdwg.mxu0
  %v1154 = vand.u32 2147483647, %v1145
  %v1155 = vand.u32 2147483647, %v1151
  %v1157 = vsel %vm58, %v1154, 0
  %v1160 = vsel %vm58, %v1155, 0
  %1162 = vmatprep.subr.mxu0 0.0
  %v1163 = vand.u32 %v38, 4294901760
  %1164 = vmatpush1.msra.mxu0 %v1163
  %1165 = vmatprep.subr.mxu0 0.0
  %v1166 = vand.u32 %v39, 4294901760
  %1167 = vmatpush1.msra.mxu0 %v1166
  %1168 = vmatprep.subr.mxu0 0.0
  %v1169 = vand.u32 %v40, 4294901760
  %1170 = vmatpush1.msra.mxu0 %v1169
  %1171 = vmatprep.subr.mxu0 0.0
  %v1172 = vand.u32 %v41, 4294901760
  %1173 = vmatpush1.msra.mxu0 %v1172
  %1174 = vmatprep.subr.mxu0 0.0
  %v1175 = vand.u32 %v42, 4294901760
  %1176 = vmatpush1.msra.mxu0 %v1175
  %1177 = vmatprep.subr.mxu0 0.0
  %v1178 = vand.u32 %v43, 4294901760
  %1179 = vmatpush1.msra.mxu0 %v1178
  %1180 = vmatprep.subr.mxu0 0.0
  %v1181 = vand.u32 %v44, 4294901760
  %1182 = vmatpush1.msra.mxu0 %v1181
  %1183 = vmatprep.subr.mxu0 0.0
  %v1184 = vand.u32 %v45, 4294901760
  %1185 = vmatpush1.msra.mxu0 %v1184
  %1186 = vmatprep.subr.mxu0 0.0
  %1187 = vmatpush1.msra.mxu0 0.0
  %1188 = vmatprep.subr.mxu0 0.0
  %1189 = vmatpush1.msra.mxu0 0.0
  %1190 = vmatprep.subr.mxu0 0.0
  %1191 = vmatpush1.msra.mxu0 0.0
  %1192 = vmatprep.subr.mxu0 0.0
  %1193 = vmatpush1.msra.mxu0 0.0
  %1194 = vmatprep.subr.mxu0 0.0
  %1195 = vmatpush1.msra.mxu0 0.0
  %1196 = vmatprep.subr.mxu0 0.0
  %1197 = vmatpush1.msra.mxu0 0.0
  %1198 = vmatprep.subr.mxu0 0.0
  %1199 = vmatpush1.msra.mxu0 0.0
  %1200 = vmatprep.subr.mxu0 0.0
  %1201 = vmatpush1.msra.mxu0 0.0
  %1202 = vmatprep.subr.mxu0 0.0
  %1203 = vmatpush1.msra.mxu0 0.0
  %1204 = vmatprep.subr.mxu0 0.0
  %1205 = vmatpush1.msra.mxu0 0.0
  %1206 = vmatprep.subr.mxu0 0.0
  %1207 = vmatpush1.msra.mxu0 0.0
  %1208 = vmatprep.subr.mxu0 0.0
  %1209 = vmatpush1.msra.mxu0 0.0
  %1210 = vmatprep.subr.mxu0 0.0
  %1211 = vmatpush1.msra.mxu0 0.0
  %1212 = vmatprep.subr.mxu0 0.0
  %1213 = vmatpush1.msra.mxu0 0.0
  %1214 = vmatprep.subr.mxu0 0.0
  %1215 = vmatpush1.msra.mxu0 0.0
  %1216 = vmatprep.subr.mxu0 0.0
  %1217 = vmatpush1.msra.mxu0 0.0
  %1218 = vmatprep.subr.mxu0 0.0
  %1219 = vmatpush1.msra.mxu0 0.0
  %1220 = vmatprep.subr.mxu0 0.0
  %1221 = vmatpush1.msra.mxu0 0.0
  %1222 = vmatprep.subr.mxu0 0.0
  %1223 = vmatpush1.msra.mxu0 0.0
  %1224 = vmatprep.subr.mxu0 0.0
  %1225 = vmatpush1.msra.mxu0 0.0
  %1226 = vmatprep.subr.mxu0 0.0
  %1227 = vmatpush1.msra.mxu0 0.0
  %1228 = vmatprep.subr.mxu0 0.0
  %1229 = vmatpush1.msra.mxu0 0.0
  %1230 = vmatprep.subr.mxu0 0.0
  %1231 = vmatpush1.msra.mxu0 0.0
  %1232 = vmatprep.subr.mxu0 0.0
  %1233 = vmatpush1.msra.mxu0 0.0
  %1234 = vmatprep.mubr.f32.mxu0 0.0
  %v1235 = vand.u32 %v1157, 4294901760
  %v1236 = vsub.f32 %v1157, %v1235
  %v1237 = vand.u32 %v1236, 4294901760
  %v1238 = vsub.f32 %v1236, %v1237
  %v1239 = vand.u32 %v1238, 4294901760
  %1240 = vmatmul.mubr.f32.gmra.mrb[0].mxu0 %v1239
  %v1241 = vpop.f32.mrb[0].mxu0
  %v1242 = vadd.f32 0.0, %v1241
  %v1243 = vpop.f32.mrb[0].mxu0
  %1244 = vmatprep.mubr.f32.mxu0 0.0
  %v1245 = vand.u32 %v1160, 4294901760
  %v1246 = vsub.f32 %v1160, %v1245
  %v1247 = vand.u32 %v1246, 4294901760
  %v1248 = vsub.f32 %v1246, %v1247
  %v1249 = vand.u32 %v1248, 4294901760
  %1250 = vmatmul.mubr.f32.gmra.mrb[0].mxu0 %v1249
  %v1251 = vpop.f32.mrb[0].mxu0
  %v1252 = vadd.f32 0.0, %v1251
  %v1253 = vpop.f32.mrb[0].mxu0
  %1254 = vdwg.mxu0
  %1255 = vmatprep.subr.mxu0 0.0
  %v1256 = vand.u32 %v38, 4294901760
  %v1257 = vsub.f32 %v38, %v1256
  %v1258 = vand.u32 %v1257, 4294901760
  %v1259 = vsub.f32 %v1257, %v1258
  %v1260 = vand.u32 %v1259, 4294901760
  %1261 = vmatpush1.msra.mxu0 %v1260
  %1262 = vmatprep.subr.mxu0 0.0
  %v1263 = vand.u32 %v39, 4294901760
  %v1264 = vsub.f32 %v39, %v1263
  %v1265 = vand.u32 %v1264, 4294901760
  %v1266 = vsub.f32 %v1264, %v1265
  %v1267 = vand.u32 %v1266, 4294901760
  %1268 = vmatpush1.msra.mxu0 %v1267
  %1269 = vmatprep.subr.mxu0 0.0
  %v1270 = vand.u32 %v40, 4294901760
  %v1271 = vsub.f32 %v40, %v1270
  %v1272 = vand.u32 %v1271, 4294901760
  %v1273 = vsub.f32 %v1271, %v1272
  %v1274 = vand.u32 %v1273, 4294901760
  %1275 = vmatpush1.msra.mxu0 %v1274
  %1276 = vmatprep.subr.mxu0 0.0
  %v1277 = vand.u32 %v41, 4294901760
  %v1278 = vsub.f32 %v41, %v1277
  %v1279 = vand.u32 %v1278, 4294901760
  %v1280 = vsub.f32 %v1278, %v1279
  %v1281 = vand.u32 %v1280, 4294901760
  %1282 = vmatpush1.msra.mxu0 %v1281
  %1283 = vmatprep.subr.mxu0 0.0
  %v1284 = vand.u32 %v42, 4294901760
  %v1285 = vsub.f32 %v42, %v1284
  %v1286 = vand.u32 %v1285, 4294901760
  %v1287 = vsub.f32 %v1285, %v1286
  %v1288 = vand.u32 %v1287, 4294901760
  %1289 = vmatpush1.msra.mxu0 %v1288
  %1290 = vmatprep.subr.mxu0 0.0
  %v1291 = vand.u32 %v43, 4294901760
  %v1292 = vsub.f32 %v43, %v1291
  %v1293 = vand.u32 %v1292, 4294901760
  %v1294 = vsub.f32 %v1292, %v1293
  %v1295 = vand.u32 %v1294, 4294901760
  %1296 = vmatpush1.msra.mxu0 %v1295
  %1297 = vmatprep.subr.mxu0 0.0
  %v1298 = vand.u32 %v44, 4294901760
  %v1299 = vsub.f32 %v44, %v1298
  %v1300 = vand.u32 %v1299, 4294901760
  %v1301 = vsub.f32 %v1299, %v1300
  %v1302 = vand.u32 %v1301, 4294901760
  %1303 = vmatpush1.msra.mxu0 %v1302
  %1304 = vmatprep.subr.mxu0 0.0
  %v1305 = vand.u32 %v45, 4294901760
  %v1306 = vsub.f32 %v45, %v1305
  %v1307 = vand.u32 %v1306, 4294901760
  %v1308 = vsub.f32 %v1306, %v1307
  %v1309 = vand.u32 %v1308, 4294901760
  %1310 = vmatpush1.msra.mxu0 %v1309
  %1311 = vmatprep.subr.mxu0 0.0
  %1312 = vmatpush1.msra.mxu0 0.0
  %1313 = vmatprep.subr.mxu0 0.0
  %1314 = vmatpush1.msra.mxu0 0.0
  %1315 = vmatprep.subr.mxu0 0.0
  %1316 = vmatpush1.msra.mxu0 0.0
  %1317 = vmatprep.subr.mxu0 0.0
  %1318 = vmatpush1.msra.mxu0 0.0
  %1319 = vmatprep.subr.mxu0 0.0
  %1320 = vmatpush1.msra.mxu0 0.0
  %1321 = vmatprep.subr.mxu0 0.0
  %1322 = vmatpush1.msra.mxu0 0.0
  %1323 = vmatprep.subr.mxu0 0.0
  %1324 = vmatpush1.msra.mxu0 0.0
  %1325 = vmatprep.subr.mxu0 0.0
  %1326 = vmatpush1.msra.mxu0 0.0
  %1327 = vmatprep.subr.mxu0 0.0
  %1328 = vmatpush1.msra.mxu0 0.0
  %1329 = vmatprep.subr.mxu0 0.0
  %1330 = vmatpush1.msra.mxu0 0.0
  %1331 = vmatprep.subr.mxu0 0.0
  %1332 = vmatpush1.msra.mxu0 0.0
  %1333 = vmatprep.subr.mxu0 0.0
  %1334 = vmatpush1.msra.mxu0 0.0
  %1335 = vmatprep.subr.mxu0 0.0
  %1336 = vmatpush1.msra.mxu0 0.0
  %1337 = vmatprep.subr.mxu0 0.0
  %1338 = vmatpush1.msra.mxu0 0.0
  %1339 = vmatprep.subr.mxu0 0.0
  %1340 = vmatpush1.msra.mxu0 0.0
  %1341 = vmatprep.subr.mxu0 0.0
  %1342 = vmatpush1.msra.mxu0 0.0
  %1343 = vmatprep.subr.mxu0 0.0
  %1344 = vmatpush1.msra.mxu0 0.0
  %1345 = vmatprep.subr.mxu0 0.0
  %1346 = vmatpush1.msra.mxu0 0.0
  %1347 = vmatprep.subr.mxu0 0.0
  %1348 = vmatpush1.msra.mxu0 0.0
  %1349 = vmatprep.subr.mxu0 0.0
  %1350 = vmatpush1.msra.mxu0 0.0
  %1351 = vmatprep.subr.mxu0 0.0
  %1352 = vmatpush1.msra.mxu0 0.0
  %1353 = vmatprep.subr.mxu0 0.0
  %1354 = vmatpush1.msra.mxu0 0.0
  %1355 = vmatprep.subr.mxu0 0.0
  %1356 = vmatpush1.msra.mxu0 0.0
  %1357 = vmatprep.subr.mxu0 0.0
  %1358 = vmatpush1.msra.mxu0 0.0
  %1359 = vmatprep.mubr.f32.mxu0 0.0
  %v1360 = vand.u32 %v1157, 4294901760
  %1361 = vmatmul.mubr.f32.gmra.mrb[0].mxu0 %v1360
  %v1362 = vpop.f32.mrb[0].mxu0
  %v1363 = vadd.f32 %v1242, %v1362
  %v1364 = vpop.f32.mrb[0].mxu0
  %1365 = vmatprep.mubr.f32.mxu0 0.0
  %v1366 = vand.u32 %v1160, 4294901760
  %1367 = vmatmul.mubr.f32.gmra.mrb[0].mxu0 %v1366
  %v1368 = vpop.f32.mrb[0].mxu0
  %v1369 = vadd.f32 %v1252, %v1368
  %v1370 = vpop.f32.mrb[0].mxu0
  %1371 = vdwg.mxu0
  %1372 = vmatprep.subr.mxu0 0.0
  %v1373 = vand.u32 %v38, 4294901760
  %v1374 = vsub.f32 %v38, %v1373
  %1375 = vmatpush1.msra.mxu0 %v1374
  %1376 = vmatprep.subr.mxu0 0.0
  %v1377 = vand.u32 %v39, 4294901760
  %v1378 = vsub.f32 %v39, %v1377
  %1379 = vmatpush1.msra.mxu0 %v1378
  %1380 = vmatprep.subr.mxu0 0.0
  %v1381 = vand.u32 %v40, 4294901760
  %v1382 = vsub.f32 %v40, %v1381
  %1383 = vmatpush1.msra.mxu0 %v1382
  %1384 = vmatprep.subr.mxu0 0.0
  %v1385 = vand.u32 %v41, 4294901760
  %v1386 = vsub.f32 %v41, %v1385
  %1387 = vmatpush1.msra.mxu0 %v1386
  %1388 = vmatprep.subr.mxu0 0.0
  %v1389 = vand.u32 %v42, 4294901760
  %v1390 = vsub.f32 %v42, %v1389
  %1391 = vmatpush1.msra.mxu0 %v1390
  %1392 = vmatprep.subr.mxu0 0.0
  %v1393 = vand.u32 %v43, 4294901760
  %v1394 = vsub.f32 %v43, %v1393
  %1395 = vmatpush1.msra.mxu0 %v1394
  %1396 = vmatprep.subr.mxu0 0.0
  %v1397 = vand.u32 %v44, 4294901760
  %v1398 = vsub.f32 %v44, %v1397
  %1399 = vmatpush1.msra.mxu0 %v1398
  %1400 = vmatprep.subr.mxu0 0.0
  %v1401 = vand.u32 %v45, 4294901760
  %v1402 = vsub.f32 %v45, %v1401
  %1403 = vmatpush1.msra.mxu0 %v1402
  %1404 = vmatprep.subr.mxu0 0.0
  %1405 = vmatpush1.msra.mxu0 0.0
  %1406 = vmatprep.subr.mxu0 0.0
  %1407 = vmatpush1.msra.mxu0 0.0
  %1408 = vmatprep.subr.mxu0 0.0
  %1409 = vmatpush1.msra.mxu0 0.0
  %1410 = vmatprep.subr.mxu0 0.0
  %1411 = vmatpush1.msra.mxu0 0.0
  %1412 = vmatprep.subr.mxu0 0.0
  %1413 = vmatpush1.msra.mxu0 0.0
  %1414 = vmatprep.subr.mxu0 0.0
  %1415 = vmatpush1.msra.mxu0 0.0
  %1416 = vmatprep.subr.mxu0 0.0
  %1417 = vmatpush1.msra.mxu0 0.0
  %1418 = vmatprep.subr.mxu0 0.0
  %1419 = vmatpush1.msra.mxu0 0.0
  %1420 = vmatprep.subr.mxu0 0.0
  %1421 = vmatpush1.msra.mxu0 0.0
  %1422 = vmatprep.subr.mxu0 0.0
  %1423 = vmatpush1.msra.mxu0 0.0
  %1424 = vmatprep.subr.mxu0 0.0
  %1425 = vmatpush1.msra.mxu0 0.0
  %1426 = vmatprep.subr.mxu0 0.0
  %1427 = vmatpush1.msra.mxu0 0.0
  %1428 = vmatprep.subr.mxu0 0.0
  %1429 = vmatpush1.msra.mxu0 0.0
  %1430 = vmatprep.subr.mxu0 0.0
  %1431 = vmatpush1.msra.mxu0 0.0
  %1432 = vmatprep.subr.mxu0 0.0
  %1433 = vmatpush1.msra.mxu0 0.0
  %1434 = vmatprep.subr.mxu0 0.0
  %1435 = vmatpush1.msra.mxu0 0.0
  %1436 = vmatprep.subr.mxu0 0.0
  %1437 = vmatpush1.msra.mxu0 0.0
  %1438 = vmatprep.subr.mxu0 0.0
  %1439 = vmatpush1.msra.mxu0 0.0
  %1440 = vmatprep.subr.mxu0 0.0
  %1441 = vmatpush1.msra.mxu0 0.0
  %1442 = vmatprep.subr.mxu0 0.0
  %1443 = vmatpush1.msra.mxu0 0.0
  %1444 = vmatprep.subr.mxu0 0.0
  %1445 = vmatpush1.msra.mxu0 0.0
  %1446 = vmatprep.subr.mxu0 0.0
  %1447 = vmatpush1.msra.mxu0 0.0
  %1448 = vmatprep.subr.mxu0 0.0
  %1449 = vmatpush1.msra.mxu0 0.0
  %1450 = vmatprep.subr.mxu0 0.0
  %1451 = vmatpush1.msra.mxu0 0.0
  %1452 = vmatprep.mubr.f32.mxu0 0.0
  %v1453 = vand.u32 %v1157, 4294901760
  %v1454 = vsub.f32 %v1157, %v1453
  %1455 = vmatmul.mubr.f32.gmra.mrb[0].mxu0 %v1454
  %v1456 = vpop.f32.mrb[0].mxu0
  %v1457 = vadd.f32 %v1363, %v1456
  %v1458 = vpop.f32.mrb[0].mxu0
  %1459 = vmatprep.mubr.f32.mxu0 0.0
  %v1460 = vand.u32 %v1160, 4294901760
  %v1461 = vsub.f32 %v1160, %v1460
  %1462 = vmatmul.mubr.f32.gmra.mrb[0].mxu0 %v1461
  %v1463 = vpop.f32.mrb[0].mxu0
  %v1464 = vadd.f32 %v1369, %v1463
  %v1465 = vpop.f32.mrb[0].mxu0
  %1466 = vdwg.mxu0
  %1467 = vmatprep.subr.mxu0 0.0
  %v1468 = vand.u32 %v38, 4294901760
  %1469 = vmatpush1.msra.mxu0 %v1468
  %1470 = vmatprep.subr.mxu0 0.0
  %v1471 = vand.u32 %v39, 4294901760
  %1472 = vmatpush1.msra.mxu0 %v1471
  %1473 = vmatprep.subr.mxu0 0.0
  %v1474 = vand.u32 %v40, 4294901760
  %1475 = vmatpush1.msra.mxu0 %v1474
  %1476 = vmatprep.subr.mxu0 0.0
  %v1477 = vand.u32 %v41, 4294901760
  %1478 = vmatpush1.msra.mxu0 %v1477
  %1479 = vmatprep.subr.mxu0 0.0
  %v1480 = vand.u32 %v42, 4294901760
  %1481 = vmatpush1.msra.mxu0 %v1480
  %1482 = vmatprep.subr.mxu0 0.0
  %v1483 = vand.u32 %v43, 4294901760
  %1484 = vmatpush1.msra.mxu0 %v1483
  %1485 = vmatprep.subr.mxu0 0.0
  %v1486 = vand.u32 %v44, 4294901760
  %1487 = vmatpush1.msra.mxu0 %v1486
  %1488 = vmatprep.subr.mxu0 0.0
  %v1489 = vand.u32 %v45, 4294901760
  %1490 = vmatpush1.msra.mxu0 %v1489
  %1491 = vmatprep.subr.mxu0 0.0
  %1492 = vmatpush1.msra.mxu0 0.0
  %1493 = vmatprep.subr.mxu0 0.0
  %1494 = vmatpush1.msra.mxu0 0.0
  %1495 = vmatprep.subr.mxu0 0.0
  %1496 = vmatpush1.msra.mxu0 0.0
  %1497 = vmatprep.subr.mxu0 0.0
  %1498 = vmatpush1.msra.mxu0 0.0
  %1499 = vmatprep.subr.mxu0 0.0
  %1500 = vmatpush1.msra.mxu0 0.0
  %1501 = vmatprep.subr.mxu0 0.0
  %1502 = vmatpush1.msra.mxu0 0.0
  %1503 = vmatprep.subr.mxu0 0.0
  %1504 = vmatpush1.msra.mxu0 0.0
  %1505 = vmatprep.subr.mxu0 0.0
  %1506 = vmatpush1.msra.mxu0 0.0
  %1507 = vmatprep.subr.mxu0 0.0
  %1508 = vmatpush1.msra.mxu0 0.0
  %1509 = vmatprep.subr.mxu0 0.0
  %1510 = vmatpush1.msra.mxu0 0.0
  %1511 = vmatprep.subr.mxu0 0.0
  %1512 = vmatpush1.msra.mxu0 0.0
  %1513 = vmatprep.subr.mxu0 0.0
  %1514 = vmatpush1.msra.mxu0 0.0
  %1515 = vmatprep.subr.mxu0 0.0
  %1516 = vmatpush1.msra.mxu0 0.0
  %1517 = vmatprep.subr.mxu0 0.0
  %1518 = vmatpush1.msra.mxu0 0.0
  %1519 = vmatprep.subr.mxu0 0.0
  %1520 = vmatpush1.msra.mxu0 0.0
  %1521 = vmatprep.subr.mxu0 0.0
  %1522 = vmatpush1.msra.mxu0 0.0
  %1523 = vmatprep.subr.mxu0 0.0
  %1524 = vmatpush1.msra.mxu0 0.0
  %1525 = vmatprep.subr.mxu0 0.0
  %1526 = vmatpush1.msra.mxu0 0.0
  %1527 = vmatprep.subr.mxu0 0.0
  %1528 = vmatpush1.msra.mxu0 0.0
  %1529 = vmatprep.subr.mxu0 0.0
  %1530 = vmatpush1.msra.mxu0 0.0
  %1531 = vmatprep.subr.mxu0 0.0
  %1532 = vmatpush1.msra.mxu0 0.0
  %1533 = vmatprep.subr.mxu0 0.0
  %1534 = vmatpush1.msra.mxu0 0.0
  %1535 = vmatprep.subr.mxu0 0.0
  %1536 = vmatpush1.msra.mxu0 0.0
  %1537 = vmatprep.subr.mxu0 0.0
  %1538 = vmatpush1.msra.mxu0 0.0
  %1539 = vmatprep.mubr.f32.mxu0 0.0
  %v1540 = vand.u32 %v1157, 4294901760
  %v1541 = vsub.f32 %v1157, %v1540
  %v1542 = vand.u32 %v1541, 4294901760
  %1543 = vmatmul.mubr.f32.gmra.mrb[0].mxu0 %v1542
  %v1544 = vpop.f32.mrb[0].mxu0
  %v1545 = vadd.f32 %v1457, %v1544
  %v1546 = vpop.f32.mrb[0].mxu0
  %1547 = vmatprep.mubr.f32.mxu0 0.0
  %v1548 = vand.u32 %v1160, 4294901760
  %v1549 = vsub.f32 %v1160, %v1548
  %v1550 = vand.u32 %v1549, 4294901760
  %1551 = vmatmul.mubr.f32.gmra.mrb[0].mxu0 %v1550
  %v1552 = vpop.f32.mrb[0].mxu0
  %v1553 = vadd.f32 %v1464, %v1552
  %v1554 = vpop.f32.mrb[0].mxu0
  %1555 = vdwg.mxu0
  %1556 = vmatprep.subr.mxu0 0.0
  %v1557 = vand.u32 %v38, 4294901760
  %v1558 = vsub.f32 %v38, %v1557
  %v1559 = vand.u32 %v1558, 4294901760
  %1560 = vmatpush1.msra.mxu0 %v1559
  %1561 = vmatprep.subr.mxu0 0.0
  %v1562 = vand.u32 %v39, 4294901760
  %v1563 = vsub.f32 %v39, %v1562
  %v1564 = vand.u32 %v1563, 4294901760
  %1565 = vmatpush1.msra.mxu0 %v1564
  %1566 = vmatprep.subr.mxu0 0.0
  %v1567 = vand.u32 %v40, 4294901760
  %v1568 = vsub.f32 %v40, %v1567
  %v1569 = vand.u32 %v1568, 4294901760
  %1570 = vmatpush1.msra.mxu0 %v1569
  %1571 = vmatprep.subr.mxu0 0.0
  %v1572 = vand.u32 %v41, 4294901760
  %v1573 = vsub.f32 %v41, %v1572
  %v1574 = vand.u32 %v1573, 4294901760
  %1575 = vmatpush1.msra.mxu0 %v1574
  %1576 = vmatprep.subr.mxu0 0.0
  %v1577 = vand.u32 %v42, 4294901760
  %v1578 = vsub.f32 %v42, %v1577
  %v1579 = vand.u32 %v1578, 4294901760
  %1580 = vmatpush1.msra.mxu0 %v1579
  %1581 = vmatprep.subr.mxu0 0.0
  %v1582 = vand.u32 %v43, 4294901760
  %v1583 = vsub.f32 %v43, %v1582
  %v1584 = vand.u32 %v1583, 4294901760
  %1585 = vmatpush1.msra.mxu0 %v1584
  %1586 = vmatprep.subr.mxu0 0.0
  %v1587 = vand.u32 %v44, 4294901760
  %v1588 = vsub.f32 %v44, %v1587
  %v1589 = vand.u32 %v1588, 4294901760
  %1590 = vmatpush1.msra.mxu0 %v1589
  %1591 = vmatprep.subr.mxu0 0.0
  %v1592 = vand.u32 %v45, 4294901760
  %v1593 = vsub.f32 %v45, %v1592
  %v1594 = vand.u32 %v1593, 4294901760
  %1595 = vmatpush1.msra.mxu0 %v1594
  %1596 = vmatprep.subr.mxu0 0.0
  %1597 = vmatpush1.msra.mxu0 0.0
  %1598 = vmatprep.subr.mxu0 0.0
  %1599 = vmatpush1.msra.mxu0 0.0
  %1600 = vmatprep.subr.mxu0 0.0
  %1601 = vmatpush1.msra.mxu0 0.0
  %1602 = vmatprep.subr.mxu0 0.0
  %1603 = vmatpush1.msra.mxu0 0.0
  %1604 = vmatprep.subr.mxu0 0.0
  %1605 = vmatpush1.msra.mxu0 0.0
  %1606 = vmatprep.subr.mxu0 0.0
  %1607 = vmatpush1.msra.mxu0 0.0
  %1608 = vmatprep.subr.mxu0 0.0
  %1609 = vmatpush1.msra.mxu0 0.0
  %1610 = vmatprep.subr.mxu0 0.0
  %1611 = vmatpush1.msra.mxu0 0.0
  %1612 = vmatprep.subr.mxu0 0.0
  %1613 = vmatpush1.msra.mxu0 0.0
  %1614 = vmatprep.subr.mxu0 0.0
  %1615 = vmatpush1.msra.mxu0 0.0
  %1616 = vmatprep.subr.mxu0 0.0
  %1617 = vmatpush1.msra.mxu0 0.0
  %1618 = vmatprep.subr.mxu0 0.0
  %1619 = vmatpush1.msra.mxu0 0.0
  %1620 = vmatprep.subr.mxu0 0.0
  %1621 = vmatpush1.msra.mxu0 0.0
  %1622 = vmatprep.subr.mxu0 0.0
  %1623 = vmatpush1.msra.mxu0 0.0
  %1624 = vmatprep.subr.mxu0 0.0
  %1625 = vmatpush1.msra.mxu0 0.0
  %1626 = vmatprep.subr.mxu0 0.0
  %1627 = vmatpush1.msra.mxu0 0.0
  %1628 = vmatprep.subr.mxu0 0.0
  %1629 = vmatpush1.msra.mxu0 0.0
  %1630 = vmatprep.subr.mxu0 0.0
  %1631 = vmatpush1.msra.mxu0 0.0
  %1632 = vmatprep.subr.mxu0 0.0
  %1633 = vmatpush1.msra.mxu0 0.0
  %1634 = vmatprep.subr.mxu0 0.0
  %1635 = vmatpush1.msra.mxu0 0.0
  %1636 = vmatprep.subr.mxu0 0.0
  %1637 = vmatpush1.msra.mxu0 0.0
  %1638 = vmatprep.subr.mxu0 0.0
  %1639 = vmatpush1.msra.mxu0 0.0
  %1640 = vmatprep.subr.mxu0 0.0
  %1641 = vmatpush1.msra.mxu0 0.0
  %1642 = vmatprep.subr.mxu0 0.0
  %1643 = vmatpush1.msra.mxu0 0.0
  %1644 = vmatprep.mubr.f32.mxu0 0.0
  %v1645 = vand.u32 %v1157, 4294901760
  %1646 = vmatmul.mubr.f32.gmra.mrb[0].mxu0 %v1645
  %v1647 = vpop.f32.mrb[0].mxu0
  %v1648 = vadd.f32 %v1545, %v1647
  %v1649 = vpop.f32.mrb[0].mxu0
  %1650 = vmatprep.mubr.f32.mxu0 0.0
  %v1651 = vand.u32 %v1160, 4294901760
  %1652 = vmatmul.mubr.f32.gmra.mrb[0].mxu0 %v1651
  %v1653 = vpop.f32.mrb[0].mxu0
  %v1654 = vadd.f32 %v1553, %v1653
  %v1655 = vpop.f32.mrb[0].mxu0
  %1656 = vdwg.mxu0
  %1657 = vmatprep.subr.mxu0 0.0
  %v1658 = vand.u32 %v38, 4294901760
  %1659 = vmatpush1.msra.mxu0 %v1658
  %1660 = vmatprep.subr.mxu0 0.0
  %v1661 = vand.u32 %v39, 4294901760
  %1662 = vmatpush1.msra.mxu0 %v1661
  %1663 = vmatprep.subr.mxu0 0.0
  %v1664 = vand.u32 %v40, 4294901760
  %1665 = vmatpush1.msra.mxu0 %v1664
  %1666 = vmatprep.subr.mxu0 0.0
  %v1667 = vand.u32 %v41, 4294901760
  %1668 = vmatpush1.msra.mxu0 %v1667
  %1669 = vmatprep.subr.mxu0 0.0
  %v1670 = vand.u32 %v42, 4294901760
  %1671 = vmatpush1.msra.mxu0 %v1670
  %1672 = vmatprep.subr.mxu0 0.0
  %v1673 = vand.u32 %v43, 4294901760
  %1674 = vmatpush1.msra.mxu0 %v1673
  %1675 = vmatprep.subr.mxu0 0.0
  %v1676 = vand.u32 %v44, 4294901760
  %1677 = vmatpush1.msra.mxu0 %v1676
  %1678 = vmatprep.subr.mxu0 0.0
  %v1679 = vand.u32 %v45, 4294901760
  %1680 = vmatpush1.msra.mxu0 %v1679
  %1681 = vmatprep.subr.mxu0 0.0
  %1682 = vmatpush1.msra.mxu0 0.0
  %1683 = vmatprep.subr.mxu0 0.0
  %1684 = vmatpush1.msra.mxu0 0.0
  %1685 = vmatprep.subr.mxu0 0.0
  %1686 = vmatpush1.msra.mxu0 0.0
  %1687 = vmatprep.subr.mxu0 0.0
  %1688 = vmatpush1.msra.mxu0 0.0
  %1689 = vmatprep.subr.mxu0 0.0
  %1690 = vmatpush1.msra.mxu0 0.0
  %1691 = vmatprep.subr.mxu0 0.0
  %1692 = vmatpush1.msra.mxu0 0.0
  %1693 = vmatprep.subr.mxu0 0.0
  %1694 = vmatpush1.msra.mxu0 0.0
  %1695 = vmatprep.subr.mxu0 0.0
  %1696 = vmatpush1.msra.mxu0 0.0
  %1697 = vmatprep.subr.mxu0 0.0
  %1698 = vmatpush1.msra.mxu0 0.0
  %1699 = vmatprep.subr.mxu0 0.0
  %1700 = vmatpush1.msra.mxu0 0.0
  %1701 = vmatprep.subr.mxu0 0.0
  %1702 = vmatpush1.msra.mxu0 0.0
  %1703 = vmatprep.subr.mxu0 0.0
  %1704 = vmatpush1.msra.mxu0 0.0
  %1705 = vmatprep.subr.mxu0 0.0
  %1706 = vmatpush1.msra.mxu0 0.0
  %1707 = vmatprep.subr.mxu0 0.0
  %1708 = vmatpush1.msra.mxu0 0.0
  %1709 = vmatprep.subr.mxu0 0.0
  %1710 = vmatpush1.msra.mxu0 0.0
  %1711 = vmatprep.subr.mxu0 0.0
  %1712 = vmatpush1.msra.mxu0 0.0
  %1713 = vmatprep.subr.mxu0 0.0
  %1714 = vmatpush1.msra.mxu0 0.0
  %1715 = vmatprep.subr.mxu0 0.0
  %1716 = vmatpush1.msra.mxu0 0.0
  %1717 = vmatprep.subr.mxu0 0.0
  %1718 = vmatpush1.msra.mxu0 0.0
  %1719 = vmatprep.subr.mxu0 0.0
  %1720 = vmatpush1.msra.mxu0 0.0
  %1721 = vmatprep.subr.mxu0 0.0
  %1722 = vmatpush1.msra.mxu0 0.0
  %1723 = vmatprep.subr.mxu0 0.0
  %1724 = vmatpush1.msra.mxu0 0.0
  %1725 = vmatprep.subr.mxu0 0.0
  %1726 = vmatpush1.msra.mxu0 0.0
  %1727 = vmatprep.subr.mxu0 0.0
  %1728 = vmatpush1.msra.mxu0 0.0
  %1729 = vmatprep.mubr.f32.mxu0 0.0
  %v1730 = vand.u32 %v1157, 4294901760
  %1731 = vmatmul.mubr.f32.gmra.mrb[0].mxu0 %v1730
  %v1732 = vpop.f32.mrb[0].mxu0
  %v1733 = vadd.f32 %v1648, %v1732
  %v1734 = vpop.f32.mrb[0].mxu0
  %1735 = vmatprep.mubr.f32.mxu0 0.0
  %v1736 = vand.u32 %v1160, 4294901760
  %1737 = vmatmul.mubr.f32.gmra.mrb[0].mxu0 %v1736
  %v1738 = vpop.f32.mrb[0].mxu0
  %v1739 = vadd.f32 %v1654, %v1738
  %v1740 = vpop.f32.mrb[0].mxu0
  %1741 = vdwg.mxu0
  %v1743 = vsel %vm645, %v36, 0
  %v1746 = vsel %vm645, %v37, 0
  %1748 = vmatprep.subr.mxu0 0.0
  %v1749 = vand.u32 %v1733, 4294901760
  %1750 = vmatpush1.msra.mxu0 %v1749
  %1751 = vmatprep.subr.mxu0 0.0
  %v1752 = vand.u32 %v1739, 4294901760
  %1753 = vmatpush1.msra.mxu0 %v1752
  %1754 = vmatprep.subr.mxu0 0.0
  %1755 = vmatpush1.msra.mxu0 0.0
  %1756 = vmatprep.subr.mxu0 0.0
  %1757 = vmatpush1.msra.mxu0 0.0
  %1758 = vmatprep.subr.mxu0 0.0
  %1759 = vmatpush1.msra.mxu0 0.0
  %1760 = vmatprep.subr.mxu0 0.0
  %1761 = vmatpush1.msra.mxu0 0.0
  %1762 = vmatprep.subr.mxu0 0.0
  %1763 = vmatpush1.msra.mxu0 0.0
  %1764 = vmatprep.subr.mxu0 0.0
  %1765 = vmatpush1.msra.mxu0 0.0
  %1766 = vmatprep.subr.mxu0 0.0
  %1767 = vmatpush1.msra.mxu0 0.0
  %1768 = vmatprep.subr.mxu0 0.0
  %1769 = vmatpush1.msra.mxu0 0.0
  %1770 = vmatprep.subr.mxu0 0.0
  %1771 = vmatpush1.msra.mxu0 0.0
  %1772 = vmatprep.subr.mxu0 0.0
  %1773 = vmatpush1.msra.mxu0 0.0
  %1774 = vmatprep.subr.mxu0 0.0
  %1775 = vmatpush1.msra.mxu0 0.0
  %1776 = vmatprep.subr.mxu0 0.0
  %1777 = vmatpush1.msra.mxu0 0.0
  %1778 = vmatprep.subr.mxu0 0.0
  %1779 = vmatpush1.msra.mxu0 0.0
  %1780 = vmatprep.subr.mxu0 0.0
  %1781 = vmatpush1.msra.mxu0 0.0
  %1782 = vmatprep.subr.mxu0 0.0
  %1783 = vmatpush1.msra.mxu0 0.0
  %1784 = vmatprep.subr.mxu0 0.0
  %1785 = vmatpush1.msra.mxu0 0.0
  %1786 = vmatprep.subr.mxu0 0.0
  %1787 = vmatpush1.msra.mxu0 0.0
  %1788 = vmatprep.subr.mxu0 0.0
  %1789 = vmatpush1.msra.mxu0 0.0
  %1790 = vmatprep.subr.mxu0 0.0
  %1791 = vmatpush1.msra.mxu0 0.0
  %1792 = vmatprep.subr.mxu0 0.0
  %1793 = vmatpush1.msra.mxu0 0.0
  %1794 = vmatprep.subr.mxu0 0.0
  %1795 = vmatpush1.msra.mxu0 0.0
  %1796 = vmatprep.subr.mxu0 0.0
  %1797 = vmatpush1.msra.mxu0 0.0
  %1798 = vmatprep.subr.mxu0 0.0
  %1799 = vmatpush1.msra.mxu0 0.0
  %1800 = vmatprep.subr.mxu0 0.0
  %1801 = vmatpush1.msra.mxu0 0.0
  %1802 = vmatprep.subr.mxu0 0.0
  %1803 = vmatpush1.msra.mxu0 0.0
  %1804 = vmatprep.subr.mxu0 0.0
  %1805 = vmatpush1.msra.mxu0 0.0
  %1806 = vmatprep.subr.mxu0 0.0
  %1807 = vmatpush1.msra.mxu0 0.0
  %1808 = vmatprep.subr.mxu0 0.0
  %1809 = vmatpush1.msra.mxu0 0.0
  %1810 = vmatprep.subr.mxu0 0.0
  %1811 = vmatpush1.msra.mxu0 0.0
  %1812 = vmatprep.subr.mxu0 0.0
  %1813 = vmatpush1.msra.mxu0 0.0
  %1814 = vmatprep.mubr.f32.mxu0 0.0
  %v1815 = vand.u32 %v1743, 4294901760
  %v1816 = vsub.f32 %v1743, %v1815
  %v1817 = vand.u32 %v1816, 4294901760
  %v1818 = vsub.f32 %v1816, %v1817
  %v1819 = vand.u32 %v1818, 4294901760
  %1820 = vmatmul.mubr.f32.gmra.mrb[0].mxu0 %v1819
  %v1821 = vpop.f32.mrb[0].mxu0
  %v1822 = vadd.f32 1e-10, %v1821
  %v1823 = vpop.f32.mrb[0].mxu0
  %1824 = vmatprep.mubr.f32.mxu0 0.0
  %v1825 = vand.u32 %v1746, 4294901760
  %v1826 = vsub.f32 %v1746, %v1825
  %v1827 = vand.u32 %v1826, 4294901760
  %v1828 = vsub.f32 %v1826, %v1827
  %v1829 = vand.u32 %v1828, 4294901760
  %1830 = vmatmul.mubr.f32.gmra.mrb[0].mxu0 %v1829
  %v1831 = vpop.f32.mrb[0].mxu0
  %v1832 = vadd.f32 1e-10, %v1831
  %v1833 = vpop.f32.mrb[0].mxu0
  %1834 = vdwg.mxu0
  %1835 = vmatprep.subr.mxu0 0.0
  %v1836 = vand.u32 %v1733, 4294901760
  %v1837 = vsub.f32 %v1733, %v1836
  %v1838 = vand.u32 %v1837, 4294901760
  %v1839 = vsub.f32 %v1837, %v1838
  %v1840 = vand.u32 %v1839, 4294901760
  %1841 = vmatpush1.msra.mxu0 %v1840
  %1842 = vmatprep.subr.mxu0 0.0
  %v1843 = vand.u32 %v1739, 4294901760
  %v1844 = vsub.f32 %v1739, %v1843
  %v1845 = vand.u32 %v1844, 4294901760
  %v1846 = vsub.f32 %v1844, %v1845
  %v1847 = vand.u32 %v1846, 4294901760
  %1848 = vmatpush1.msra.mxu0 %v1847
  %1849 = vmatprep.subr.mxu0 0.0
  %1850 = vmatpush1.msra.mxu0 0.0
  %1851 = vmatprep.subr.mxu0 0.0
  %1852 = vmatpush1.msra.mxu0 0.0
  %1853 = vmatprep.subr.mxu0 0.0
  %1854 = vmatpush1.msra.mxu0 0.0
  %1855 = vmatprep.subr.mxu0 0.0
  %1856 = vmatpush1.msra.mxu0 0.0
  %1857 = vmatprep.subr.mxu0 0.0
  %1858 = vmatpush1.msra.mxu0 0.0
  %1859 = vmatprep.subr.mxu0 0.0
  %1860 = vmatpush1.msra.mxu0 0.0
  %1861 = vmatprep.subr.mxu0 0.0
  %1862 = vmatpush1.msra.mxu0 0.0
  %1863 = vmatprep.subr.mxu0 0.0
  %1864 = vmatpush1.msra.mxu0 0.0
  %1865 = vmatprep.subr.mxu0 0.0
  %1866 = vmatpush1.msra.mxu0 0.0
  %1867 = vmatprep.subr.mxu0 0.0
  %1868 = vmatpush1.msra.mxu0 0.0
  %1869 = vmatprep.subr.mxu0 0.0
  %1870 = vmatpush1.msra.mxu0 0.0
  %1871 = vmatprep.subr.mxu0 0.0
  %1872 = vmatpush1.msra.mxu0 0.0
  %1873 = vmatprep.subr.mxu0 0.0
  %1874 = vmatpush1.msra.mxu0 0.0
  %1875 = vmatprep.subr.mxu0 0.0
  %1876 = vmatpush1.msra.mxu0 0.0
  %1877 = vmatprep.subr.mxu0 0.0
  %1878 = vmatpush1.msra.mxu0 0.0
  %1879 = vmatprep.subr.mxu0 0.0
  %1880 = vmatpush1.msra.mxu0 0.0
  %1881 = vmatprep.subr.mxu0 0.0
  %1882 = vmatpush1.msra.mxu0 0.0
  %1883 = vmatprep.subr.mxu0 0.0
  %1884 = vmatpush1.msra.mxu0 0.0
  %1885 = vmatprep.subr.mxu0 0.0
  %1886 = vmatpush1.msra.mxu0 0.0
  %1887 = vmatprep.subr.mxu0 0.0
  %1888 = vmatpush1.msra.mxu0 0.0
  %1889 = vmatprep.subr.mxu0 0.0
  %1890 = vmatpush1.msra.mxu0 0.0
  %1891 = vmatprep.subr.mxu0 0.0
  %1892 = vmatpush1.msra.mxu0 0.0
  %1893 = vmatprep.subr.mxu0 0.0
  %1894 = vmatpush1.msra.mxu0 0.0
  %1895 = vmatprep.subr.mxu0 0.0
  %1896 = vmatpush1.msra.mxu0 0.0
  %1897 = vmatprep.subr.mxu0 0.0
  %1898 = vmatpush1.msra.mxu0 0.0
  %1899 = vmatprep.subr.mxu0 0.0
  %1900 = vmatpush1.msra.mxu0 0.0
  %1901 = vmatprep.subr.mxu0 0.0
  %1902 = vmatpush1.msra.mxu0 0.0
  %1903 = vmatprep.subr.mxu0 0.0
  %1904 = vmatpush1.msra.mxu0 0.0
  %1905 = vmatprep.subr.mxu0 0.0
  %1906 = vmatpush1.msra.mxu0 0.0
  %1907 = vmatprep.subr.mxu0 0.0
  %1908 = vmatpush1.msra.mxu0 0.0
  %1909 = vmatprep.mubr.f32.mxu0 0.0
  %v1910 = vand.u32 %v1743, 4294901760
  %1911 = vmatmul.mubr.f32.gmra.mrb[0].mxu0 %v1910
  %v1912 = vpop.f32.mrb[0].mxu0
  %v1913 = vadd.f32 %v1822, %v1912
  %v1914 = vpop.f32.mrb[0].mxu0
  %1915 = vmatprep.mubr.f32.mxu0 0.0
  %v1916 = vand.u32 %v1746, 4294901760
  %1917 = vmatmul.mubr.f32.gmra.mrb[0].mxu0 %v1916
  %v1918 = vpop.f32.mrb[0].mxu0
  %v1919 = vadd.f32 %v1832, %v1918
  %v1920 = vpop.f32.mrb[0].mxu0
  %1921 = vdwg.mxu0
  %1922 = vmatprep.subr.mxu0 0.0
  %v1923 = vand.u32 %v1733, 4294901760
  %v1924 = vsub.f32 %v1733, %v1923
  %1925 = vmatpush1.msra.mxu0 %v1924
  %1926 = vmatprep.subr.mxu0 0.0
  %v1927 = vand.u32 %v1739, 4294901760
  %v1928 = vsub.f32 %v1739, %v1927
  %1929 = vmatpush1.msra.mxu0 %v1928
  %1930 = vmatprep.subr.mxu0 0.0
  %1931 = vmatpush1.msra.mxu0 0.0
  %1932 = vmatprep.subr.mxu0 0.0
  %1933 = vmatpush1.msra.mxu0 0.0
  %1934 = vmatprep.subr.mxu0 0.0
  %1935 = vmatpush1.msra.mxu0 0.0
  %1936 = vmatprep.subr.mxu0 0.0
  %1937 = vmatpush1.msra.mxu0 0.0
  %1938 = vmatprep.subr.mxu0 0.0
  %1939 = vmatpush1.msra.mxu0 0.0
  %1940 = vmatprep.subr.mxu0 0.0
  %1941 = vmatpush1.msra.mxu0 0.0
  %1942 = vmatprep.subr.mxu0 0.0
  %1943 = vmatpush1.msra.mxu0 0.0
  %1944 = vmatprep.subr.mxu0 0.0
  %1945 = vmatpush1.msra.mxu0 0.0
  %1946 = vmatprep.subr.mxu0 0.0
  %1947 = vmatpush1.msra.mxu0 0.0
  %1948 = vmatprep.subr.mxu0 0.0
  %1949 = vmatpush1.msra.mxu0 0.0
  %1950 = vmatprep.subr.mxu0 0.0
  %1951 = vmatpush1.msra.mxu0 0.0
  %1952 = vmatprep.subr.mxu0 0.0
  %1953 = vmatpush1.msra.mxu0 0.0
  %1954 = vmatprep.subr.mxu0 0.0
  %1955 = vmatpush1.msra.mxu0 0.0
  %1956 = vmatprep.subr.mxu0 0.0
  %1957 = vmatpush1.msra.mxu0 0.0
  %1958 = vmatprep.subr.mxu0 0.0
  %1959 = vmatpush1.msra.mxu0 0.0
  %1960 = vmatprep.subr.mxu0 0.0
  %1961 = vmatpush1.msra.mxu0 0.0
  %1962 = vmatprep.subr.mxu0 0.0
  %1963 = vmatpush1.msra.mxu0 0.0
  %1964 = vmatprep.subr.mxu0 0.0
  %1965 = vmatpush1.msra.mxu0 0.0
  %1966 = vmatprep.subr.mxu0 0.0
  %1967 = vmatpush1.msra.mxu0 0.0
  %1968 = vmatprep.subr.mxu0 0.0
  %1969 = vmatpush1.msra.mxu0 0.0
  %1970 = vmatprep.subr.mxu0 0.0
  %1971 = vmatpush1.msra.mxu0 0.0
  %1972 = vmatprep.subr.mxu0 0.0
  %1973 = vmatpush1.msra.mxu0 0.0
  %1974 = vmatprep.subr.mxu0 0.0
  %1975 = vmatpush1.msra.mxu0 0.0
  %1976 = vmatprep.subr.mxu0 0.0
  %1977 = vmatpush1.msra.mxu0 0.0
  %1978 = vmatprep.subr.mxu0 0.0
  %1979 = vmatpush1.msra.mxu0 0.0
  %1980 = vmatprep.subr.mxu0 0.0
  %1981 = vmatpush1.msra.mxu0 0.0
  %1982 = vmatprep.subr.mxu0 0.0
  %1983 = vmatpush1.msra.mxu0 0.0
  %1984 = vmatprep.subr.mxu0 0.0
  %1985 = vmatpush1.msra.mxu0 0.0
  %1986 = vmatprep.subr.mxu0 0.0
  %1987 = vmatpush1.msra.mxu0 0.0
  %1988 = vmatprep.subr.mxu0 0.0
  %1989 = vmatpush1.msra.mxu0 0.0
  %1990 = vmatprep.mubr.f32.mxu0 0.0
  %v1991 = vand.u32 %v1743, 4294901760
  %v1992 = vsub.f32 %v1743, %v1991
  %1993 = vmatmul.mubr.f32.gmra.mrb[0].mxu0 %v1992
  %v1994 = vpop.f32.mrb[0].mxu0
  %v1995 = vadd.f32 %v1913, %v1994
  %v1996 = vpop.f32.mrb[0].mxu0
  %1997 = vmatprep.mubr.f32.mxu0 0.0
  %v1998 = vand.u32 %v1746, 4294901760
  %v1999 = vsub.f32 %v1746, %v1998
  %2000 = vmatmul.mubr.f32.gmra.mrb[0].mxu0 %v1999
  %v2001 = vpop.f32.mrb[0].mxu0
  %v2002 = vadd.f32 %v1919, %v2001
  %v2003 = vpop.f32.mrb[0].mxu0
  %2004 = vdwg.mxu0
  %2005 = vmatprep.subr.mxu0 0.0
  %v2006 = vand.u32 %v1733, 4294901760
  %2007 = vmatpush1.msra.mxu0 %v2006
  %2008 = vmatprep.subr.mxu0 0.0
  %v2009 = vand.u32 %v1739, 4294901760
  %2010 = vmatpush1.msra.mxu0 %v2009
  %2011 = vmatprep.subr.mxu0 0.0
  %2012 = vmatpush1.msra.mxu0 0.0
  %2013 = vmatprep.subr.mxu0 0.0
  %2014 = vmatpush1.msra.mxu0 0.0
  %2015 = vmatprep.subr.mxu0 0.0
  %2016 = vmatpush1.msra.mxu0 0.0
  %2017 = vmatprep.subr.mxu0 0.0
  %2018 = vmatpush1.msra.mxu0 0.0
  %2019 = vmatprep.subr.mxu0 0.0
  %2020 = vmatpush1.msra.mxu0 0.0
  %2021 = vmatprep.subr.mxu0 0.0
  %2022 = vmatpush1.msra.mxu0 0.0
  %2023 = vmatprep.subr.mxu0 0.0
  %2024 = vmatpush1.msra.mxu0 0.0
  %2025 = vmatprep.subr.mxu0 0.0
  %2026 = vmatpush1.msra.mxu0 0.0
  %2027 = vmatprep.subr.mxu0 0.0
  %2028 = vmatpush1.msra.mxu0 0.0
  %2029 = vmatprep.subr.mxu0 0.0
  %2030 = vmatpush1.msra.mxu0 0.0
  %2031 = vmatprep.subr.mxu0 0.0
  %2032 = vmatpush1.msra.mxu0 0.0
  %2033 = vmatprep.subr.mxu0 0.0
  %2034 = vmatpush1.msra.mxu0 0.0
  %2035 = vmatprep.subr.mxu0 0.0
  %2036 = vmatpush1.msra.mxu0 0.0
  %2037 = vmatprep.subr.mxu0 0.0
  %2038 = vmatpush1.msra.mxu0 0.0
  %2039 = vmatprep.subr.mxu0 0.0
  %2040 = vmatpush1.msra.mxu0 0.0
  %2041 = vmatprep.subr.mxu0 0.0
  %2042 = vmatpush1.msra.mxu0 0.0
  %2043 = vmatprep.subr.mxu0 0.0
  %2044 = vmatpush1.msra.mxu0 0.0
  %2045 = vmatprep.subr.mxu0 0.0
  %2046 = vmatpush1.msra.mxu0 0.0
  %2047 = vmatprep.subr.mxu0 0.0
  %2048 = vmatpush1.msra.mxu0 0.0
  %2049 = vmatprep.subr.mxu0 0.0
  %2050 = vmatpush1.msra.mxu0 0.0
  %2051 = vmatprep.subr.mxu0 0.0
  %2052 = vmatpush1.msra.mxu0 0.0
  %2053 = vmatprep.subr.mxu0 0.0
  %2054 = vmatpush1.msra.mxu0 0.0
  %2055 = vmatprep.subr.mxu0 0.0
  %2056 = vmatpush1.msra.mxu0 0.0
  %2057 = vmatprep.subr.mxu0 0.0
  %2058 = vmatpush1.msra.mxu0 0.0
  %2059 = vmatprep.subr.mxu0 0.0
  %2060 = vmatpush1.msra.mxu0 0.0
  %2061 = vmatprep.subr.mxu0 0.0
  %2062 = vmatpush1.msra.mxu0 0.0
  %2063 = vmatprep.subr.mxu0 0.0
  %2064 = vmatpush1.msra.mxu0 0.0
  %2065 = vmatprep.subr.mxu0 0.0
  %2066 = vmatpush1.msra.mxu0 0.0
  %2067 = vmatprep.subr.mxu0 0.0
  %2068 = vmatpush1.msra.mxu0 0.0
  %2069 = vmatprep.subr.mxu0 0.0
  %2070 = vmatpush1.msra.mxu0 0.0
  %2071 = vmatprep.mubr.f32.mxu0 0.0
  %v2072 = vand.u32 %v1743, 4294901760
  %v2073 = vsub.f32 %v1743, %v2072
  %v2074 = vand.u32 %v2073, 4294901760
  %2075 = vmatmul.mubr.f32.gmra.mrb[0].mxu0 %v2074
  %v2076 = vpop.f32.mrb[0].mxu0
  %v2077 = vadd.f32 %v1995, %v2076
  %v2078 = vpop.f32.mrb[0].mxu0
  %2079 = vmatprep.mubr.f32.mxu0 0.0
  %v2080 = vand.u32 %v1746, 4294901760
  %v2081 = vsub.f32 %v1746, %v2080
  %v2082 = vand.u32 %v2081, 4294901760
  %2083 = vmatmul.mubr.f32.gmra.mrb[0].mxu0 %v2082
  %v2084 = vpop.f32.mrb[0].mxu0
  %v2085 = vadd.f32 %v2002, %v2084
  %v2086 = vpop.f32.mrb[0].mxu0
  %2087 = vdwg.mxu0
  %2088 = vmatprep.subr.mxu0 0.0
  %v2089 = vand.u32 %v1733, 4294901760
  %v2090 = vsub.f32 %v1733, %v2089
  %v2091 = vand.u32 %v2090, 4294901760
  %2092 = vmatpush1.msra.mxu0 %v2091
  %2093 = vmatprep.subr.mxu0 0.0
  %v2094 = vand.u32 %v1739, 4294901760
  %v2095 = vsub.f32 %v1739, %v2094
  %v2096 = vand.u32 %v2095, 4294901760
  %2097 = vmatpush1.msra.mxu0 %v2096
  %2098 = vmatprep.subr.mxu0 0.0
  %2099 = vmatpush1.msra.mxu0 0.0
  %2100 = vmatprep.subr.mxu0 0.0
  %2101 = vmatpush1.msra.mxu0 0.0
  %2102 = vmatprep.subr.mxu0 0.0
  %2103 = vmatpush1.msra.mxu0 0.0
  %2104 = vmatprep.subr.mxu0 0.0
  %2105 = vmatpush1.msra.mxu0 0.0
  %2106 = vmatprep.subr.mxu0 0.0
  %2107 = vmatpush1.msra.mxu0 0.0
  %2108 = vmatprep.subr.mxu0 0.0
  %2109 = vmatpush1.msra.mxu0 0.0
  %2110 = vmatprep.subr.mxu0 0.0
  %2111 = vmatpush1.msra.mxu0 0.0
  %2112 = vmatprep.subr.mxu0 0.0
  %2113 = vmatpush1.msra.mxu0 0.0
  %2114 = vmatprep.subr.mxu0 0.0
  %2115 = vmatpush1.msra.mxu0 0.0
  %2116 = vmatprep.subr.mxu0 0.0
  %2117 = vmatpush1.msra.mxu0 0.0
  %2118 = vmatprep.subr.mxu0 0.0
  %2119 = vmatpush1.msra.mxu0 0.0
  %2120 = vmatprep.subr.mxu0 0.0
  %2121 = vmatpush1.msra.mxu0 0.0
  %2122 = vmatprep.subr.mxu0 0.0
  %2123 = vmatpush1.msra.mxu0 0.0
  %2124 = vmatprep.subr.mxu0 0.0
  %2125 = vmatpush1.msra.mxu0 0.0
  %2126 = vmatprep.subr.mxu0 0.0
  %2127 = vmatpush1.msra.mxu0 0.0
  %2128 = vmatprep.subr.mxu0 0.0
  %2129 = vmatpush1.msra.mxu0 0.0
  %2130 = vmatprep.subr.mxu0 0.0
  %2131 = vmatpush1.msra.mxu0 0.0
  %2132 = vmatprep.subr.mxu0 0.0
  %2133 = vmatpush1.msra.mxu0 0.0
  %2134 = vmatprep.subr.mxu0 0.0
  %2135 = vmatpush1.msra.mxu0 0.0
  %2136 = vmatprep.subr.mxu0 0.0
  %2137 = vmatpush1.msra.mxu0 0.0
  %2138 = vmatprep.subr.mxu0 0.0
  %2139 = vmatpush1.msra.mxu0 0.0
  %2140 = vmatprep.subr.mxu0 0.0
  %2141 = vmatpush1.msra.mxu0 0.0
  %2142 = vmatprep.subr.mxu0 0.0
  %2143 = vmatpush1.msra.mxu0 0.0
  %2144 = vmatprep.subr.mxu0 0.0
  %2145 = vmatpush1.msra.mxu0 0.0
  %2146 = vmatprep.subr.mxu0 0.0
  %2147 = vmatpush1.msra.mxu0 0.0
  %2148 = vmatprep.subr.mxu0 0.0
  %2149 = vmatpush1.msra.mxu0 0.0
  %2150 = vmatprep.subr.mxu0 0.0
  %2151 = vmatpush1.msra.mxu0 0.0
  %2152 = vmatprep.subr.mxu0 0.0
  %2153 = vmatpush1.msra.mxu0 0.0
  %2154 = vmatprep.subr.mxu0 0.0
  %2155 = vmatpush1.msra.mxu0 0.0
  %2156 = vmatprep.subr.mxu0 0.0
  %2157 = vmatpush1.msra.mxu0 0.0
  %2158 = vmatprep.mubr.f32.mxu0 0.0
  %v2159 = vand.u32 %v1743, 4294901760
  %2160 = vmatmul.mubr.f32.gmra.mrb[0].mxu0 %v2159
  %v2161 = vpop.f32.mrb[0].mxu0
  %v2162 = vadd.f32 %v2077, %v2161
  %v2163 = vpop.f32.mrb[0].mxu0
  %2164 = vmatprep.mubr.f32.mxu0 0.0
  %v2165 = vand.u32 %v1746, 4294901760
  %2166 = vmatmul.mubr.f32.gmra.mrb[0].mxu0 %v2165
  %v2167 = vpop.f32.mrb[0].mxu0
  %v2168 = vadd.f32 %v2085, %v2167
  %v2169 = vpop.f32.mrb[0].mxu0
  %2170 = vdwg.mxu0
  %2171 = vmatprep.subr.mxu0 0.0
  %v2172 = vand.u32 %v1733, 4294901760
  %2173 = vmatpush1.msra.mxu0 %v2172
  %2174 = vmatprep.subr.mxu0 0.0
  %v2175 = vand.u32 %v1739, 4294901760
  %2176 = vmatpush1.msra.mxu0 %v2175
  %2177 = vmatprep.subr.mxu0 0.0
  %2178 = vmatpush1.msra.mxu0 0.0
  %2179 = vmatprep.subr.mxu0 0.0
  %2180 = vmatpush1.msra.mxu0 0.0
  %2181 = vmatprep.subr.mxu0 0.0
  %2182 = vmatpush1.msra.mxu0 0.0
  %2183 = vmatprep.subr.mxu0 0.0
  %2184 = vmatpush1.msra.mxu0 0.0
  %2185 = vmatprep.subr.mxu0 0.0
  %2186 = vmatpush1.msra.mxu0 0.0
  %2187 = vmatprep.subr.mxu0 0.0
  %2188 = vmatpush1.msra.mxu0 0.0
  %2189 = vmatprep.subr.mxu0 0.0
  %2190 = vmatpush1.msra.mxu0 0.0
  %2191 = vmatprep.subr.mxu0 0.0
  %2192 = vmatpush1.msra.mxu0 0.0
  %2193 = vmatprep.subr.mxu0 0.0
  %2194 = vmatpush1.msra.mxu0 0.0
  %2195 = vmatprep.subr.mxu0 0.0
  %2196 = vmatpush1.msra.mxu0 0.0
  %2197 = vmatprep.subr.mxu0 0.0
  %2198 = vmatpush1.msra.mxu0 0.0
  %2199 = vmatprep.subr.mxu0 0.0
  %2200 = vmatpush1.msra.mxu0 0.0
  %2201 = vmatprep.subr.mxu0 0.0
  %2202 = vmatpush1.msra.mxu0 0.0
  %2203 = vmatprep.subr.mxu0 0.0
  %2204 = vmatpush1.msra.mxu0 0.0
  %2205 = vmatprep.subr.mxu0 0.0
  %2206 = vmatpush1.msra.mxu0 0.0
  %2207 = vmatprep.subr.mxu0 0.0
  %2208 = vmatpush1.msra.mxu0 0.0
  %2209 = vmatprep.subr.mxu0 0.0
  %2210 = vmatpush1.msra.mxu0 0.0
  %2211 = vmatprep.subr.mxu0 0.0
  %2212 = vmatpush1.msra.mxu0 0.0
  %2213 = vmatprep.subr.mxu0 0.0
  %2214 = vmatpush1.msra.mxu0 0.0
  %2215 = vmatprep.subr.mxu0 0.0
  %2216 = vmatpush1.msra.mxu0 0.0
  %2217 = vmatprep.subr.mxu0 0.0
  %2218 = vmatpush1.msra.mxu0 0.0
  %2219 = vmatprep.subr.mxu0 0.0
  %2220 = vmatpush1.msra.mxu0 0.0
  %2221 = vmatprep.subr.mxu0 0.0
  %2222 = vmatpush1.msra.mxu0 0.0
  %2223 = vmatprep.subr.mxu0 0.0
  %2224 = vmatpush1.msra.mxu0 0.0
  %2225 = vmatprep.subr.mxu0 0.0
  %2226 = vmatpush1.msra.mxu0 0.0
  %2227 = vmatprep.subr.mxu0 0.0
  %2228 = vmatpush1.msra.mxu0 0.0
  %2229 = vmatprep.subr.mxu0 0.0
  %2230 = vmatpush1.msra.mxu0 0.0
  %2231 = vmatprep.subr.mxu0 0.0
  %2232 = vmatpush1.msra.mxu0 0.0
  %2233 = vmatprep.subr.mxu0 0.0
  %2234 = vmatpush1.msra.mxu0 0.0
  %2235 = vmatprep.subr.mxu0 0.0
  %2236 = vmatpush1.msra.mxu0 0.0
  %2237 = vmatprep.mubr.f32.mxu0 0.0
  %v2238 = vand.u32 %v1743, 4294901760
  %2239 = vmatmul.mubr.f32.gmra.mrb[0].mxu0 %v2238
  %v2240 = vpop.f32.mrb[0].mxu0
  %v2241 = vadd.f32 %v2162, %v2240
  %v2242 = vpop.f32.mrb[0].mxu0
  %2243 = vmatprep.mubr.f32.mxu0 0.0
  %v2244 = vand.u32 %v1746, 4294901760
  %2245 = vmatmul.mubr.f32.gmra.mrb[0].mxu0 %v2244
  %v2246 = vpop.f32.mrb[0].mxu0
  %v2247 = vadd.f32 %v2168, %v2246
  %v2248 = vpop.f32.mrb[0].mxu0
  %2249 = vdwg.mxu0
  %v2250 = vrcp.pop %v2241
  %v2251 = vmul.f32 1.0, %v2250
  %v2252 = vrcp.pop %v2247
  %v2253 = vmul.f32 1.0, %v2252
  %v2254 = vmin.f32 %v2251, 1e+10
  %v2255 = vmin.f32 %v2253, 1e+10
  %v2257 = vsel %vm58, %v2254, 0
  %v2260 = vsel %vm58, %v2255, 0
  %2262 = vmatprep.subr.mxu0 0.0
  %v2263 = vand.u32 %v48, 4294901760
  %2264 = vmatpush1.msra.mxu0 %v2263
  %2265 = vmatprep.subr.mxu0 0.0
  %v2266 = vand.u32 %v49, 4294901760
  %2267 = vmatpush1.msra.mxu0 %v2266
  %2268 = vmatprep.subr.mxu0 0.0
  %v2269 = vand.u32 %v50, 4294901760
  %2270 = vmatpush1.msra.mxu0 %v2269
  %2271 = vmatprep.subr.mxu0 0.0
  %v2272 = vand.u32 %v51, 4294901760
  %2273 = vmatpush1.msra.mxu0 %v2272
  %2274 = vmatprep.subr.mxu0 0.0
  %v2275 = vand.u32 %v52, 4294901760
  %2276 = vmatpush1.msra.mxu0 %v2275
  %2277 = vmatprep.subr.mxu0 0.0
  %v2278 = vand.u32 %v53, 4294901760
  %2279 = vmatpush1.msra.mxu0 %v2278
  %2280 = vmatprep.subr.mxu0 0.0
  %v2281 = vand.u32 %v54, 4294901760
  %2282 = vmatpush1.msra.mxu0 %v2281
  %2283 = vmatprep.subr.mxu0 0.0
  %v2284 = vand.u32 %v55, 4294901760
  %2285 = vmatpush1.msra.mxu0 %v2284
  %2286 = vmatprep.subr.mxu0 0.0
  %2287 = vmatpush1.msra.mxu0 0.0
  %2288 = vmatprep.subr.mxu0 0.0
  %2289 = vmatpush1.msra.mxu0 0.0
  %2290 = vmatprep.subr.mxu0 0.0
  %2291 = vmatpush1.msra.mxu0 0.0
  %2292 = vmatprep.subr.mxu0 0.0
  %2293 = vmatpush1.msra.mxu0 0.0
  %2294 = vmatprep.subr.mxu0 0.0
  %2295 = vmatpush1.msra.mxu0 0.0
  %2296 = vmatprep.subr.mxu0 0.0
  %2297 = vmatpush1.msra.mxu0 0.0
  %2298 = vmatprep.subr.mxu0 0.0
  %2299 = vmatpush1.msra.mxu0 0.0
  %2300 = vmatprep.subr.mxu0 0.0
  %2301 = vmatpush1.msra.mxu0 0.0
  %2302 = vmatprep.subr.mxu0 0.0
  %2303 = vmatpush1.msra.mxu0 0.0
  %2304 = vmatprep.subr.mxu0 0.0
  %2305 = vmatpush1.msra.mxu0 0.0
  %2306 = vmatprep.subr.mxu0 0.0
  %2307 = vmatpush1.msra.mxu0 0.0
  %2308 = vmatprep.subr.mxu0 0.0
  %2309 = vmatpush1.msra.mxu0 0.0
  %2310 = vmatprep.subr.mxu0 0.0
  %2311 = vmatpush1.msra.mxu0 0.0
  %2312 = vmatprep.subr.mxu0 0.0
  %2313 = vmatpush1.msra.mxu0 0.0
  %2314 = vmatprep.subr.mxu0 0.0
  %2315 = vmatpush1.msra.mxu0 0.0
  %2316 = vmatprep.subr.mxu0 0.0
  %2317 = vmatpush1.msra.mxu0 0.0
  %2318 = vmatprep.subr.mxu0 0.0
  %2319 = vmatpush1.msra.mxu0 0.0
  %2320 = vmatprep.subr.mxu0 0.0
  %2321 = vmatpush1.msra.mxu0 0.0
  %2322 = vmatprep.subr.mxu0 0.0
  %2323 = vmatpush1.msra.mxu0 0.0
  %2324 = vmatprep.subr.mxu0 0.0
  %2325 = vmatpush1.msra.mxu0 0.0
  %2326 = vmatprep.subr.mxu0 0.0
  %2327 = vmatpush1.msra.mxu0 0.0
  %2328 = vmatprep.subr.mxu0 0.0
  %2329 = vmatpush1.msra.mxu0 0.0
  %2330 = vmatprep.subr.mxu0 0.0
  %2331 = vmatpush1.msra.mxu0 0.0
  %2332 = vmatprep.subr.mxu0 0.0
  %2333 = vmatpush1.msra.mxu0 0.0
  %2334 = vmatprep.mubr.f32.mxu0 0.0
  %v2335 = vand.u32 %v2257, 4294901760
  %v2336 = vsub.f32 %v2257, %v2335
  %v2337 = vand.u32 %v2336, 4294901760
  %v2338 = vsub.f32 %v2336, %v2337
  %v2339 = vand.u32 %v2338, 4294901760
  %2340 = vmatmul.mubr.f32.gmra.mrb[0].mxu0 %v2339
  %v2341 = vpop.f32.mrb[0].mxu0
  %v2342 = vadd.f32 0.0, %v2341
  %v2343 = vpop.f32.mrb[0].mxu0
  %2344 = vmatprep.mubr.f32.mxu0 0.0
  %v2345 = vand.u32 %v2260, 4294901760
  %v2346 = vsub.f32 %v2260, %v2345
  %v2347 = vand.u32 %v2346, 4294901760
  %v2348 = vsub.f32 %v2346, %v2347
  %v2349 = vand.u32 %v2348, 4294901760
  %2350 = vmatmul.mubr.f32.gmra.mrb[0].mxu0 %v2349
  %v2351 = vpop.f32.mrb[0].mxu0
  %v2352 = vadd.f32 0.0, %v2351
  %v2353 = vpop.f32.mrb[0].mxu0
  %2354 = vdwg.mxu0
  %2355 = vmatprep.subr.mxu0 0.0
  %v2356 = vand.u32 %v48, 4294901760
  %v2357 = vsub.f32 %v48, %v2356
  %v2358 = vand.u32 %v2357, 4294901760
  %v2359 = vsub.f32 %v2357, %v2358
  %v2360 = vand.u32 %v2359, 4294901760
  %2361 = vmatpush1.msra.mxu0 %v2360
  %2362 = vmatprep.subr.mxu0 0.0
  %v2363 = vand.u32 %v49, 4294901760
  %v2364 = vsub.f32 %v49, %v2363
  %v2365 = vand.u32 %v2364, 4294901760
  %v2366 = vsub.f32 %v2364, %v2365
  %v2367 = vand.u32 %v2366, 4294901760
  %2368 = vmatpush1.msra.mxu0 %v2367
  %2369 = vmatprep.subr.mxu0 0.0
  %v2370 = vand.u32 %v50, 4294901760
  %v2371 = vsub.f32 %v50, %v2370
  %v2372 = vand.u32 %v2371, 4294901760
  %v2373 = vsub.f32 %v2371, %v2372
  %v2374 = vand.u32 %v2373, 4294901760
  %2375 = vmatpush1.msra.mxu0 %v2374
  %2376 = vmatprep.subr.mxu0 0.0
  %v2377 = vand.u32 %v51, 4294901760
  %v2378 = vsub.f32 %v51, %v2377
  %v2379 = vand.u32 %v2378, 4294901760
  %v2380 = vsub.f32 %v2378, %v2379
  %v2381 = vand.u32 %v2380, 4294901760
  %2382 = vmatpush1.msra.mxu0 %v2381
  %2383 = vmatprep.subr.mxu0 0.0
  %v2384 = vand.u32 %v52, 4294901760
  %v2385 = vsub.f32 %v52, %v2384
  %v2386 = vand.u32 %v2385, 4294901760
  %v2387 = vsub.f32 %v2385, %v2386
  %v2388 = vand.u32 %v2387, 4294901760
  %2389 = vmatpush1.msra.mxu0 %v2388
  %2390 = vmatprep.subr.mxu0 0.0
  %v2391 = vand.u32 %v53, 4294901760
  %v2392 = vsub.f32 %v53, %v2391
  %v2393 = vand.u32 %v2392, 4294901760
  %v2394 = vsub.f32 %v2392, %v2393
  %v2395 = vand.u32 %v2394, 4294901760
  %2396 = vmatpush1.msra.mxu0 %v2395
  %2397 = vmatprep.subr.mxu0 0.0
  %v2398 = vand.u32 %v54, 4294901760
  %v2399 = vsub.f32 %v54, %v2398
  %v2400 = vand.u32 %v2399, 4294901760
  %v2401 = vsub.f32 %v2399, %v2400
  %v2402 = vand.u32 %v2401, 4294901760
  %2403 = vmatpush1.msra.mxu0 %v2402
  %2404 = vmatprep.subr.mxu0 0.0
  %v2405 = vand.u32 %v55, 4294901760
  %v2406 = vsub.f32 %v55, %v2405
  %v2407 = vand.u32 %v2406, 4294901760
  %v2408 = vsub.f32 %v2406, %v2407
  %v2409 = vand.u32 %v2408, 4294901760
  %2410 = vmatpush1.msra.mxu0 %v2409
  %2411 = vmatprep.subr.mxu0 0.0
  %2412 = vmatpush1.msra.mxu0 0.0
  %2413 = vmatprep.subr.mxu0 0.0
  %2414 = vmatpush1.msra.mxu0 0.0
  %2415 = vmatprep.subr.mxu0 0.0
  %2416 = vmatpush1.msra.mxu0 0.0
  %2417 = vmatprep.subr.mxu0 0.0
  %2418 = vmatpush1.msra.mxu0 0.0
  %2419 = vmatprep.subr.mxu0 0.0
  %2420 = vmatpush1.msra.mxu0 0.0
  %2421 = vmatprep.subr.mxu0 0.0
  %2422 = vmatpush1.msra.mxu0 0.0
  %2423 = vmatprep.subr.mxu0 0.0
  %2424 = vmatpush1.msra.mxu0 0.0
  %2425 = vmatprep.subr.mxu0 0.0
  %2426 = vmatpush1.msra.mxu0 0.0
  %2427 = vmatprep.subr.mxu0 0.0
  %2428 = vmatpush1.msra.mxu0 0.0
  %2429 = vmatprep.subr.mxu0 0.0
  %2430 = vmatpush1.msra.mxu0 0.0
  %2431 = vmatprep.subr.mxu0 0.0
  %2432 = vmatpush1.msra.mxu0 0.0
  %2433 = vmatprep.subr.mxu0 0.0
  %2434 = vmatpush1.msra.mxu0 0.0
  %2435 = vmatprep.subr.mxu0 0.0
  %2436 = vmatpush1.msra.mxu0 0.0
  %2437 = vmatprep.subr.mxu0 0.0
  %2438 = vmatpush1.msra.mxu0 0.0
  %2439 = vmatprep.subr.mxu0 0.0
  %2440 = vmatpush1.msra.mxu0 0.0
  %2441 = vmatprep.subr.mxu0 0.0
  %2442 = vmatpush1.msra.mxu0 0.0
  %2443 = vmatprep.subr.mxu0 0.0
  %2444 = vmatpush1.msra.mxu0 0.0
  %2445 = vmatprep.subr.mxu0 0.0
  %2446 = vmatpush1.msra.mxu0 0.0
  %2447 = vmatprep.subr.mxu0 0.0
  %2448 = vmatpush1.msra.mxu0 0.0
  %2449 = vmatprep.subr.mxu0 0.0
  %2450 = vmatpush1.msra.mxu0 0.0
  %2451 = vmatprep.subr.mxu0 0.0
  %2452 = vmatpush1.msra.mxu0 0.0
  %2453 = vmatprep.subr.mxu0 0.0
  %2454 = vmatpush1.msra.mxu0 0.0
  %2455 = vmatprep.subr.mxu0 0.0
  %2456 = vmatpush1.msra.mxu0 0.0
  %2457 = vmatprep.subr.mxu0 0.0
  %2458 = vmatpush1.msra.mxu0 0.0
  %2459 = vmatprep.mubr.f32.mxu0 0.0
  %v2460 = vand.u32 %v2257, 4294901760
  %2461 = vmatmul.mubr.f32.gmra.mrb[0].mxu0 %v2460
  %v2462 = vpop.f32.mrb[0].mxu0
  %v2463 = vadd.f32 %v2342, %v2462
  %v2464 = vpop.f32.mrb[0].mxu0
  %2465 = vmatprep.mubr.f32.mxu0 0.0
  %v2466 = vand.u32 %v2260, 4294901760
  %2467 = vmatmul.mubr.f32.gmra.mrb[0].mxu0 %v2466
  %v2468 = vpop.f32.mrb[0].mxu0
  %v2469 = vadd.f32 %v2352, %v2468
  %v2470 = vpop.f32.mrb[0].mxu0
  %2471 = vdwg.mxu0
  %2472 = vmatprep.subr.mxu0 0.0
  %v2473 = vand.u32 %v48, 4294901760
  %v2474 = vsub.f32 %v48, %v2473
  %2475 = vmatpush1.msra.mxu0 %v2474
  %2476 = vmatprep.subr.mxu0 0.0
  %v2477 = vand.u32 %v49, 4294901760
  %v2478 = vsub.f32 %v49, %v2477
  %2479 = vmatpush1.msra.mxu0 %v2478
  %2480 = vmatprep.subr.mxu0 0.0
  %v2481 = vand.u32 %v50, 4294901760
  %v2482 = vsub.f32 %v50, %v2481
  %2483 = vmatpush1.msra.mxu0 %v2482
  %2484 = vmatprep.subr.mxu0 0.0
  %v2485 = vand.u32 %v51, 4294901760
  %v2486 = vsub.f32 %v51, %v2485
  %2487 = vmatpush1.msra.mxu0 %v2486
  %2488 = vmatprep.subr.mxu0 0.0
  %v2489 = vand.u32 %v52, 4294901760
  %v2490 = vsub.f32 %v52, %v2489
  %2491 = vmatpush1.msra.mxu0 %v2490
  %2492 = vmatprep.subr.mxu0 0.0
  %v2493 = vand.u32 %v53, 4294901760
  %v2494 = vsub.f32 %v53, %v2493
  %2495 = vmatpush1.msra.mxu0 %v2494
  %2496 = vmatprep.subr.mxu0 0.0
  %v2497 = vand.u32 %v54, 4294901760
  %v2498 = vsub.f32 %v54, %v2497
  %2499 = vmatpush1.msra.mxu0 %v2498
  %2500 = vmatprep.subr.mxu0 0.0
  %v2501 = vand.u32 %v55, 4294901760
  %v2502 = vsub.f32 %v55, %v2501
  %2503 = vmatpush1.msra.mxu0 %v2502
  %2504 = vmatprep.subr.mxu0 0.0
  %2505 = vmatpush1.msra.mxu0 0.0
  %2506 = vmatprep.subr.mxu0 0.0
  %2507 = vmatpush1.msra.mxu0 0.0
  %2508 = vmatprep.subr.mxu0 0.0
  %2509 = vmatpush1.msra.mxu0 0.0
  %2510 = vmatprep.subr.mxu0 0.0
  %2511 = vmatpush1.msra.mxu0 0.0
  %2512 = vmatprep.subr.mxu0 0.0
  %2513 = vmatpush1.msra.mxu0 0.0
  %2514 = vmatprep.subr.mxu0 0.0
  %2515 = vmatpush1.msra.mxu0 0.0
  %2516 = vmatprep.subr.mxu0 0.0
  %2517 = vmatpush1.msra.mxu0 0.0
  %2518 = vmatprep.subr.mxu0 0.0
  %2519 = vmatpush1.msra.mxu0 0.0
  %2520 = vmatprep.subr.mxu0 0.0
  %2521 = vmatpush1.msra.mxu0 0.0
  %2522 = vmatprep.subr.mxu0 0.0
  %2523 = vmatpush1.msra.mxu0 0.0
  %2524 = vmatprep.subr.mxu0 0.0
  %2525 = vmatpush1.msra.mxu0 0.0
  %2526 = vmatprep.subr.mxu0 0.0
  %2527 = vmatpush1.msra.mxu0 0.0
  %2528 = vmatprep.subr.mxu0 0.0
  %2529 = vmatpush1.msra.mxu0 0.0
  %2530 = vmatprep.subr.mxu0 0.0
  %2531 = vmatpush1.msra.mxu0 0.0
  %2532 = vmatprep.subr.mxu0 0.0
  %2533 = vmatpush1.msra.mxu0 0.0
  %2534 = vmatprep.subr.mxu0 0.0
  %2535 = vmatpush1.msra.mxu0 0.0
  %2536 = vmatprep.subr.mxu0 0.0
  %2537 = vmatpush1.msra.mxu0 0.0
  %2538 = vmatprep.subr.mxu0 0.0
  %2539 = vmatpush1.msra.mxu0 0.0
  %2540 = vmatprep.subr.mxu0 0.0
  %2541 = vmatpush1.msra.mxu0 0.0
  %2542 = vmatprep.subr.mxu0 0.0
  %2543 = vmatpush1.msra.mxu0 0.0
  %2544 = vmatprep.subr.mxu0 0.0
  %2545 = vmatpush1.msra.mxu0 0.0
  %2546 = vmatprep.subr.mxu0 0.0
  %2547 = vmatpush1.msra.mxu0 0.0
  %2548 = vmatprep.subr.mxu0 0.0
  %2549 = vmatpush1.msra.mxu0 0.0
  %2550 = vmatprep.subr.mxu0 0.0
  %2551 = vmatpush1.msra.mxu0 0.0
  %2552 = vmatprep.mubr.f32.mxu0 0.0
  %v2553 = vand.u32 %v2257, 4294901760
  %v2554 = vsub.f32 %v2257, %v2553
  %2555 = vmatmul.mubr.f32.gmra.mrb[0].mxu0 %v2554
  %v2556 = vpop.f32.mrb[0].mxu0
  %v2557 = vadd.f32 %v2463, %v2556
  %v2558 = vpop.f32.mrb[0].mxu0
  %2559 = vmatprep.mubr.f32.mxu0 0.0
  %v2560 = vand.u32 %v2260, 4294901760
  %v2561 = vsub.f32 %v2260, %v2560
  %2562 = vmatmul.mubr.f32.gmra.mrb[0].mxu0 %v2561
  %v2563 = vpop.f32.mrb[0].mxu0
  %v2564 = vadd.f32 %v2469, %v2563
  %v2565 = vpop.f32.mrb[0].mxu0
  %2566 = vdwg.mxu0
  %2567 = vmatprep.subr.mxu0 0.0
  %v2568 = vand.u32 %v48, 4294901760
  %2569 = vmatpush1.msra.mxu0 %v2568
  %2570 = vmatprep.subr.mxu0 0.0
  %v2571 = vand.u32 %v49, 4294901760
  %2572 = vmatpush1.msra.mxu0 %v2571
  %2573 = vmatprep.subr.mxu0 0.0
  %v2574 = vand.u32 %v50, 4294901760
  %2575 = vmatpush1.msra.mxu0 %v2574
  %2576 = vmatprep.subr.mxu0 0.0
  %v2577 = vand.u32 %v51, 4294901760
  %2578 = vmatpush1.msra.mxu0 %v2577
  %2579 = vmatprep.subr.mxu0 0.0
  %v2580 = vand.u32 %v52, 4294901760
  %2581 = vmatpush1.msra.mxu0 %v2580
  %2582 = vmatprep.subr.mxu0 0.0
  %v2583 = vand.u32 %v53, 4294901760
  %2584 = vmatpush1.msra.mxu0 %v2583
  %2585 = vmatprep.subr.mxu0 0.0
  %v2586 = vand.u32 %v54, 4294901760
  %2587 = vmatpush1.msra.mxu0 %v2586
  %2588 = vmatprep.subr.mxu0 0.0
  %v2589 = vand.u32 %v55, 4294901760
  %2590 = vmatpush1.msra.mxu0 %v2589
  %2591 = vmatprep.subr.mxu0 0.0
  %2592 = vmatpush1.msra.mxu0 0.0
  %2593 = vmatprep.subr.mxu0 0.0
  %2594 = vmatpush1.msra.mxu0 0.0
  %2595 = vmatprep.subr.mxu0 0.0
  %2596 = vmatpush1.msra.mxu0 0.0
  %2597 = vmatprep.subr.mxu0 0.0
  %2598 = vmatpush1.msra.mxu0 0.0
  %2599 = vmatprep.subr.mxu0 0.0
  %2600 = vmatpush1.msra.mxu0 0.0
  %2601 = vmatprep.subr.mxu0 0.0
  %2602 = vmatpush1.msra.mxu0 0.0
  %2603 = vmatprep.subr.mxu0 0.0
  %2604 = vmatpush1.msra.mxu0 0.0
  %2605 = vmatprep.subr.mxu0 0.0
  %2606 = vmatpush1.msra.mxu0 0.0
  %2607 = vmatprep.subr.mxu0 0.0
  %2608 = vmatpush1.msra.mxu0 0.0
  %2609 = vmatprep.subr.mxu0 0.0
  %2610 = vmatpush1.msra.mxu0 0.0
  %2611 = vmatprep.subr.mxu0 0.0
  %2612 = vmatpush1.msra.mxu0 0.0
  %2613 = vmatprep.subr.mxu0 0.0
  %2614 = vmatpush1.msra.mxu0 0.0
  %2615 = vmatprep.subr.mxu0 0.0
  %2616 = vmatpush1.msra.mxu0 0.0
  %2617 = vmatprep.subr.mxu0 0.0
  %2618 = vmatpush1.msra.mxu0 0.0
  %2619 = vmatprep.subr.mxu0 0.0
  %2620 = vmatpush1.msra.mxu0 0.0
  %2621 = vmatprep.subr.mxu0 0.0
  %2622 = vmatpush1.msra.mxu0 0.0
  %2623 = vmatprep.subr.mxu0 0.0
  %2624 = vmatpush1.msra.mxu0 0.0
  %2625 = vmatprep.subr.mxu0 0.0
  %2626 = vmatpush1.msra.mxu0 0.0
  %2627 = vmatprep.subr.mxu0 0.0
  %2628 = vmatpush1.msra.mxu0 0.0
  %2629 = vmatprep.subr.mxu0 0.0
  %2630 = vmatpush1.msra.mxu0 0.0
  %2631 = vmatprep.subr.mxu0 0.0
  %2632 = vmatpush1.msra.mxu0 0.0
  %2633 = vmatprep.subr.mxu0 0.0
  %2634 = vmatpush1.msra.mxu0 0.0
  %2635 = vmatprep.subr.mxu0 0.0
  %2636 = vmatpush1.msra.mxu0 0.0
  %2637 = vmatprep.subr.mxu0 0.0
  %2638 = vmatpush1.msra.mxu0 0.0
  %2639 = vmatprep.mubr.f32.mxu0 0.0
  %v2640 = vand.u32 %v2257, 4294901760
  %v2641 = vsub.f32 %v2257, %v2640
  %v2642 = vand.u32 %v2641, 4294901760
  %2643 = vmatmul.mubr.f32.gmra.mrb[0].mxu0 %v2642
  %v2644 = vpop.f32.mrb[0].mxu0
  %v2645 = vadd.f32 %v2557, %v2644
  %v2646 = vpop.f32.mrb[0].mxu0
  %2647 = vmatprep.mubr.f32.mxu0 0.0
  %v2648 = vand.u32 %v2260, 4294901760
  %v2649 = vsub.f32 %v2260, %v2648
  %v2650 = vand.u32 %v2649, 4294901760
  %2651 = vmatmul.mubr.f32.gmra.mrb[0].mxu0 %v2650
  %v2652 = vpop.f32.mrb[0].mxu0
  %v2653 = vadd.f32 %v2564, %v2652
  %v2654 = vpop.f32.mrb[0].mxu0
  %2655 = vdwg.mxu0
  %2656 = vmatprep.subr.mxu0 0.0
  %v2657 = vand.u32 %v48, 4294901760
  %v2658 = vsub.f32 %v48, %v2657
  %v2659 = vand.u32 %v2658, 4294901760
  %2660 = vmatpush1.msra.mxu0 %v2659
  %2661 = vmatprep.subr.mxu0 0.0
  %v2662 = vand.u32 %v49, 4294901760
  %v2663 = vsub.f32 %v49, %v2662
  %v2664 = vand.u32 %v2663, 4294901760
  %2665 = vmatpush1.msra.mxu0 %v2664
  %2666 = vmatprep.subr.mxu0 0.0
  %v2667 = vand.u32 %v50, 4294901760
  %v2668 = vsub.f32 %v50, %v2667
  %v2669 = vand.u32 %v2668, 4294901760
  %2670 = vmatpush1.msra.mxu0 %v2669
  %2671 = vmatprep.subr.mxu0 0.0
  %v2672 = vand.u32 %v51, 4294901760
  %v2673 = vsub.f32 %v51, %v2672
  %v2674 = vand.u32 %v2673, 4294901760
  %2675 = vmatpush1.msra.mxu0 %v2674
  %2676 = vmatprep.subr.mxu0 0.0
  %v2677 = vand.u32 %v52, 4294901760
  %v2678 = vsub.f32 %v52, %v2677
  %v2679 = vand.u32 %v2678, 4294901760
  %2680 = vmatpush1.msra.mxu0 %v2679
  %2681 = vmatprep.subr.mxu0 0.0
  %v2682 = vand.u32 %v53, 4294901760
  %v2683 = vsub.f32 %v53, %v2682
  %v2684 = vand.u32 %v2683, 4294901760
  %2685 = vmatpush1.msra.mxu0 %v2684
  %2686 = vmatprep.subr.mxu0 0.0
  %v2687 = vand.u32 %v54, 4294901760
  %v2688 = vsub.f32 %v54, %v2687
  %v2689 = vand.u32 %v2688, 4294901760
  %2690 = vmatpush1.msra.mxu0 %v2689
  %2691 = vmatprep.subr.mxu0 0.0
  %v2692 = vand.u32 %v55, 4294901760
  %v2693 = vsub.f32 %v55, %v2692
  %v2694 = vand.u32 %v2693, 4294901760
  %2695 = vmatpush1.msra.mxu0 %v2694
  %2696 = vmatprep.subr.mxu0 0.0
  %2697 = vmatpush1.msra.mxu0 0.0
  %2698 = vmatprep.subr.mxu0 0.0
  %2699 = vmatpush1.msra.mxu0 0.0
  %2700 = vmatprep.subr.mxu0 0.0
  %2701 = vmatpush1.msra.mxu0 0.0
  %2702 = vmatprep.subr.mxu0 0.0
  %2703 = vmatpush1.msra.mxu0 0.0
  %2704 = vmatprep.subr.mxu0 0.0
  %2705 = vmatpush1.msra.mxu0 0.0
  %2706 = vmatprep.subr.mxu0 0.0
  %2707 = vmatpush1.msra.mxu0 0.0
  %2708 = vmatprep.subr.mxu0 0.0
  %2709 = vmatpush1.msra.mxu0 0.0
  %2710 = vmatprep.subr.mxu0 0.0
  %2711 = vmatpush1.msra.mxu0 0.0
  %2712 = vmatprep.subr.mxu0 0.0
  %2713 = vmatpush1.msra.mxu0 0.0
  %2714 = vmatprep.subr.mxu0 0.0
  %2715 = vmatpush1.msra.mxu0 0.0
  %2716 = vmatprep.subr.mxu0 0.0
  %2717 = vmatpush1.msra.mxu0 0.0
  %2718 = vmatprep.subr.mxu0 0.0
  %2719 = vmatpush1.msra.mxu0 0.0
  %2720 = vmatprep.subr.mxu0 0.0
  %2721 = vmatpush1.msra.mxu0 0.0
  %2722 = vmatprep.subr.mxu0 0.0
  %2723 = vmatpush1.msra.mxu0 0.0
  %2724 = vmatprep.subr.mxu0 0.0
  %2725 = vmatpush1.msra.mxu0 0.0
  %2726 = vmatprep.subr.mxu0 0.0
  %2727 = vmatpush1.msra.mxu0 0.0
  %2728 = vmatprep.subr.mxu0 0.0
  %2729 = vmatpush1.msra.mxu0 0.0
  %2730 = vmatprep.subr.mxu0 0.0
  %2731 = vmatpush1.msra.mxu0 0.0
  %2732 = vmatprep.subr.mxu0 0.0
  %2733 = vmatpush1.msra.mxu0 0.0
  %2734 = vmatprep.subr.mxu0 0.0
  %2735 = vmatpush1.msra.mxu0 0.0
  %2736 = vmatprep.subr.mxu0 0.0
  %2737 = vmatpush1.msra.mxu0 0.0
  %2738 = vmatprep.subr.mxu0 0.0
  %2739 = vmatpush1.msra.mxu0 0.0
  %2740 = vmatprep.subr.mxu0 0.0
  %2741 = vmatpush1.msra.mxu0 0.0
  %2742 = vmatprep.subr.mxu0 0.0
  %2743 = vmatpush1.msra.mxu0 0.0
  %2744 = vmatprep.mubr.f32.mxu0 0.0
  %v2745 = vand.u32 %v2257, 4294901760
  %2746 = vmatmul.mubr.f32.gmra.mrb[0].mxu0 %v2745
  %v2747 = vpop.f32.mrb[0].mxu0
  %v2748 = vadd.f32 %v2645, %v2747
  %v2749 = vpop.f32.mrb[0].mxu0
  %2750 = vmatprep.mubr.f32.mxu0 0.0
  %v2751 = vand.u32 %v2260, 4294901760
  %2752 = vmatmul.mubr.f32.gmra.mrb[0].mxu0 %v2751
  %v2753 = vpop.f32.mrb[0].mxu0
  %v2754 = vadd.f32 %v2653, %v2753
  %v2755 = vpop.f32.mrb[0].mxu0
  %2756 = vdwg.mxu0
  %2757 = vmatprep.subr.mxu0 0.0
  %v2758 = vand.u32 %v48, 4294901760
  %2759 = vmatpush1.msra.mxu0 %v2758
  %2760 = vmatprep.subr.mxu0 0.0
  %v2761 = vand.u32 %v49, 4294901760
  %2762 = vmatpush1.msra.mxu0 %v2761
  %2763 = vmatprep.subr.mxu0 0.0
  %v2764 = vand.u32 %v50, 4294901760
  %2765 = vmatpush1.msra.mxu0 %v2764
  %2766 = vmatprep.subr.mxu0 0.0
  %v2767 = vand.u32 %v51, 4294901760
  %2768 = vmatpush1.msra.mxu0 %v2767
  %2769 = vmatprep.subr.mxu0 0.0
  %v2770 = vand.u32 %v52, 4294901760
  %2771 = vmatpush1.msra.mxu0 %v2770
  %2772 = vmatprep.subr.mxu0 0.0
  %v2773 = vand.u32 %v53, 4294901760
  %2774 = vmatpush1.msra.mxu0 %v2773
  %2775 = vmatprep.subr.mxu0 0.0
  %v2776 = vand.u32 %v54, 4294901760
  %2777 = vmatpush1.msra.mxu0 %v2776
  %2778 = vmatprep.subr.mxu0 0.0
  %v2779 = vand.u32 %v55, 4294901760
  %2780 = vmatpush1.msra.mxu0 %v2779
  %2781 = vmatprep.subr.mxu0 0.0
  %2782 = vmatpush1.msra.mxu0 0.0
  %2783 = vmatprep.subr.mxu0 0.0
  %2784 = vmatpush1.msra.mxu0 0.0
  %2785 = vmatprep.subr.mxu0 0.0
  %2786 = vmatpush1.msra.mxu0 0.0
  %2787 = vmatprep.subr.mxu0 0.0
  %2788 = vmatpush1.msra.mxu0 0.0
  %2789 = vmatprep.subr.mxu0 0.0
  %2790 = vmatpush1.msra.mxu0 0.0
  %2791 = vmatprep.subr.mxu0 0.0
  %2792 = vmatpush1.msra.mxu0 0.0
  %2793 = vmatprep.subr.mxu0 0.0
  %2794 = vmatpush1.msra.mxu0 0.0
  %2795 = vmatprep.subr.mxu0 0.0
  %2796 = vmatpush1.msra.mxu0 0.0
  %2797 = vmatprep.subr.mxu0 0.0
  %2798 = vmatpush1.msra.mxu0 0.0
  %2799 = vmatprep.subr.mxu0 0.0
  %2800 = vmatpush1.msra.mxu0 0.0
  %2801 = vmatprep.subr.mxu0 0.0
  %2802 = vmatpush1.msra.mxu0 0.0
  %2803 = vmatprep.subr.mxu0 0.0
  %2804 = vmatpush1.msra.mxu0 0.0
  %2805 = vmatprep.subr.mxu0 0.0
  %2806 = vmatpush1.msra.mxu0 0.0
  %2807 = vmatprep.subr.mxu0 0.0
  %2808 = vmatpush1.msra.mxu0 0.0
  %2809 = vmatprep.subr.mxu0 0.0
  %2810 = vmatpush1.msra.mxu0 0.0
  %2811 = vmatprep.subr.mxu0 0.0
  %2812 = vmatpush1.msra.mxu0 0.0
  %2813 = vmatprep.subr.mxu0 0.0
  %2814 = vmatpush1.msra.mxu0 0.0
  %2815 = vmatprep.subr.mxu0 0.0
  %2816 = vmatpush1.msra.mxu0 0.0
  %2817 = vmatprep.subr.mxu0 0.0
  %2818 = vmatpush1.msra.mxu0 0.0
  %2819 = vmatprep.subr.mxu0 0.0
  %2820 = vmatpush1.msra.mxu0 0.0
  %2821 = vmatprep.subr.mxu0 0.0
  %2822 = vmatpush1.msra.mxu0 0.0
  %2823 = vmatprep.subr.mxu0 0.0
  %2824 = vmatpush1.msra.mxu0 0.0
  %2825 = vmatprep.subr.mxu0 0.0
  %2826 = vmatpush1.msra.mxu0 0.0
  %2827 = vmatprep.subr.mxu0 0.0
  %2828 = vmatpush1.msra.mxu0 0.0
  %2829 = vmatprep.mubr.f32.mxu0 0.0
  %v2830 = vand.u32 %v2257, 4294901760
  %2831 = vmatmul.mubr.f32.gmra.mrb[0].mxu0 %v2830
  %v2832 = vpop.f32.mrb[0].mxu0
  %v2833 = vadd.f32 %v2748, %v2832
  %v2834 = vpop.f32.mrb[0].mxu0
  %2835 = vmatprep.mubr.f32.mxu0 0.0
  %v2836 = vand.u32 %v2260, 4294901760
  %2837 = vmatmul.mubr.f32.gmra.mrb[0].mxu0 %v2836
  %v2838 = vpop.f32.mrb[0].mxu0
  %v2839 = vadd.f32 %v2754, %v2838
  %v2840 = vpop.f32.mrb[0].mxu0
  %2841 = vdwg.mxu0
  %v2843 = vsel %vm645, %v46, 0
  %v2846 = vsel %vm645, %v47, 0
  %2848 = vmatprep.subr.mxu0 0.0
  %v2849 = vand.u32 %v2833, 4294901760
  %2850 = vmatpush1.msra.mxu0 %v2849
  %2851 = vmatprep.subr.mxu0 0.0
  %v2852 = vand.u32 %v2839, 4294901760
  %2853 = vmatpush1.msra.mxu0 %v2852
  %2854 = vmatprep.subr.mxu0 0.0
  %2855 = vmatpush1.msra.mxu0 0.0
  %2856 = vmatprep.subr.mxu0 0.0
  %2857 = vmatpush1.msra.mxu0 0.0
  %2858 = vmatprep.subr.mxu0 0.0
  %2859 = vmatpush1.msra.mxu0 0.0
  %2860 = vmatprep.subr.mxu0 0.0
  %2861 = vmatpush1.msra.mxu0 0.0
  %2862 = vmatprep.subr.mxu0 0.0
  %2863 = vmatpush1.msra.mxu0 0.0
  %2864 = vmatprep.subr.mxu0 0.0
  %2865 = vmatpush1.msra.mxu0 0.0
  %2866 = vmatprep.subr.mxu0 0.0
  %2867 = vmatpush1.msra.mxu0 0.0
  %2868 = vmatprep.subr.mxu0 0.0
  %2869 = vmatpush1.msra.mxu0 0.0
  %2870 = vmatprep.subr.mxu0 0.0
  %2871 = vmatpush1.msra.mxu0 0.0
  %2872 = vmatprep.subr.mxu0 0.0
  %2873 = vmatpush1.msra.mxu0 0.0
  %2874 = vmatprep.subr.mxu0 0.0
  %2875 = vmatpush1.msra.mxu0 0.0
  %2876 = vmatprep.subr.mxu0 0.0
  %2877 = vmatpush1.msra.mxu0 0.0
  %2878 = vmatprep.subr.mxu0 0.0
  %2879 = vmatpush1.msra.mxu0 0.0
  %2880 = vmatprep.subr.mxu0 0.0
  %2881 = vmatpush1.msra.mxu0 0.0
  %2882 = vmatprep.subr.mxu0 0.0
  %2883 = vmatpush1.msra.mxu0 0.0
  %2884 = vmatprep.subr.mxu0 0.0
  %2885 = vmatpush1.msra.mxu0 0.0
  %2886 = vmatprep.subr.mxu0 0.0
  %2887 = vmatpush1.msra.mxu0 0.0
  %2888 = vmatprep.subr.mxu0 0.0
  %2889 = vmatpush1.msra.mxu0 0.0
  %2890 = vmatprep.subr.mxu0 0.0
  %2891 = vmatpush1.msra.mxu0 0.0
  %2892 = vmatprep.subr.mxu0 0.0
  %2893 = vmatpush1.msra.mxu0 0.0
  %2894 = vmatprep.subr.mxu0 0.0
  %2895 = vmatpush1.msra.mxu0 0.0
  %2896 = vmatprep.subr.mxu0 0.0
  %2897 = vmatpush1.msra.mxu0 0.0
  %2898 = vmatprep.subr.mxu0 0.0
  %2899 = vmatpush1.msra.mxu0 0.0
  %2900 = vmatprep.subr.mxu0 0.0
  %2901 = vmatpush1.msra.mxu0 0.0
  %2902 = vmatprep.subr.mxu0 0.0
  %2903 = vmatpush1.msra.mxu0 0.0
  %2904 = vmatprep.subr.mxu0 0.0
  %2905 = vmatpush1.msra.mxu0 0.0
  %2906 = vmatprep.subr.mxu0 0.0
  %2907 = vmatpush1.msra.mxu0 0.0
  %2908 = vmatprep.subr.mxu0 0.0
  %2909 = vmatpush1.msra.mxu0 0.0
  %2910 = vmatprep.subr.mxu0 0.0
  %2911 = vmatpush1.msra.mxu0 0.0
  %2912 = vmatprep.subr.mxu0 0.0
  %2913 = vmatpush1.msra.mxu0 0.0
  %2914 = vmatprep.mubr.f32.mxu0 0.0
  %v2915 = vand.u32 %v2843, 4294901760
  %v2916 = vsub.f32 %v2843, %v2915
  %v2917 = vand.u32 %v2916, 4294901760
  %v2918 = vsub.f32 %v2916, %v2917
  %v2919 = vand.u32 %v2918, 4294901760
  %2920 = vmatmul.mubr.f32.gmra.mrb[0].mxu0 %v2919
  %v2921 = vpop.f32.mrb[0].mxu0
  %v2922 = vadd.f32 0.0, %v2921
  %v2923 = vpop.f32.mrb[0].mxu0
  %2924 = vmatprep.mubr.f32.mxu0 0.0
  %v2925 = vand.u32 %v2846, 4294901760
  %v2926 = vsub.f32 %v2846, %v2925
  %v2927 = vand.u32 %v2926, 4294901760
  %v2928 = vsub.f32 %v2926, %v2927
  %v2929 = vand.u32 %v2928, 4294901760
  %2930 = vmatmul.mubr.f32.gmra.mrb[0].mxu0 %v2929
  %v2931 = vpop.f32.mrb[0].mxu0
  %v2932 = vadd.f32 0.0, %v2931
  %v2933 = vpop.f32.mrb[0].mxu0
  %2934 = vdwg.mxu0
  %2935 = vmatprep.subr.mxu0 0.0
  %v2936 = vand.u32 %v2833, 4294901760
  %v2937 = vsub.f32 %v2833, %v2936
  %v2938 = vand.u32 %v2937, 4294901760
  %v2939 = vsub.f32 %v2937, %v2938
  %v2940 = vand.u32 %v2939, 4294901760
  %2941 = vmatpush1.msra.mxu0 %v2940
  %2942 = vmatprep.subr.mxu0 0.0
  %v2943 = vand.u32 %v2839, 4294901760
  %v2944 = vsub.f32 %v2839, %v2943
  %v2945 = vand.u32 %v2944, 4294901760
  %v2946 = vsub.f32 %v2944, %v2945
  %v2947 = vand.u32 %v2946, 4294901760
  %2948 = vmatpush1.msra.mxu0 %v2947
  %2949 = vmatprep.subr.mxu0 0.0
  %2950 = vmatpush1.msra.mxu0 0.0
  %2951 = vmatprep.subr.mxu0 0.0
  %2952 = vmatpush1.msra.mxu0 0.0
  %2953 = vmatprep.subr.mxu0 0.0
  %2954 = vmatpush1.msra.mxu0 0.0
  %2955 = vmatprep.subr.mxu0 0.0
  %2956 = vmatpush1.msra.mxu0 0.0
  %2957 = vmatprep.subr.mxu0 0.0
  %2958 = vmatpush1.msra.mxu0 0.0
  %2959 = vmatprep.subr.mxu0 0.0
  %2960 = vmatpush1.msra.mxu0 0.0
  %2961 = vmatprep.subr.mxu0 0.0
  %2962 = vmatpush1.msra.mxu0 0.0
  %2963 = vmatprep.subr.mxu0 0.0
  %2964 = vmatpush1.msra.mxu0 0.0
  %2965 = vmatprep.subr.mxu0 0.0
  %2966 = vmatpush1.msra.mxu0 0.0
  %2967 = vmatprep.subr.mxu0 0.0
  %2968 = vmatpush1.msra.mxu0 0.0
  %2969 = vmatprep.subr.mxu0 0.0
  %2970 = vmatpush1.msra.mxu0 0.0
  %2971 = vmatprep.subr.mxu0 0.0
  %2972 = vmatpush1.msra.mxu0 0.0
  %2973 = vmatprep.subr.mxu0 0.0
  %2974 = vmatpush1.msra.mxu0 0.0
  %2975 = vmatprep.subr.mxu0 0.0
  %2976 = vmatpush1.msra.mxu0 0.0
  %2977 = vmatprep.subr.mxu0 0.0
  %2978 = vmatpush1.msra.mxu0 0.0
  %2979 = vmatprep.subr.mxu0 0.0
  %2980 = vmatpush1.msra.mxu0 0.0
  %2981 = vmatprep.subr.mxu0 0.0
  %2982 = vmatpush1.msra.mxu0 0.0
  %2983 = vmatprep.subr.mxu0 0.0
  %2984 = vmatpush1.msra.mxu0 0.0
  %2985 = vmatprep.subr.mxu0 0.0
  %2986 = vmatpush1.msra.mxu0 0.0
  %2987 = vmatprep.subr.mxu0 0.0
  %2988 = vmatpush1.msra.mxu0 0.0
  %2989 = vmatprep.subr.mxu0 0.0
  %2990 = vmatpush1.msra.mxu0 0.0
  %2991 = vmatprep.subr.mxu0 0.0
  %2992 = vmatpush1.msra.mxu0 0.0
  %2993 = vmatprep.subr.mxu0 0.0
  %2994 = vmatpush1.msra.mxu0 0.0
  %2995 = vmatprep.subr.mxu0 0.0
  %2996 = vmatpush1.msra.mxu0 0.0
  %2997 = vmatprep.subr.mxu0 0.0
  %2998 = vmatpush1.msra.mxu0 0.0
  %2999 = vmatprep.subr.mxu0 0.0
  %3000 = vmatpush1.msra.mxu0 0.0
  %3001 = vmatprep.subr.mxu0 0.0
  %3002 = vmatpush1.msra.mxu0 0.0
  %3003 = vmatprep.subr.mxu0 0.0
  %3004 = vmatpush1.msra.mxu0 0.0
  %3005 = vmatprep.subr.mxu0 0.0
  %3006 = vmatpush1.msra.mxu0 0.0
  %3007 = vmatprep.subr.mxu0 0.0
  %3008 = vmatpush1.msra.mxu0 0.0
  %3009 = vmatprep.mubr.f32.mxu0 0.0
  %v3010 = vand.u32 %v2843, 4294901760
  %3011 = vmatmul.mubr.f32.gmra.mrb[0].mxu0 %v3010
  %v3012 = vpop.f32.mrb[0].mxu0
  %v3013 = vadd.f32 %v2922, %v3012
  %v3014 = vpop.f32.mrb[0].mxu0
  %3015 = vmatprep.mubr.f32.mxu0 0.0
  %v3016 = vand.u32 %v2846, 4294901760
  %3017 = vmatmul.mubr.f32.gmra.mrb[0].mxu0 %v3016
  %v3018 = vpop.f32.mrb[0].mxu0
  %v3019 = vadd.f32 %v2932, %v3018
  %v3020 = vpop.f32.mrb[0].mxu0
  %3021 = vdwg.mxu0
  %3022 = vmatprep.subr.mxu0 0.0
  %v3023 = vand.u32 %v2833, 4294901760
  %v3024 = vsub.f32 %v2833, %v3023
  %3025 = vmatpush1.msra.mxu0 %v3024
  %3026 = vmatprep.subr.mxu0 0.0
  %v3027 = vand.u32 %v2839, 4294901760
  %v3028 = vsub.f32 %v2839, %v3027
  %3029 = vmatpush1.msra.mxu0 %v3028
  %3030 = vmatprep.subr.mxu0 0.0
  %3031 = vmatpush1.msra.mxu0 0.0
  %3032 = vmatprep.subr.mxu0 0.0
  %3033 = vmatpush1.msra.mxu0 0.0
  %3034 = vmatprep.subr.mxu0 0.0
  %3035 = vmatpush1.msra.mxu0 0.0
  %3036 = vmatprep.subr.mxu0 0.0
  %3037 = vmatpush1.msra.mxu0 0.0
  %3038 = vmatprep.subr.mxu0 0.0
  %3039 = vmatpush1.msra.mxu0 0.0
  %3040 = vmatprep.subr.mxu0 0.0
  %3041 = vmatpush1.msra.mxu0 0.0
  %3042 = vmatprep.subr.mxu0 0.0
  %3043 = vmatpush1.msra.mxu0 0.0
  %3044 = vmatprep.subr.mxu0 0.0
  %3045 = vmatpush1.msra.mxu0 0.0
  %3046 = vmatprep.subr.mxu0 0.0
  %3047 = vmatpush1.msra.mxu0 0.0
  %3048 = vmatprep.subr.mxu0 0.0
  %3049 = vmatpush1.msra.mxu0 0.0
  %3050 = vmatprep.subr.mxu0 0.0
  %3051 = vmatpush1.msra.mxu0 0.0
  %3052 = vmatprep.subr.mxu0 0.0
  %3053 = vmatpush1.msra.mxu0 0.0
  %3054 = vmatprep.subr.mxu0 0.0
  %3055 = vmatpush1.msra.mxu0 0.0
  %3056 = vmatprep.subr.mxu0 0.0
  %3057 = vmatpush1.msra.mxu0 0.0
  %3058 = vmatprep.subr.mxu0 0.0
  %3059 = vmatpush1.msra.mxu0 0.0
  %3060 = vmatprep.subr.mxu0 0.0
  %3061 = vmatpush1.msra.mxu0 0.0
  %3062 = vmatprep.subr.mxu0 0.0
  %3063 = vmatpush1.msra.mxu0 0.0
  %3064 = vmatprep.subr.mxu0 0.0
  %3065 = vmatpush1.msra.mxu0 0.0
  %3066 = vmatprep.subr.mxu0 0.0
  %3067 = vmatpush1.msra.mxu0 0.0
  %3068 = vmatprep.subr.mxu0 0.0
  %3069 = vmatpush1.msra.mxu0 0.0
  %3070 = vmatprep.subr.mxu0 0.0
  %3071 = vmatpush1.msra.mxu0 0.0
  %3072 = vmatprep.subr.mxu0 0.0
  %3073 = vmatpush1.msra.mxu0 0.0
  %3074 = vmatprep.subr.mxu0 0.0
  %3075 = vmatpush1.msra.mxu0 0.0
  %3076 = vmatprep.subr.mxu0 0.0
  %3077 = vmatpush1.msra.mxu0 0.0
  %3078 = vmatprep.subr.mxu0 0.0
  %3079 = vmatpush1.msra.mxu0 0.0
  %3080 = vmatprep.subr.mxu0 0.0
  %3081 = vmatpush1.msra.mxu0 0.0
  %3082 = vmatprep.subr.mxu0 0.0
  %3083 = vmatpush1.msra.mxu0 0.0
  %3084 = vmatprep.subr.mxu0 0.0
  %3085 = vmatpush1.msra.mxu0 0.0
  %3086 = vmatprep.subr.mxu0 0.0
  %3087 = vmatpush1.msra.mxu0 0.0
  %3088 = vmatprep.subr.mxu0 0.0
  %3089 = vmatpush1.msra.mxu0 0.0
  %3090 = vmatprep.mubr.f32.mxu0 0.0
  %v3091 = vand.u32 %v2843, 4294901760
  %v3092 = vsub.f32 %v2843, %v3091
  %3093 = vmatmul.mubr.f32.gmra.mrb[0].mxu0 %v3092
  %v3094 = vpop.f32.mrb[0].mxu0
  %v3095 = vadd.f32 %v3013, %v3094
  %v3096 = vpop.f32.mrb[0].mxu0
  %3097 = vmatprep.mubr.f32.mxu0 0.0
  %v3098 = vand.u32 %v2846, 4294901760
  %v3099 = vsub.f32 %v2846, %v3098
  %3100 = vmatmul.mubr.f32.gmra.mrb[0].mxu0 %v3099
  %v3101 = vpop.f32.mrb[0].mxu0
  %v3102 = vadd.f32 %v3019, %v3101
  %v3103 = vpop.f32.mrb[0].mxu0
  %3104 = vdwg.mxu0
  %3105 = vmatprep.subr.mxu0 0.0
  %v3106 = vand.u32 %v2833, 4294901760
  %3107 = vmatpush1.msra.mxu0 %v3106
  %3108 = vmatprep.subr.mxu0 0.0
  %v3109 = vand.u32 %v2839, 4294901760
  %3110 = vmatpush1.msra.mxu0 %v3109
  %3111 = vmatprep.subr.mxu0 0.0
  %3112 = vmatpush1.msra.mxu0 0.0
  %3113 = vmatprep.subr.mxu0 0.0
  %3114 = vmatpush1.msra.mxu0 0.0
  %3115 = vmatprep.subr.mxu0 0.0
  %3116 = vmatpush1.msra.mxu0 0.0
  %3117 = vmatprep.subr.mxu0 0.0
  %3118 = vmatpush1.msra.mxu0 0.0
  %3119 = vmatprep.subr.mxu0 0.0
  %3120 = vmatpush1.msra.mxu0 0.0
  %3121 = vmatprep.subr.mxu0 0.0
  %3122 = vmatpush1.msra.mxu0 0.0
  %3123 = vmatprep.subr.mxu0 0.0
  %3124 = vmatpush1.msra.mxu0 0.0
  %3125 = vmatprep.subr.mxu0 0.0
  %3126 = vmatpush1.msra.mxu0 0.0
  %3127 = vmatprep.subr.mxu0 0.0
  %3128 = vmatpush1.msra.mxu0 0.0
  %3129 = vmatprep.subr.mxu0 0.0
  %3130 = vmatpush1.msra.mxu0 0.0
  %3131 = vmatprep.subr.mxu0 0.0
  %3132 = vmatpush1.msra.mxu0 0.0
  %3133 = vmatprep.subr.mxu0 0.0
  %3134 = vmatpush1.msra.mxu0 0.0
  %3135 = vmatprep.subr.mxu0 0.0
  %3136 = vmatpush1.msra.mxu0 0.0
  %3137 = vmatprep.subr.mxu0 0.0
  %3138 = vmatpush1.msra.mxu0 0.0
  %3139 = vmatprep.subr.mxu0 0.0
  %3140 = vmatpush1.msra.mxu0 0.0
  %3141 = vmatprep.subr.mxu0 0.0
  %3142 = vmatpush1.msra.mxu0 0.0
  %3143 = vmatprep.subr.mxu0 0.0
  %3144 = vmatpush1.msra.mxu0 0.0
  %3145 = vmatprep.subr.mxu0 0.0
  %3146 = vmatpush1.msra.mxu0 0.0
  %3147 = vmatprep.subr.mxu0 0.0
  %3148 = vmatpush1.msra.mxu0 0.0
  %3149 = vmatprep.subr.mxu0 0.0
  %3150 = vmatpush1.msra.mxu0 0.0
  %3151 = vmatprep.subr.mxu0 0.0
  %3152 = vmatpush1.msra.mxu0 0.0
  %3153 = vmatprep.subr.mxu0 0.0
  %3154 = vmatpush1.msra.mxu0 0.0
  %3155 = vmatprep.subr.mxu0 0.0
  %3156 = vmatpush1.msra.mxu0 0.0
  %3157 = vmatprep.subr.mxu0 0.0
  %3158 = vmatpush1.msra.mxu0 0.0
  %3159 = vmatprep.subr.mxu0 0.0
  %3160 = vmatpush1.msra.mxu0 0.0
  %3161 = vmatprep.subr.mxu0 0.0
  %3162 = vmatpush1.msra.mxu0 0.0
  %3163 = vmatprep.subr.mxu0 0.0
  %3164 = vmatpush1.msra.mxu0 0.0
  %3165 = vmatprep.subr.mxu0 0.0
  %3166 = vmatpush1.msra.mxu0 0.0
  %3167 = vmatprep.subr.mxu0 0.0
  %3168 = vmatpush1.msra.mxu0 0.0
  %3169 = vmatprep.subr.mxu0 0.0
  %3170 = vmatpush1.msra.mxu0 0.0
  %3171 = vmatprep.mubr.f32.mxu0 0.0
  %v3172 = vand.u32 %v2843, 4294901760
  %v3173 = vsub.f32 %v2843, %v3172
  %v3174 = vand.u32 %v3173, 4294901760
  %3175 = vmatmul.mubr.f32.gmra.mrb[0].mxu0 %v3174
  %v3176 = vpop.f32.mrb[0].mxu0
  %v3177 = vadd.f32 %v3095, %v3176
  %v3178 = vpop.f32.mrb[0].mxu0
  %3179 = vmatprep.mubr.f32.mxu0 0.0
  %v3180 = vand.u32 %v2846, 4294901760
  %v3181 = vsub.f32 %v2846, %v3180
  %v3182 = vand.u32 %v3181, 4294901760
  %3183 = vmatmul.mubr.f32.gmra.mrb[0].mxu0 %v3182
  %v3184 = vpop.f32.mrb[0].mxu0
  %v3185 = vadd.f32 %v3102, %v3184
  %v3186 = vpop.f32.mrb[0].mxu0
  %3187 = vdwg.mxu0
  %3188 = vmatprep.subr.mxu0 0.0
  %v3189 = vand.u32 %v2833, 4294901760
  %v3190 = vsub.f32 %v2833, %v3189
  %v3191 = vand.u32 %v3190, 4294901760
  %3192 = vmatpush1.msra.mxu0 %v3191
  %3193 = vmatprep.subr.mxu0 0.0
  %v3194 = vand.u32 %v2839, 4294901760
  %v3195 = vsub.f32 %v2839, %v3194
  %v3196 = vand.u32 %v3195, 4294901760
  %3197 = vmatpush1.msra.mxu0 %v3196
  %3198 = vmatprep.subr.mxu0 0.0
  %3199 = vmatpush1.msra.mxu0 0.0
  %3200 = vmatprep.subr.mxu0 0.0
  %3201 = vmatpush1.msra.mxu0 0.0
  %3202 = vmatprep.subr.mxu0 0.0
  %3203 = vmatpush1.msra.mxu0 0.0
  %3204 = vmatprep.subr.mxu0 0.0
  %3205 = vmatpush1.msra.mxu0 0.0
  %3206 = vmatprep.subr.mxu0 0.0
  %3207 = vmatpush1.msra.mxu0 0.0
  %3208 = vmatprep.subr.mxu0 0.0
  %3209 = vmatpush1.msra.mxu0 0.0
  %3210 = vmatprep.subr.mxu0 0.0
  %3211 = vmatpush1.msra.mxu0 0.0
  %3212 = vmatprep.subr.mxu0 0.0
  %3213 = vmatpush1.msra.mxu0 0.0
  %3214 = vmatprep.subr.mxu0 0.0
  %3215 = vmatpush1.msra.mxu0 0.0
  %3216 = vmatprep.subr.mxu0 0.0
  %3217 = vmatpush1.msra.mxu0 0.0
  %3218 = vmatprep.subr.mxu0 0.0
  %3219 = vmatpush1.msra.mxu0 0.0
  %3220 = vmatprep.subr.mxu0 0.0
  %3221 = vmatpush1.msra.mxu0 0.0
  %3222 = vmatprep.subr.mxu0 0.0
  %3223 = vmatpush1.msra.mxu0 0.0
  %3224 = vmatprep.subr.mxu0 0.0
  %3225 = vmatpush1.msra.mxu0 0.0
  %3226 = vmatprep.subr.mxu0 0.0
  %3227 = vmatpush1.msra.mxu0 0.0
  %3228 = vmatprep.subr.mxu0 0.0
  %3229 = vmatpush1.msra.mxu0 0.0
  %3230 = vmatprep.subr.mxu0 0.0
  %3231 = vmatpush1.msra.mxu0 0.0
  %3232 = vmatprep.subr.mxu0 0.0
  %3233 = vmatpush1.msra.mxu0 0.0
  %3234 = vmatprep.subr.mxu0 0.0
  %3235 = vmatpush1.msra.mxu0 0.0
  %3236 = vmatprep.subr.mxu0 0.0
  %3237 = vmatpush1.msra.mxu0 0.0
  %3238 = vmatprep.subr.mxu0 0.0
  %3239 = vmatpush1.msra.mxu0 0.0
  %3240 = vmatprep.subr.mxu0 0.0
  %3241 = vmatpush1.msra.mxu0 0.0
  %3242 = vmatprep.subr.mxu0 0.0
  %3243 = vmatpush1.msra.mxu0 0.0
  %3244 = vmatprep.subr.mxu0 0.0
  %3245 = vmatpush1.msra.mxu0 0.0
  %3246 = vmatprep.subr.mxu0 0.0
  %3247 = vmatpush1.msra.mxu0 0.0
  %3248 = vmatprep.subr.mxu0 0.0
  %3249 = vmatpush1.msra.mxu0 0.0
  %3250 = vmatprep.subr.mxu0 0.0
  %3251 = vmatpush1.msra.mxu0 0.0
  %3252 = vmatprep.subr.mxu0 0.0
  %3253 = vmatpush1.msra.mxu0 0.0
  %3254 = vmatprep.subr.mxu0 0.0
  %3255 = vmatpush1.msra.mxu0 0.0
  %3256 = vmatprep.subr.mxu0 0.0
  %3257 = vmatpush1.msra.mxu0 0.0
  %3258 = vmatprep.mubr.f32.mxu0 0.0
  %v3259 = vand.u32 %v2843, 4294901760
  %3260 = vmatmul.mubr.f32.gmra.mrb[0].mxu0 %v3259
  %v3261 = vpop.f32.mrb[0].mxu0
  %v3262 = vadd.f32 %v3177, %v3261
  %v3263 = vpop.f32.mrb[0].mxu0
  %3264 = vmatprep.mubr.f32.mxu0 0.0
  %v3265 = vand.u32 %v2846, 4294901760
  %3266 = vmatmul.mubr.f32.gmra.mrb[0].mxu0 %v3265
  %v3267 = vpop.f32.mrb[0].mxu0
  %v3268 = vadd.f32 %v3185, %v3267
  %v3269 = vpop.f32.mrb[0].mxu0
  %3270 = vdwg.mxu0
  %3271 = vmatprep.subr.mxu0 0.0
  %v3272 = vand.u32 %v2833, 4294901760
  %3273 = vmatpush1.msra.mxu0 %v3272
  %3274 = vmatprep.subr.mxu0 0.0
  %v3275 = vand.u32 %v2839, 4294901760
  %3276 = vmatpush1.msra.mxu0 %v3275
  %3277 = vmatprep.subr.mxu0 0.0
  %3278 = vmatpush1.msra.mxu0 0.0
  %3279 = vmatprep.subr.mxu0 0.0
  %3280 = vmatpush1.msra.mxu0 0.0
  %3281 = vmatprep.subr.mxu0 0.0
  %3282 = vmatpush1.msra.mxu0 0.0
  %3283 = vmatprep.subr.mxu0 0.0
  %3284 = vmatpush1.msra.mxu0 0.0
  %3285 = vmatprep.subr.mxu0 0.0
  %3286 = vmatpush1.msra.mxu0 0.0
  %3287 = vmatprep.subr.mxu0 0.0
  %3288 = vmatpush1.msra.mxu0 0.0
  %3289 = vmatprep.subr.mxu0 0.0
  %3290 = vmatpush1.msra.mxu0 0.0
  %3291 = vmatprep.subr.mxu0 0.0
  %3292 = vmatpush1.msra.mxu0 0.0
  %3293 = vmatprep.subr.mxu0 0.0
  %3294 = vmatpush1.msra.mxu0 0.0
  %3295 = vmatprep.subr.mxu0 0.0
  %3296 = vmatpush1.msra.mxu0 0.0
  %3297 = vmatprep.subr.mxu0 0.0
  %3298 = vmatpush1.msra.mxu0 0.0
  %3299 = vmatprep.subr.mxu0 0.0
  %3300 = vmatpush1.msra.mxu0 0.0
  %3301 = vmatprep.subr.mxu0 0.0
  %3302 = vmatpush1.msra.mxu0 0.0
  %3303 = vmatprep.subr.mxu0 0.0
  %3304 = vmatpush1.msra.mxu0 0.0
  %3305 = vmatprep.subr.mxu0 0.0
  %3306 = vmatpush1.msra.mxu0 0.0
  %3307 = vmatprep.subr.mxu0 0.0
  %3308 = vmatpush1.msra.mxu0 0.0
  %3309 = vmatprep.subr.mxu0 0.0
  %3310 = vmatpush1.msra.mxu0 0.0
  %3311 = vmatprep.subr.mxu0 0.0
  %3312 = vmatpush1.msra.mxu0 0.0
  %3313 = vmatprep.subr.mxu0 0.0
  %3314 = vmatpush1.msra.mxu0 0.0
  %3315 = vmatprep.subr.mxu0 0.0
  %3316 = vmatpush1.msra.mxu0 0.0
  %3317 = vmatprep.subr.mxu0 0.0
  %3318 = vmatpush1.msra.mxu0 0.0
  %3319 = vmatprep.subr.mxu0 0.0
  %3320 = vmatpush1.msra.mxu0 0.0
  %3321 = vmatprep.subr.mxu0 0.0
  %3322 = vmatpush1.msra.mxu0 0.0
  %3323 = vmatprep.subr.mxu0 0.0
  %3324 = vmatpush1.msra.mxu0 0.0
  %3325 = vmatprep.subr.mxu0 0.0
  %3326 = vmatpush1.msra.mxu0 0.0
  %3327 = vmatprep.subr.mxu0 0.0
  %3328 = vmatpush1.msra.mxu0 0.0
  %3329 = vmatprep.subr.mxu0 0.0
  %3330 = vmatpush1.msra.mxu0 0.0
  %3331 = vmatprep.subr.mxu0 0.0
  %3332 = vmatpush1.msra.mxu0 0.0
  %3333 = vmatprep.subr.mxu0 0.0
  %3334 = vmatpush1.msra.mxu0 0.0
  %3335 = vmatprep.subr.mxu0 0.0
  %3336 = vmatpush1.msra.mxu0 0.0
  %3337 = vmatprep.mubr.f32.mxu0 0.0
  %v3338 = vand.u32 %v2843, 4294901760
  %3339 = vmatmul.mubr.f32.gmra.mrb[0].mxu0 %v3338
  %v3340 = vpop.f32.mrb[0].mxu0
  %v3341 = vadd.f32 %v3262, %v3340
  %v3342 = vpop.f32.mrb[0].mxu0
  %3343 = vmatprep.mubr.f32.mxu0 0.0
  %v3344 = vand.u32 %v2846, 4294901760
  %3345 = vmatmul.mubr.f32.gmra.mrb[0].mxu0 %v3344
  %v3346 = vpop.f32.mrb[0].mxu0
  %v3347 = vadd.f32 %v3268, %v3346
  %v3348 = vpop.f32.mrb[0].mxu0
  %3349 = vdwg.mxu0
  %3350 = vst.msk [vmem:[%s7] sm:$0xff] %vm58, %v3341
  %3351 = vst.msk [vmem:[%s7 + $0x8] sm:$0xff] %vm58, %v3347
  // Predicated region
  $region30: #{hill_cost.1} parent=0 // pred_check
    _
  $region31: #{hill_cost.1} parent=0 // pred_check_branch
    %3353 = sbr.rel (0) target = $region33
  $region32: #{hill_cost.1} parent=0 // pred_region
    _
  $region33: #{hill_cost.1} parent=0 // pred_fallthru
    _
  // Predicated region
  $region34: #{hill_cost.1} parent=0 // pred_check
    _
  $region35: #{hill_cost.1} parent=0 // pred_check_branch
    %3355 = sbr.rel (0) target = $region37
  $region36: #{hill_cost.1} parent=0 // pred_region
    _
  $region37: #{hill_cost.1} parent=0 // pred_fallthru
    _

</llo_original>
